<compile_context>
chip_gen: v6e
topology: v6e:2x2x1
jax: 0.10.0
libtpu: 0.0.40
codegen_flags: <defaults>
</compile_context>

<pallas_src>
import functools

import jax
import jax.numpy as jnp
from jax.experimental import pallas as pl
from jax.experimental.pallas import tpu as pltpu


def _round_up(x, m):
    return (x + m - 1) // m * m


def _vmem_limit_bytes():
    """3/4 of this chip's physical VMEM (96 MB on v5e/v6e, 48 MB on v7x)."""
    try:
        return int(pltpu.get_tpu_info().vmem_capacity_bytes * 3 // 4)
    except Exception:
        return 48 * 1024 * 1024


# ---------------------------------------------------------------------------
# Kernels
# ---------------------------------------------------------------------------
def support_kernel(x_ref, w_ref, o_ref):
    """s1 row tile = X_tile @ W1, f32 result.

    X may arrive as int8 (exact for 0/1 features) and is upcast to bf16 right
    after the DMA -- the cast is VPU work hidden under the streaming DMA.
    """
    x = x_ref[...].astype(jnp.bfloat16)
    o_ref[...] = jnp.dot(x, w_ref[...], preferred_element_type=jnp.float32)


def fused_layers_kernel(*refs, training):
    """All three adjacency-aggregation layers fused in one kernel.

    The padded bf16 adjacency lives whole in VMEM and is reused for the three
    aggregation matmuls; biases/relu/dropout/next-layer weight matmuls and the
    final log_softmax are free filler under that single HBM read.
    """
    if training:
        (adj_ref, s1_ref, w2_ref, w3_ref, b1_ref, b2_ref, b3_ref,
         m1_ref, m2_ref, o_ref) = refs
    else:
        (adj_ref, s1_ref, w2_ref, w3_ref, b1_ref, b2_ref, b3_ref,
         o_ref) = refs

    adj = adj_ref[...]                                          # (np, np) bf16

    # layer 1: h1 = dropout(relu(A @ s1 + b1))
    h1 = jnp.dot(adj, s1_ref[...].astype(jnp.bfloat16),
                 preferred_element_type=jnp.float32) + b1_ref[...]
    h1 = jnp.maximum(h1, 0.0)
    if training:
        h1 = h1 * m1_ref[...]

    # layer 2: h2 = dropout(A @ (h1 @ W2) + b2)     (no relu, per the module)
    s2 = jnp.dot(h1, w2_ref[...], preferred_element_type=jnp.float32)
    h2 = jnp.dot(adj, s2.astype(jnp.bfloat16),
                 preferred_element_type=jnp.float32) + b2_ref[...]
    if training:
        h2 = h2 * m2_ref[...]

    # layer 3 + log_softmax
    s3 = jnp.dot(h2, w3_ref[...], preferred_element_type=jnp.float32)
    h3 = jnp.dot(adj, s3.astype(jnp.bfloat16),
                 preferred_element_type=jnp.float32) + b3_ref[...]
    m = jnp.max(h3, axis=1, keepdims=True)
    lse = m + jnp.log(jnp.sum(jnp.exp(h3 - m), axis=1, keepdims=True))
    o_ref[...] = h3 - lse


# ---------------------------------------------------------------------------
# pallas_call wrappers
# ---------------------------------------------------------------------------
def _support(xp, w1p, *, tm, vmem_limit):
    np_, kp = xp.shape
    h = w1p.shape[1]
    return pl.pallas_call(
        support_kernel,
        out_shape=jax.ShapeDtypeStruct((np_, h), jnp.float32),
        grid=(np_ // tm,),
        in_specs=[pl.BlockSpec((tm, kp), lambda i: (i, 0)),   # streamed X rows
                  pl.BlockSpec((kp, h), lambda i: (0, 0))],   # W1 (constant)
        out_specs=pl.BlockSpec((tm, h), lambda i: (i, 0)),
        compiler_params=pltpu.CompilerParams(
            dimension_semantics=("parallel",),
            vmem_limit_bytes=vmem_limit),
    )(xp, w1p)


def _fused_layers(adj_p, s1, w2, w3, b1, b2, b3, masks, *, training, vmem_limit):
    # No grid / no BlockSpecs: every operand lives whole in VMEM, so the
    # adjacency (the only large operand) is DMA'd from HBM exactly once.
    # TODO(synk): on v7x (64 MiB VMEM/TC) this runs on one TensorCore; sharding
    # adj rows across the 2 TCs via core_map would restore megacore use.
    np_ = adj_p.shape[0]
    n_cls = w3.shape[1]
    kern = functools.partial(fused_layers_kernel, training=training)
    args = [adj_p, s1, w2, w3, b1, b2, b3]
    if training:
        args += list(masks)
    return pl.pallas_call(
        kern,
        out_shape=jax.ShapeDtypeStruct((np_, n_cls), jnp.float32),
        compiler_params=pltpu.CompilerParams(vmem_limit_bytes=vmem_limit),
    )(*args)


# ---------------------------------------------------------------------------
# One-time graph preparation (hoisted out of the per-step forward)
# ---------------------------------------------------------------------------
def prepare_graph(x, adj):
    """Pad + cast the big graph operands ONCE (not every forward call)."""
    x = jnp.asarray(x, jnp.float32)
    adj = jnp.asarray(adj, jnp.float32)
    n, k = x.shape
    np_ = _round_up(max(n, 128), 128)
    kp = _round_up(k, 128)
    # Citeseer features are exactly 0/1 -> store int8 in HBM (halves K1's read).
    is_binary = bool(jax.device_get(jnp.all((x == 0.0) | (x == 1.0))))
    if is_binary:
        xp = jnp.zeros((np_, kp), jnp.int8).at[:n, :k].set(x.astype(jnp.int8))
    else:
        xp = jnp.zeros((np_, kp), jnp.bfloat16).at[:n, :k].set(
            x.astype(jnp.bfloat16))
    adj_p = jnp.zeros((np_, np_), jnp.bfloat16).at[:n, :n].set(
        adj.astype(jnp.bfloat16))
    return xp, adj_p, n


# ---------------------------------------------------------------------------
# Forward pass (matches MethodGCN.forward semantics)
# ---------------------------------------------------------------------------
@functools.partial(jax.jit, static_argnames=("training", "n_out"))
def gcn_forward(xp, adj_p, params, key, *, training, n_out):
    (w1, b1), (w2, b2), (w3, b3) = params
    np_ = adj_p.shape[0]
    kp = xp.shape[1]
    h1, h2, h3 = w1.shape[1], w2.shape[1], w3.shape[1]
    vmem_limit = _vmem_limit_bytes()

    # largest row tile (<=1024) that divides the padded node count
    tm = np_
    for t in (1024, 512, 256, 128):
        if np_ % t == 0:
            tm = t
            break

    w1p = jnp.zeros((kp, h1), jnp.bfloat16).at[:w1.shape[0], :].set(
        w1.astype(jnp.bfloat16))

    # K1: s1 = X @ W1  (DMA-bound; streamed row tiles, full-K blocks, f32 out)
    s1 = _support(xp, w1p, tm=tm, vmem_limit=vmem_limit)

    # dropout masks (fresh per call, pre-scaled by 1/keep_prob = 2.0)
    if training:
        k1, k2 = jax.random.split(key)
        m1 = (jax.random.bernoulli(k1, 0.5, (np_, h1)) * 2.0).astype(jnp.float32)
        m2 = (jax.random.bernoulli(k2, 0.5, (np_, h2)) * 2.0).astype(jnp.float32)
        masks = (m1, m2)
    else:
        masks = None   # eval mode: no mask arrays allocated or streamed at all

    # K2+K3+K4 fused: adjacency read from HBM exactly once.
    out = _fused_layers(
        adj_p, s1,
        w2.astype(jnp.float32), w3.astype(jnp.float32),
        b1.reshape(1, h1).astype(jnp.float32),
        b2.reshape(1, h2).astype(jnp.float32),
        b3.reshape(1, h3).astype(jnp.float32),
        masks, training=training, vmem_limit=vmem_limit)
    return out[:n_out]


# ---------------------------------------------------------------------------
# Deterministic parameter init (GraphConvolution: U(-stdv, stdv), stdv=1/sqrt(F_out))
# ---------------------------------------------------------------------------
def init_params(key):
    dims = [(3703, 32), (32, 18), (18, 6)]
    params = []
    for (f_in, f_out) in dims:
        key, kw, kb = jax.random.split(key, 3)
        stdv = 1.0 / (f_out ** 0.5)
        w = jax.random.uniform(kw, (f_in, f_out), jnp.float32, -stdv, stdv)
        b = jax.random.uniform(kb, (f_out,), jnp.float32, -stdv, stdv)
        params.append((w, b))
    return params


if __name__ == "__main__":
    key = jax.random.PRNGKey(0)
    key, kx, ka, kp_, kd = jax.random.split(key, 5)

    N = 128                       # small synthetic graph
    F_IN = 3703                   # Citeseer feature dim (fixed by the module)

    # sparse 0/1 features (like Citeseer bag-of-words)
    x = (jax.random.uniform(kx, (N, F_IN)) < 0.03).astype(jnp.float32)
    # symmetric row-normalized dense adjacency with self loops
    a = (jax.random.uniform(ka, (N, N)) < 0.05).astype(jnp.float32)
    a = jnp.minimum(a + a.T + jnp.eye(N, dtype=jnp.float32), 1.0)
    adj = a / jnp.sum(a, axis=1, keepdims=True)

    params = init_params(kp_)

    # one-time (hoisted) pad + int8/bf16 cast of the big graph operands
    xp, adj_p, n = prepare_graph(x, adj)

    # training-mode forward (dropout active, fresh masks from `kd`)
    out = gcn_forward(xp, adj_p, params, kd, training=True, n_out=n)
    out = jax.block_until_ready(out)
    assert out.shape == (N, 6)
    assert bool(jnp.all(jnp.isfinite(out)))
    # log_softmax rows must exp-sum to ~1
    assert bool(jnp.allclose(jnp.sum(jnp.exp(out), axis=1), 1.0, atol=1e-3))

    # eval-mode forward vs pure-JAX f32 reference (no dropout)
    def ref_forward(x, adj, params):
        (w1, b1), (w2, b2), (w3, b3) = params
        h = jnp.maximum(adj @ (x @ w1) + b1, 0.0)
        h = adj @ (h @ w2) + b2
        h = adj @ (h @ w3) + b3
        return jax.nn.log_softmax(h, axis=1)

    out_eval = jax.block_until_ready(
        gcn_forward(xp, adj_p, params, kd, training=False, n_out=n))
    ref_eval = ref_forward(x, adj, params)
    max_err = float(jnp.max(jnp.abs(out_eval - ref_eval)))
    assert max_err < 0.15, f"max abs err vs f32 reference: {max_err}"  # bf16 adj/W1

    print("KERNEL_OK")
</pallas_src>

<mosaic_0001>
module attributes {stable_mosaic.version = 11 : i64} {
  func.func @support_kernel(%arg0: i32, %arg1: memref<128x3712xi8, #tpu.memory_space<vmem>>, %arg2: memref<3712x32xbf16, #tpu.memory_space<vmem>>, %arg3: memref<128x32xf32, #tpu.memory_space<vmem>>) attributes {dimension_semantics = [#tpu.dimension_semantics<parallel>], iteration_bounds = array<i64: 1>, scalar_prefetch = 0 : i64, scratch_operands = 0 : i64, tpu.core_type = #tpu.core_type<tc>, window_params = [{transform_indices = @transform_0, window_bounds = array<i64: 128, 3712>}, {pipeline_mode = #tpu.pipeline_mode<synchronous>, transform_indices = @transform_1, window_bounds = array<i64: 3712, 32>}, {transform_indices = @transform_2, window_bounds = array<i64: 128, 32>}]} {
    %c0 = arith.constant 0 : index
    %c0_0 = arith.constant 0 : index
    %0 = vector.load %arg1[%c0, %c0_0] : memref<128x3712xi8, #tpu.memory_space<vmem>>, vector<128x3712xi8>
    %1 = arith.sitofp %0 : vector<128x3712xi8> to vector<128x3712xbf16>
    %c0_1 = arith.constant 0 : index
    %c0_2 = arith.constant 0 : index
    %2 = vector.load %arg2[%c0_1, %c0_2] : memref<3712x32xbf16, #tpu.memory_space<vmem>>, vector<3712x32xbf16>
    %cst = arith.constant dense<0.000000e+00> : vector<128x32xf32>
    %3 = tpu.matmul %1, %2, %cst {dimension_numbers = #tpu.dot_dimension_numbers<[1], [0], [0], [1], [0, 0, 1, 1], [], []>} : vector<128x3712xbf16>, vector<3712x32xbf16>, vector<128x32xf32> -> vector<128x32xf32>
    %c0_3 = arith.constant 0 : index
    %c0_4 = arith.constant 0 : index
    %4 = vector.load %arg3[%c0_3, %c0_4] : memref<128x32xf32, #tpu.memory_space<vmem>>, vector<128x32xf32>
    tpu.vector_store %arg3[%c0_3, %c0_4], %3 {strides = array<i32>} : memref<128x32xf32, #tpu.memory_space<vmem>>, vector<128x32xf32>,
    return
  }
  func.func @transform_0(%arg0: i32) -> (i32, i32) {
    %c0_i32 = arith.constant 0 : i32
    %c0_i32_0 = arith.constant 0 : i32
    return %arg0, %c0_i32 : i32, i32
  }
  func.func @transform_1(%arg0: i32) -> (i32, i32) {
    %c0_i32 = arith.constant 0 : i32
    %c0_i32_0 = arith.constant 0 : i32
    %c0_i32_1 = arith.constant 0 : i32
    return %c0_i32, %c0_i32_0 : i32, i32
  }
  func.func @transform_2(%arg0: i32) -> (i32, i32) {
    %c0_i32 = arith.constant 0 : i32
    %c0_i32_0 = arith.constant 0 : i32
    return %arg0, %c0_i32 : i32, i32
  }
}

module attributes {stable_mosaic.version = 11 : i64} {
  func.func @fused_layers_kernel(%arg0: memref<128x128xbf16, #tpu.memory_space<vmem>>, %arg1: memref<128x32xf32, #tpu.memory_space<vmem>>, %arg2: memref<32x18xf32, #tpu.memory_space<vmem>>, %arg3: memref<18x6xf32, #tpu.memory_space<vmem>>, %arg4: memref<1x32xf32, #tpu.memory_space<vmem>>, %arg5: memref<1x18xf32, #tpu.memory_space<vmem>>, %arg6: memref<1x6xf32, #tpu.memory_space<vmem>>, %arg7: memref<128x32xf32, #tpu.memory_space<vmem>>, %arg8: memref<128x18xf32, #tpu.memory_space<vmem>>, %arg9: memref<128x6xf32, #tpu.memory_space<vmem>>) attributes {dimension_semantics = [], scalar_prefetch = 0 : i64, scratch_operands = 0 : i64, tpu.core_type = #tpu.core_type<tc>} {
    %c0 = arith.constant 0 : index
    %c0_0 = arith.constant 0 : index
    %0 = vector.load %arg0[%c0, %c0_0] : memref<128x128xbf16, #tpu.memory_space<vmem>>, vector<128x128xbf16>
    %c0_1 = arith.constant 0 : index
    %c0_2 = arith.constant 0 : index
    %1 = vector.load %arg1[%c0_1, %c0_2] : memref<128x32xf32, #tpu.memory_space<vmem>>, vector<128x32xf32>
    %2 = arith.truncf %1 : vector<128x32xf32> to vector<128x32xbf16>
    %cst = arith.constant dense<0.000000e+00> : vector<128x32xf32>
    %3 = tpu.matmul %0, %2, %cst {dimension_numbers = #tpu.dot_dimension_numbers<[1], [0], [0], [1], [0, 0, 1, 1], [], []>} : vector<128x128xbf16>, vector<128x32xbf16>, vector<128x32xf32> -> vector<128x32xf32>
    %c0_3 = arith.constant 0 : index
    %c0_4 = arith.constant 0 : index
    %4 = vector.load %arg4[%c0_3, %c0_4] : memref<1x32xf32, #tpu.memory_space<vmem>>, vector<1x32xf32>
    %5 = vector.broadcast %4 : vector<1x32xf32> to vector<128x32xf32>
    %6 = arith.addf %3, %5 : vector<128x32xf32>
    %cst_5 = arith.constant 0.000000e+00 : f32
    %7 = vector.broadcast %cst_5 : f32 to vector<128x32xf32>
    %8 = arith.maximumf %6, %7 : vector<128x32xf32>
    %c0_6 = arith.constant 0 : index
    %c0_7 = arith.constant 0 : index
    %9 = vector.load %arg7[%c0_6, %c0_7] : memref<128x32xf32, #tpu.memory_space<vmem>>, vector<128x32xf32>
    %10 = arith.mulf %8, %9 : vector<128x32xf32>
    %c0_8 = arith.constant 0 : index
    %c0_9 = arith.constant 0 : index
    %11 = vector.load %arg2[%c0_8, %c0_9] : memref<32x18xf32, #tpu.memory_space<vmem>>, vector<32x18xf32>
    %cst_10 = arith.constant dense<0.000000e+00> : vector<128x18xf32>
    %12 = tpu.matmul %10, %11, %cst_10 {dimension_numbers = #tpu.dot_dimension_numbers<[1], [0], [0], [1], [0, 0, 1, 1], [], []>} : vector<128x32xf32>, vector<32x18xf32>, vector<128x18xf32> -> vector<128x18xf32>
    %13 = arith.truncf %12 : vector<128x18xf32> to vector<128x18xbf16>
    %cst_11 = arith.constant dense<0.000000e+00> : vector<128x18xf32>
    %14 = tpu.matmul %0, %13, %cst_11 {dimension_numbers = #tpu.dot_dimension_numbers<[1], [0], [0], [1], [0, 0, 1, 1], [], []>} : vector<128x128xbf16>, vector<128x18xbf16>, vector<128x18xf32> -> vector<128x18xf32>
    %c0_12 = arith.constant 0 : index
    %c0_13 = arith.constant 0 : index
    %15 = vector.load %arg5[%c0_12, %c0_13] : memref<1x18xf32, #tpu.memory_space<vmem>>, vector<1x18xf32>
    %16 = vector.broadcast %15 : vector<1x18xf32> to vector<128x18xf32>
    %17 = arith.addf %14, %16 : vector<128x18xf32>
    %c0_14 = arith.constant 0 : index
    %c0_15 = arith.constant 0 : index
    %18 = vector.load %arg8[%c0_14, %c0_15] : memref<128x18xf32, #tpu.memory_space<vmem>>, vector<128x18xf32>
    %19 = arith.mulf %17, %18 : vector<128x18xf32>
    %c0_16 = arith.constant 0 : index
    %c0_17 = arith.constant 0 : index
    %20 = vector.load %arg3[%c0_16, %c0_17] : memref<18x6xf32, #tpu.memory_space<vmem>>, vector<18x6xf32>
    %cst_18 = arith.constant dense<0.000000e+00> : vector<128x6xf32>
    %21 = tpu.matmul %19, %20, %cst_18 {dimension_numbers = #tpu.dot_dimension_numbers<[1], [0], [0], [1], [0, 0, 1, 1], [], []>} : vector<128x18xf32>, vector<18x6xf32>, vector<128x6xf32> -> vector<128x6xf32>
    %22 = arith.truncf %21 : vector<128x6xf32> to vector<128x6xbf16>
    %cst_19 = arith.constant dense<0.000000e+00> : vector<128x6xf32>
    %23 = tpu.matmul %0, %22, %cst_19 {dimension_numbers = #tpu.dot_dimension_numbers<[1], [0], [0], [1], [0, 0, 1, 1], [], []>} : vector<128x128xbf16>, vector<128x6xbf16>, vector<128x6xf32> -> vector<128x6xf32>
    %c0_20 = arith.constant 0 : index
    %c0_21 = arith.constant 0 : index
    %24 = vector.load %arg6[%c0_20, %c0_21] : memref<1x6xf32, #tpu.memory_space<vmem>>, vector<1x6xf32>
    %25 = vector.broadcast %24 : vector<1x6xf32> to vector<128x6xf32>
    %26 = arith.addf %23, %25 : vector<128x6xf32>
    %cst_22 = arith.constant dense<0xFF800000> : vector<128xf32>
    %27 = vector.multi_reduction <maximumf>, %26, %cst_22 [1] : vector<128x6xf32> to vector<128xf32>
    %28 = vector.shape_cast %27 : vector<128xf32> to vector<128x1xf32>
    %29 = vector.broadcast %28 : vector<128x1xf32> to vector<128x6xf32>
    %30 = arith.subf %26, %29 : vector<128x6xf32>
    %31 = math.exp %30 : vector<128x6xf32>
    %cst_23 = arith.constant dense<0.000000e+00> : vector<128xf32>
    %32 = vector.multi_reduction <add>, %31, %cst_23 [1] : vector<128x6xf32> to vector<128xf32>
    %33 = vector.shape_cast %32 : vector<128xf32> to vector<128x1xf32>
    %34 = math.log %33 : vector<128x1xf32>
    %35 = arith.addf %28, %34 : vector<128x1xf32>
    %36 = vector.broadcast %35 : vector<128x1xf32> to vector<128x6xf32>
    %37 = arith.subf %26, %36 : vector<128x6xf32>
    %c0_24 = arith.constant 0 : index
    %c0_25 = arith.constant 0 : index
    %38 = vector.load %arg9[%c0_24, %c0_25] : memref<128x6xf32, #tpu.memory_space<vmem>>, vector<128x6xf32>
    tpu.vector_store %arg9[%c0_24, %c0_25], %37 {strides = array<i32>} : memref<128x6xf32, #tpu.memory_space<vmem>>, vector<128x6xf32>,
    return
  }
}

</mosaic_0001>

<llo_original>
// kernel: gcn_forward.4
$region0: #{gcn_forward.4}
  #allocation0 [shape = 'u32[]', space=smem, size = 0x4, offset = 0x4, fixed_abs, tag = 'smem constant byte address 0x4 - core index']
  #allocation1 [shape = 'u32[144,128]{1,0:T(1,128)}', space=vmem, size = 0x12000, scoped, tag = 'internal scratch']
  %s0 = inlined_call_operand.vmem [shape: s8[128,3712], index: 0, kind: input, shape index: {}]
  %s1 = inlined_call_operand.vmem [shape: bf16[3712,32], index: 1, kind: input, shape index: {}]
  %s2 = inlined_call_operand.vmem [shape: f32[128,32], index: 2, kind: output, shape index: {}]
  %s3 = sld [smem:[#allocation0]]
  $region18: #{gcn_forward.4} parent=0
    _
  %s5 = ssub.s32 1, %s3
  %s6 = scalar_select 0, %s5, %s3
  // Predicated region
  $region2: #{gcn_forward.4} parent=0 // pred_check
    _
  $region3: #{gcn_forward.4} parent=0 // pred_check_branch
    %8 = sbr.rel (0) target = $region5
  $region4: #{gcn_forward.4} parent=0 // pred_region
    _
  $region5: #{gcn_forward.4} parent=0 // pred_fallthru
    _
  // Predicated region
  $region6: #{gcn_forward.4} parent=0 // pred_check
    _
  $region7: #{gcn_forward.4} parent=0 // pred_check_branch
    %10 = sbr.rel (0) target = $region9
  $region8: #{gcn_forward.4} parent=0 // pred_region
    _
  $region9: #{gcn_forward.4} parent=0 // pred_fallthru
    _
  %v12 = vld [vmem:[%s0] sm:$0xff]
  %v13 = vld [vmem:[%s0 + $0x8] sm:$0xff]
  %v14 = vld [vmem:[%s0 + $0x10] sm:$0xff]
  %v15 = vld [vmem:[%s0 + $0x18] sm:$0xff]
  %v16 = vld [vmem:[%s0 + $0x20] sm:$0xff]
  %v17 = vld [vmem:[%s0 + $0x28] sm:$0xff]
  %v18 = vld [vmem:[%s0 + $0x30] sm:$0xff]
  %v19 = vld [vmem:[%s0 + $0x38] sm:$0xff]
  %v20 = vld [vmem:[%s0 + $0x40] sm:$0xff]
  %v21 = vld [vmem:[%s0 + $0x48] sm:$0xff]
  %v22 = vld [vmem:[%s0 + $0x50] sm:$0xff]
  %v23 = vld [vmem:[%s0 + $0x58] sm:$0xff]
  %v24 = vld [vmem:[%s0 + $0x60] sm:$0xff]
  %v25 = vld [vmem:[%s0 + $0x68] sm:$0xff]
  %v26 = vld [vmem:[%s0 + $0x70] sm:$0xff]
  %v27 = vld [vmem:[%s0 + $0x78] sm:$0xff]
  %v28 = vld [vmem:[%s0 + $0x80] sm:$0xff]
  %v29 = vld [vmem:[%s0 + $0x88] sm:$0xff]
  %v30 = vld [vmem:[%s0 + $0x90] sm:$0xff]
  %v31 = vld [vmem:[%s0 + $0x98] sm:$0xff]
  %v32 = vld [vmem:[%s0 + $0xa0] sm:$0xff]
  %v33 = vld [vmem:[%s0 + $0xa8] sm:$0xff]
  %v34 = vld [vmem:[%s0 + $0xb0] sm:$0xff]
  %v35 = vld [vmem:[%s0 + $0xb8] sm:$0xff]
  %v36 = vld [vmem:[%s0 + $0xc0] sm:$0xff]
  %v37 = vld [vmem:[%s0 + $0xc8] sm:$0xff]
  %v38 = vld [vmem:[%s0 + $0xd0] sm:$0xff]
  %v39 = vld [vmem:[%s0 + $0xd8] sm:$0xff]
  %v40 = vld [vmem:[%s0 + $0xe0] sm:$0xff]
  %v41 = vld [vmem:[%s0 + $0xe8] sm:$0xff]
  %v42 = vld [vmem:[%s0 + $0xf0] sm:$0xff]
  %v43 = vld [vmem:[%s0 + $0xf8] sm:$0xff]
  %v44 = vld [vmem:[%s0 + $0x100] sm:$0xff]
  %v45 = vld [vmem:[%s0 + $0x108] sm:$0xff]
  %v46 = vld [vmem:[%s0 + $0x110] sm:$0xff]
  %v47 = vld [vmem:[%s0 + $0x118] sm:$0xff]
  %v48 = vld [vmem:[%s0 + $0x120] sm:$0xff]
  %v49 = vld [vmem:[%s0 + $0x128] sm:$0xff]
  %v50 = vld [vmem:[%s0 + $0x130] sm:$0xff]
  %v51 = vld [vmem:[%s0 + $0x138] sm:$0xff]
  %v52 = vld [vmem:[%s0 + $0x140] sm:$0xff]
  %v53 = vld [vmem:[%s0 + $0x148] sm:$0xff]
  %v54 = vld [vmem:[%s0 + $0x150] sm:$0xff]
  %v55 = vld [vmem:[%s0 + $0x158] sm:$0xff]
  %v56 = vld [vmem:[%s0 + $0x160] sm:$0xff]
  %v57 = vld [vmem:[%s0 + $0x168] sm:$0xff]
  %v58 = vld [vmem:[%s0 + $0x170] sm:$0xff]
  %v59 = vld [vmem:[%s0 + $0x178] sm:$0xff]
  %v60 = vld [vmem:[%s0 + $0x180] sm:$0xff]
  %v61 = vld [vmem:[%s0 + $0x188] sm:$0xff]
  %v62 = vld [vmem:[%s0 + $0x190] sm:$0xff]
  %v63 = vld [vmem:[%s0 + $0x198] sm:$0xff]
  %v64 = vld [vmem:[%s0 + $0x1a0] sm:$0xff]
  %v65 = vld [vmem:[%s0 + $0x1a8] sm:$0xff]
  %v66 = vld [vmem:[%s0 + $0x1b0] sm:$0xff]
  %v67 = vld [vmem:[%s0 + $0x1b8] sm:$0xff]
  %v68 = vld [vmem:[%s0 + $0x1c0] sm:$0xff]
  %v69 = vld [vmem:[%s0 + $0x1c8] sm:$0xff]
  %v70 = vld [vmem:[%s0 + $0x1d0] sm:$0xff]
  %v71 = vld [vmem:[%s0 + $0x1d8] sm:$0xff]
  %v72 = vld [vmem:[%s0 + $0x1e0] sm:$0xff]
  %v73 = vld [vmem:[%s0 + $0x1e8] sm:$0xff]
  %v74 = vld [vmem:[%s0 + $0x1f0] sm:$0xff]
  %v75 = vld [vmem:[%s0 + $0x1f8] sm:$0xff]
  %v76 = vld [vmem:[%s0 + $0x200] sm:$0xff]
  %v77 = vld [vmem:[%s0 + $0x208] sm:$0xff]
  %v78 = vld [vmem:[%s0 + $0x210] sm:$0xff]
  %v79 = vld [vmem:[%s0 + $0x218] sm:$0xff]
  %v80 = vld [vmem:[%s0 + $0x220] sm:$0xff]
  %v81 = vld [vmem:[%s0 + $0x228] sm:$0xff]
  %v82 = vld [vmem:[%s0 + $0x230] sm:$0xff]
  %v83 = vld [vmem:[%s0 + $0x238] sm:$0xff]
  %v84 = vld [vmem:[%s0 + $0x240] sm:$0xff]
  %v85 = vld [vmem:[%s0 + $0x248] sm:$0xff]
  %v86 = vld [vmem:[%s0 + $0x250] sm:$0xff]
  %v87 = vld [vmem:[%s0 + $0x258] sm:$0xff]
  %v88 = vld [vmem:[%s0 + $0x260] sm:$0xff]
  %v89 = vld [vmem:[%s0 + $0x268] sm:$0xff]
  %v90 = vld [vmem:[%s0 + $0x270] sm:$0xff]
  %v91 = vld [vmem:[%s0 + $0x278] sm:$0xff]
  %v92 = vld [vmem:[%s0 + $0x280] sm:$0xff]
  %v93 = vld [vmem:[%s0 + $0x288] sm:$0xff]
  %v94 = vld [vmem:[%s0 + $0x290] sm:$0xff]
  %v95 = vld [vmem:[%s0 + $0x298] sm:$0xff]
  %v96 = vld [vmem:[%s0 + $0x2a0] sm:$0xff]
  %v97 = vld [vmem:[%s0 + $0x2a8] sm:$0xff]
  %v98 = vld [vmem:[%s0 + $0x2b0] sm:$0xff]
  %v99 = vld [vmem:[%s0 + $0x2b8] sm:$0xff]
  %v100 = vld [vmem:[%s0 + $0x2c0] sm:$0xff]
  %v101 = vld [vmem:[%s0 + $0x2c8] sm:$0xff]
  %v102 = vld [vmem:[%s0 + $0x2d0] sm:$0xff]
  %v103 = vld [vmem:[%s0 + $0x2d8] sm:$0xff]
  %v104 = vld [vmem:[%s0 + $0x2e0] sm:$0xff]
  %v105 = vld [vmem:[%s0 + $0x2e8] sm:$0xff]
  %v106 = vld [vmem:[%s0 + $0x2f0] sm:$0xff]
  %v107 = vld [vmem:[%s0 + $0x2f8] sm:$0xff]
  %v108 = vld [vmem:[%s0 + $0x300] sm:$0xff]
  %v109 = vld [vmem:[%s0 + $0x308] sm:$0xff]
  %v110 = vld [vmem:[%s0 + $0x310] sm:$0xff]
  %v111 = vld [vmem:[%s0 + $0x318] sm:$0xff]
  %v112 = vld [vmem:[%s0 + $0x320] sm:$0xff]
  %v113 = vld [vmem:[%s0 + $0x328] sm:$0xff]
  %v114 = vld [vmem:[%s0 + $0x330] sm:$0xff]
  %v115 = vld [vmem:[%s0 + $0x338] sm:$0xff]
  %v116 = vld [vmem:[%s0 + $0x340] sm:$0xff]
  %v117 = vld [vmem:[%s0 + $0x348] sm:$0xff]
  %v118 = vld [vmem:[%s0 + $0x350] sm:$0xff]
  %v119 = vld [vmem:[%s0 + $0x358] sm:$0xff]
  %v120 = vld [vmem:[%s0 + $0x360] sm:$0xff]
  %v121 = vld [vmem:[%s0 + $0x368] sm:$0xff]
  %v122 = vld [vmem:[%s0 + $0x370] sm:$0xff]
  %v123 = vld [vmem:[%s0 + $0x378] sm:$0xff]
  %v124 = vld [vmem:[%s0 + $0x380] sm:$0xff]
  %v125 = vld [vmem:[%s0 + $0x388] sm:$0xff]
  %v126 = vld [vmem:[%s0 + $0x390] sm:$0xff]
  %v127 = vld [vmem:[%s0 + $0x398] sm:$0xff]
  %v128 = vunpack.c.l.s8.bf16 %v12
  %v129 = vunpack.c.l.s8.bf16 %v13
  %v130 = vunpack.c.l.s8.bf16 %v14
  %v131 = vunpack.c.l.s8.bf16 %v15
  %v132 = vunpack.c.l.s8.bf16 %v16
  %v133 = vunpack.c.l.s8.bf16 %v17
  %v134 = vunpack.c.l.s8.bf16 %v18
  %v135 = vunpack.c.l.s8.bf16 %v19
  %v136 = vunpack.c.l.s8.bf16 %v20
  %v137 = vunpack.c.l.s8.bf16 %v21
  %v138 = vunpack.c.l.s8.bf16 %v22
  %v139 = vunpack.c.l.s8.bf16 %v23
  %v140 = vunpack.c.l.s8.bf16 %v24
  %v141 = vunpack.c.l.s8.bf16 %v25
  %v142 = vunpack.c.l.s8.bf16 %v26
  %v143 = vunpack.c.l.s8.bf16 %v27
  %v144 = vunpack.c.l.s8.bf16 %v28
  %v145 = vunpack.c.l.s8.bf16 %v29
  %v146 = vunpack.c.l.s8.bf16 %v30
  %v147 = vunpack.c.l.s8.bf16 %v31
  %v148 = vunpack.c.l.s8.bf16 %v32
  %v149 = vunpack.c.l.s8.bf16 %v33
  %v150 = vunpack.c.l.s8.bf16 %v34
  %v151 = vunpack.c.l.s8.bf16 %v35
  %v152 = vunpack.c.l.s8.bf16 %v36
  %v153 = vunpack.c.l.s8.bf16 %v37
  %v154 = vunpack.c.l.s8.bf16 %v38
  %v155 = vunpack.c.l.s8.bf16 %v39
  %v156 = vunpack.c.l.s8.bf16 %v40
  %v157 = vunpack.c.h.s8.bf16 %v12
  %v158 = vunpack.c.h.s8.bf16 %v13
  %v159 = vunpack.c.h.s8.bf16 %v14
  %v160 = vunpack.c.h.s8.bf16 %v15
  %v161 = vunpack.c.h.s8.bf16 %v16
  %v162 = vunpack.c.h.s8.bf16 %v17
  %v163 = vunpack.c.h.s8.bf16 %v18
  %v164 = vunpack.c.h.s8.bf16 %v19
  %v165 = vunpack.c.h.s8.bf16 %v20
  %v166 = vunpack.c.h.s8.bf16 %v21
  %v167 = vunpack.c.h.s8.bf16 %v22
  %v168 = vunpack.c.h.s8.bf16 %v23
  %v169 = vunpack.c.h.s8.bf16 %v24
  %v170 = vunpack.c.h.s8.bf16 %v25
  %v171 = vunpack.c.h.s8.bf16 %v26
  %v172 = vunpack.c.h.s8.bf16 %v27
  %v173 = vunpack.c.h.s8.bf16 %v28
  %v174 = vunpack.c.h.s8.bf16 %v29
  %v175 = vunpack.c.h.s8.bf16 %v30
  %v176 = vunpack.c.h.s8.bf16 %v31
  %v177 = vunpack.c.h.s8.bf16 %v32
  %v178 = vunpack.c.h.s8.bf16 %v33
  %v179 = vunpack.c.h.s8.bf16 %v34
  %v180 = vunpack.c.h.s8.bf16 %v35
  %v181 = vunpack.c.h.s8.bf16 %v36
  %v182 = vunpack.c.h.s8.bf16 %v37
  %v183 = vunpack.c.h.s8.bf16 %v38
  %v184 = vunpack.c.h.s8.bf16 %v39
  %v185 = vunpack.c.h.s8.bf16 %v40
  %v186 = vunpack.c.l.s8.bf16 %v41
  %v187 = vunpack.c.l.s8.bf16 %v42
  %v188 = vunpack.c.l.s8.bf16 %v43
  %v189 = vunpack.c.l.s8.bf16 %v44
  %v190 = vunpack.c.l.s8.bf16 %v45
  %v191 = vunpack.c.l.s8.bf16 %v46
  %v192 = vunpack.c.l.s8.bf16 %v47
  %v193 = vunpack.c.l.s8.bf16 %v48
  %v194 = vunpack.c.l.s8.bf16 %v49
  %v195 = vunpack.c.l.s8.bf16 %v50
  %v196 = vunpack.c.l.s8.bf16 %v51
  %v197 = vunpack.c.l.s8.bf16 %v52
  %v198 = vunpack.c.l.s8.bf16 %v53
  %v199 = vunpack.c.l.s8.bf16 %v54
  %v200 = vunpack.c.l.s8.bf16 %v55
  %v201 = vunpack.c.l.s8.bf16 %v56
  %v202 = vunpack.c.l.s8.bf16 %v57
  %v203 = vunpack.c.l.s8.bf16 %v58
  %v204 = vunpack.c.l.s8.bf16 %v59
  %v205 = vunpack.c.l.s8.bf16 %v60
  %v206 = vunpack.c.l.s8.bf16 %v61
  %v207 = vunpack.c.l.s8.bf16 %v62
  %v208 = vunpack.c.l.s8.bf16 %v63
  %v209 = vunpack.c.l.s8.bf16 %v64
  %v210 = vunpack.c.l.s8.bf16 %v65
  %v211 = vunpack.c.l.s8.bf16 %v66
  %v212 = vunpack.c.l.s8.bf16 %v67
  %v213 = vunpack.c.l.s8.bf16 %v68
  %v214 = vunpack.c.l.s8.bf16 %v69
  %v215 = vunpack.c.h.s8.bf16 %v41
  %v216 = vunpack.c.h.s8.bf16 %v42
  %v217 = vunpack.c.h.s8.bf16 %v43
  %v218 = vunpack.c.h.s8.bf16 %v44
  %v219 = vunpack.c.h.s8.bf16 %v45
  %v220 = vunpack.c.h.s8.bf16 %v46
  %v221 = vunpack.c.h.s8.bf16 %v47
  %v222 = vunpack.c.h.s8.bf16 %v48
  %v223 = vunpack.c.h.s8.bf16 %v49
  %v224 = vunpack.c.h.s8.bf16 %v50
  %v225 = vunpack.c.h.s8.bf16 %v51
  %v226 = vunpack.c.h.s8.bf16 %v52
  %v227 = vunpack.c.h.s8.bf16 %v53
  %v228 = vunpack.c.h.s8.bf16 %v54
  %v229 = vunpack.c.h.s8.bf16 %v55
  %v230 = vunpack.c.h.s8.bf16 %v56
  %v231 = vunpack.c.h.s8.bf16 %v57
  %v232 = vunpack.c.h.s8.bf16 %v58
  %v233 = vunpack.c.h.s8.bf16 %v59
  %v234 = vunpack.c.h.s8.bf16 %v60
  %v235 = vunpack.c.h.s8.bf16 %v61
  %v236 = vunpack.c.h.s8.bf16 %v62
  %v237 = vunpack.c.h.s8.bf16 %v63
  %v238 = vunpack.c.h.s8.bf16 %v64
  %v239 = vunpack.c.h.s8.bf16 %v65
  %v240 = vunpack.c.h.s8.bf16 %v66
  %v241 = vunpack.c.h.s8.bf16 %v67
  %v242 = vunpack.c.h.s8.bf16 %v68
  %v243 = vunpack.c.h.s8.bf16 %v69
  %v244 = vunpack.c.l.s8.bf16 %v70
  %v245 = vunpack.c.l.s8.bf16 %v71
  %v246 = vunpack.c.l.s8.bf16 %v72
  %v247 = vunpack.c.l.s8.bf16 %v73
  %v248 = vunpack.c.l.s8.bf16 %v74
  %v249 = vunpack.c.l.s8.bf16 %v75
  %v250 = vunpack.c.l.s8.bf16 %v76
  %v251 = vunpack.c.l.s8.bf16 %v77
  %v252 = vunpack.c.l.s8.bf16 %v78
  %v253 = vunpack.c.l.s8.bf16 %v79
  %v254 = vunpack.c.l.s8.bf16 %v80
  %v255 = vunpack.c.l.s8.bf16 %v81
  %v256 = vunpack.c.l.s8.bf16 %v82
  %v257 = vunpack.c.l.s8.bf16 %v83
  %v258 = vunpack.c.l.s8.bf16 %v84
  %v259 = vunpack.c.l.s8.bf16 %v85
  %v260 = vunpack.c.l.s8.bf16 %v86
  %v261 = vunpack.c.l.s8.bf16 %v87
  %v262 = vunpack.c.l.s8.bf16 %v88
  %v263 = vunpack.c.l.s8.bf16 %v89
  %v264 = vunpack.c.l.s8.bf16 %v90
  %v265 = vunpack.c.l.s8.bf16 %v91
  %v266 = vunpack.c.l.s8.bf16 %v92
  %v267 = vunpack.c.l.s8.bf16 %v93
  %v268 = vunpack.c.l.s8.bf16 %v94
  %v269 = vunpack.c.l.s8.bf16 %v95
  %v270 = vunpack.c.l.s8.bf16 %v96
  %v271 = vunpack.c.l.s8.bf16 %v97
  %v272 = vunpack.c.l.s8.bf16 %v98
  %v273 = vunpack.c.h.s8.bf16 %v70
  %v274 = vunpack.c.h.s8.bf16 %v71
  %v275 = vunpack.c.h.s8.bf16 %v72
  %v276 = vunpack.c.h.s8.bf16 %v73
  %v277 = vunpack.c.h.s8.bf16 %v74
  %v278 = vunpack.c.h.s8.bf16 %v75
  %v279 = vunpack.c.h.s8.bf16 %v76
  %v280 = vunpack.c.h.s8.bf16 %v77
  %v281 = vunpack.c.h.s8.bf16 %v78
  %v282 = vunpack.c.h.s8.bf16 %v79
  %v283 = vunpack.c.h.s8.bf16 %v80
  %v284 = vunpack.c.h.s8.bf16 %v81
  %v285 = vunpack.c.h.s8.bf16 %v82
  %v286 = vunpack.c.h.s8.bf16 %v83
  %v287 = vunpack.c.h.s8.bf16 %v84
  %v288 = vunpack.c.h.s8.bf16 %v85
  %v289 = vunpack.c.h.s8.bf16 %v86
  %v290 = vunpack.c.h.s8.bf16 %v87
  %v291 = vunpack.c.h.s8.bf16 %v88
  %v292 = vunpack.c.h.s8.bf16 %v89
  %v293 = vunpack.c.h.s8.bf16 %v90
  %v294 = vunpack.c.h.s8.bf16 %v91
  %v295 = vunpack.c.h.s8.bf16 %v92
  %v296 = vunpack.c.h.s8.bf16 %v93
  %v297 = vunpack.c.h.s8.bf16 %v94
  %v298 = vunpack.c.h.s8.bf16 %v95
  %v299 = vunpack.c.h.s8.bf16 %v96
  %v300 = vunpack.c.h.s8.bf16 %v97
  %v301 = vunpack.c.h.s8.bf16 %v98
  %v302 = vunpack.c.l.s8.bf16 %v99
  %v303 = vunpack.c.l.s8.bf16 %v100
  %v304 = vunpack.c.l.s8.bf16 %v101
  %v305 = vunpack.c.l.s8.bf16 %v102
  %v306 = vunpack.c.l.s8.bf16 %v103
  %v307 = vunpack.c.l.s8.bf16 %v104
  %v308 = vunpack.c.l.s8.bf16 %v105
  %v309 = vunpack.c.l.s8.bf16 %v106
  %v310 = vunpack.c.l.s8.bf16 %v107
  %v311 = vunpack.c.l.s8.bf16 %v108
  %v312 = vunpack.c.l.s8.bf16 %v109
  %v313 = vunpack.c.l.s8.bf16 %v110
  %v314 = vunpack.c.l.s8.bf16 %v111
  %v315 = vunpack.c.l.s8.bf16 %v112
  %v316 = vunpack.c.l.s8.bf16 %v113
  %v317 = vunpack.c.l.s8.bf16 %v114
  %v318 = vunpack.c.l.s8.bf16 %v115
  %v319 = vunpack.c.l.s8.bf16 %v116
  %v320 = vunpack.c.l.s8.bf16 %v117
  %v321 = vunpack.c.l.s8.bf16 %v118
  %v322 = vunpack.c.l.s8.bf16 %v119
  %v323 = vunpack.c.l.s8.bf16 %v120
  %v324 = vunpack.c.l.s8.bf16 %v121
  %v325 = vunpack.c.l.s8.bf16 %v122
  %v326 = vunpack.c.l.s8.bf16 %v123
  %v327 = vunpack.c.l.s8.bf16 %v124
  %v328 = vunpack.c.l.s8.bf16 %v125
  %v329 = vunpack.c.l.s8.bf16 %v126
  %v330 = vunpack.c.l.s8.bf16 %v127
  %v331 = vunpack.c.h.s8.bf16 %v99
  %v332 = vunpack.c.h.s8.bf16 %v100
  %v333 = vunpack.c.h.s8.bf16 %v101
  %v334 = vunpack.c.h.s8.bf16 %v102
  %v335 = vunpack.c.h.s8.bf16 %v103
  %v336 = vunpack.c.h.s8.bf16 %v104
  %v337 = vunpack.c.h.s8.bf16 %v105
  %v338 = vunpack.c.h.s8.bf16 %v106
  %v339 = vunpack.c.h.s8.bf16 %v107
  %v340 = vunpack.c.h.s8.bf16 %v108
  %v341 = vunpack.c.h.s8.bf16 %v109
  %v342 = vunpack.c.h.s8.bf16 %v110
  %v343 = vunpack.c.h.s8.bf16 %v111
  %v344 = vunpack.c.h.s8.bf16 %v112
  %v345 = vunpack.c.h.s8.bf16 %v113
  %v346 = vunpack.c.h.s8.bf16 %v114
  %v347 = vunpack.c.h.s8.bf16 %v115
  %v348 = vunpack.c.h.s8.bf16 %v116
  %v349 = vunpack.c.h.s8.bf16 %v117
  %v350 = vunpack.c.h.s8.bf16 %v118
  %v351 = vunpack.c.h.s8.bf16 %v119
  %v352 = vunpack.c.h.s8.bf16 %v120
  %v353 = vunpack.c.h.s8.bf16 %v121
  %v354 = vunpack.c.h.s8.bf16 %v122
  %v355 = vunpack.c.h.s8.bf16 %v123
  %v356 = vunpack.c.h.s8.bf16 %v124
  %v357 = vunpack.c.h.s8.bf16 %v125
  %v358 = vunpack.c.h.s8.bf16 %v126
  %v359 = vunpack.c.h.s8.bf16 %v127
  %v360 = vld [vmem:[%s1] sm:$0xf]
  %v361 = vld [vmem:[%s1 + $0x4] sm:$0xf]
  %v362 = vld [vmem:[%s1 + $0x8] sm:$0xf]
  %v363 = vld [vmem:[%s1 + $0xc] sm:$0xf]
  %v364 = vld [vmem:[%s1 + $0x10] sm:$0xf]
  %v365 = vld [vmem:[%s1 + $0x14] sm:$0xf]
  %v366 = vld [vmem:[%s1 + $0x18] sm:$0xf]
  %v367 = vld [vmem:[%s1 + $0x1c] sm:$0xf]
  %v368 = vld [vmem:[%s1 + $0x20] sm:$0xf]
  %v369 = vld [vmem:[%s1 + $0x24] sm:$0xf]
  %v370 = vld [vmem:[%s1 + $0x28] sm:$0xf]
  %v371 = vld [vmem:[%s1 + $0x2c] sm:$0xf]
  %v372 = vld [vmem:[%s1 + $0x30] sm:$0xf]
  %v373 = vld [vmem:[%s1 + $0x34] sm:$0xf]
  %v374 = vld [vmem:[%s1 + $0x38] sm:$0xf]
  %v375 = vld [vmem:[%s1 + $0x3c] sm:$0xf]
  %v376 = vld [vmem:[%s1 + $0x40] sm:$0xf]
  %v377 = vld [vmem:[%s1 + $0x44] sm:$0xf]
  %v378 = vld [vmem:[%s1 + $0x48] sm:$0xf]
  %v379 = vld [vmem:[%s1 + $0x4c] sm:$0xf]
  %v380 = vld [vmem:[%s1 + $0x50] sm:$0xf]
  %v381 = vld [vmem:[%s1 + $0x54] sm:$0xf]
  %v382 = vld [vmem:[%s1 + $0x58] sm:$0xf]
  %v383 = vld [vmem:[%s1 + $0x5c] sm:$0xf]
  %v384 = vld [vmem:[%s1 + $0x60] sm:$0xf]
  %v385 = vld [vmem:[%s1 + $0x64] sm:$0xf]
  %v386 = vld [vmem:[%s1 + $0x68] sm:$0xf]
  %v387 = vld [vmem:[%s1 + $0x6c] sm:$0xf]
  %v388 = vld [vmem:[%s1 + $0x70] sm:$0xf]
  %v389 = vld [vmem:[%s1 + $0x74] sm:$0xf]
  %v390 = vld [vmem:[%s1 + $0x78] sm:$0xf]
  %v391 = vld [vmem:[%s1 + $0x7c] sm:$0xf]
  %v392 = vld [vmem:[%s1 + $0x80] sm:$0xf]
  %v393 = vld [vmem:[%s1 + $0x84] sm:$0xf]
  %v394 = vld [vmem:[%s1 + $0x88] sm:$0xf]
  %v395 = vld [vmem:[%s1 + $0x8c] sm:$0xf]
  %v396 = vld [vmem:[%s1 + $0x90] sm:$0xf]
  %v397 = vld [vmem:[%s1 + $0x94] sm:$0xf]
  %v398 = vld [vmem:[%s1 + $0x98] sm:$0xf]
  %v399 = vld [vmem:[%s1 + $0x9c] sm:$0xf]
  %v400 = vld [vmem:[%s1 + $0xa0] sm:$0xf]
  %v401 = vld [vmem:[%s1 + $0xa4] sm:$0xf]
  %v402 = vld [vmem:[%s1 + $0xa8] sm:$0xf]
  %v403 = vld [vmem:[%s1 + $0xac] sm:$0xf]
  %v404 = vld [vmem:[%s1 + $0xb0] sm:$0xf]
  %v405 = vld [vmem:[%s1 + $0xb4] sm:$0xf]
  %v406 = vld [vmem:[%s1 + $0xb8] sm:$0xf]
  %v407 = vld [vmem:[%s1 + $0xbc] sm:$0xf]
  %v408 = vld [vmem:[%s1 + $0xc0] sm:$0xf]
  %v409 = vld [vmem:[%s1 + $0xc4] sm:$0xf]
  %v410 = vld [vmem:[%s1 + $0xc8] sm:$0xf]
  %v411 = vld [vmem:[%s1 + $0xcc] sm:$0xf]
  %v412 = vld [vmem:[%s1 + $0xd0] sm:$0xf]
  %v413 = vld [vmem:[%s1 + $0xd4] sm:$0xf]
  %v414 = vld [vmem:[%s1 + $0xd8] sm:$0xf]
  %v415 = vld [vmem:[%s1 + $0xdc] sm:$0xf]
  %v416 = vld [vmem:[%s1 + $0xe0] sm:$0xf]
  %v417 = vld [vmem:[%s1 + $0xe4] sm:$0xf]
  %v418 = vld [vmem:[%s1 + $0xe8] sm:$0xf]
  %v419 = vld [vmem:[%s1 + $0xec] sm:$0xf]
  %v420 = vld [vmem:[%s1 + $0xf0] sm:$0xf]
  %v421 = vld [vmem:[%s1 + $0xf4] sm:$0xf]
  %v422 = vld [vmem:[%s1 + $0xf8] sm:$0xf]
  %v423 = vld [vmem:[%s1 + $0xfc] sm:$0xf]
  %v424 = vld [vmem:[%s1 + $0x100] sm:$0xf]
  %v425 = vld [vmem:[%s1 + $0x104] sm:$0xf]
  %v426 = vld [vmem:[%s1 + $0x108] sm:$0xf]
  %v427 = vld [vmem:[%s1 + $0x10c] sm:$0xf]
  %v428 = vld [vmem:[%s1 + $0x110] sm:$0xf]
  %v429 = vld [vmem:[%s1 + $0x114] sm:$0xf]
  %v430 = vld [vmem:[%s1 + $0x118] sm:$0xf]
  %v431 = vld [vmem:[%s1 + $0x11c] sm:$0xf]
  %v432 = vld [vmem:[%s1 + $0x120] sm:$0xf]
  %v433 = vld [vmem:[%s1 + $0x124] sm:$0xf]
  %v434 = vld [vmem:[%s1 + $0x128] sm:$0xf]
  %v435 = vld [vmem:[%s1 + $0x12c] sm:$0xf]
  %v436 = vld [vmem:[%s1 + $0x130] sm:$0xf]
  %v437 = vld [vmem:[%s1 + $0x134] sm:$0xf]
  %v438 = vld [vmem:[%s1 + $0x138] sm:$0xf]
  %v439 = vld [vmem:[%s1 + $0x13c] sm:$0xf]
  %v440 = vld [vmem:[%s1 + $0x140] sm:$0xf]
  %v441 = vld [vmem:[%s1 + $0x144] sm:$0xf]
  %v442 = vld [vmem:[%s1 + $0x148] sm:$0xf]
  %v443 = vld [vmem:[%s1 + $0x14c] sm:$0xf]
  %v444 = vld [vmem:[%s1 + $0x150] sm:$0xf]
  %v445 = vld [vmem:[%s1 + $0x154] sm:$0xf]
  %v446 = vld [vmem:[%s1 + $0x158] sm:$0xf]
  %v447 = vld [vmem:[%s1 + $0x15c] sm:$0xf]
  %v448 = vld [vmem:[%s1 + $0x160] sm:$0xf]
  %v449 = vld [vmem:[%s1 + $0x164] sm:$0xf]
  %v450 = vld [vmem:[%s1 + $0x168] sm:$0xf]
  %v451 = vld [vmem:[%s1 + $0x16c] sm:$0xf]
  %v452 = vld [vmem:[%s1 + $0x170] sm:$0xf]
  %v453 = vld [vmem:[%s1 + $0x174] sm:$0xf]
  %v454 = vld [vmem:[%s1 + $0x178] sm:$0xf]
  %v455 = vld [vmem:[%s1 + $0x17c] sm:$0xf]
  %v456 = vld [vmem:[%s1 + $0x180] sm:$0xf]
  %v457 = vld [vmem:[%s1 + $0x184] sm:$0xf]
  %v458 = vld [vmem:[%s1 + $0x188] sm:$0xf]
  %v459 = vld [vmem:[%s1 + $0x18c] sm:$0xf]
  %v460 = vld [vmem:[%s1 + $0x190] sm:$0xf]
  %v461 = vld [vmem:[%s1 + $0x194] sm:$0xf]
  %v462 = vld [vmem:[%s1 + $0x198] sm:$0xf]
  %v463 = vld [vmem:[%s1 + $0x19c] sm:$0xf]
  %v464 = vld [vmem:[%s1 + $0x1a0] sm:$0xf]
  %v465 = vld [vmem:[%s1 + $0x1a4] sm:$0xf]
  %v466 = vld [vmem:[%s1 + $0x1a8] sm:$0xf]
  %v467 = vld [vmem:[%s1 + $0x1ac] sm:$0xf]
  %v468 = vld [vmem:[%s1 + $0x1b0] sm:$0xf]
  %v469 = vld [vmem:[%s1 + $0x1b4] sm:$0xf]
  %v470 = vld [vmem:[%s1 + $0x1b8] sm:$0xf]
  %v471 = vld [vmem:[%s1 + $0x1bc] sm:$0xf]
  %v472 = vld [vmem:[%s1 + $0x1c0] sm:$0xf]
  %v473 = vld [vmem:[%s1 + $0x1c4] sm:$0xf]
  %v474 = vld [vmem:[%s1 + $0x1c8] sm:$0xf]
  %v475 = vld [vmem:[%s1 + $0x1cc] sm:$0xf]
  %v476 = vld [vmem:[%s1 + $0x1d0] sm:$0xf]
  %v477 = vld [vmem:[%s1 + $0x1d4] sm:$0xf]
  %v478 = vld [vmem:[%s1 + $0x1d8] sm:$0xf]
  %v479 = vld [vmem:[%s1 + $0x1dc] sm:$0xf]
  %v480 = vld [vmem:[%s1 + $0x1e0] sm:$0xf]
  %v481 = vld [vmem:[%s1 + $0x1e4] sm:$0xf]
  %v482 = vld [vmem:[%s1 + $0x1e8] sm:$0xf]
  %v483 = vld [vmem:[%s1 + $0x1ec] sm:$0xf]
  %v484 = vld [vmem:[%s1 + $0x1f0] sm:$0xf]
  %v485 = vld [vmem:[%s1 + $0x1f4] sm:$0xf]
  %v486 = vld [vmem:[%s1 + $0x1f8] sm:$0xf]
  %v487 = vld [vmem:[%s1 + $0x1fc] sm:$0xf]
  %v488 = vld [vmem:[%s1 + $0x200] sm:$0xf]
  %v489 = vld [vmem:[%s1 + $0x204] sm:$0xf]
  %v490 = vld [vmem:[%s1 + $0x208] sm:$0xf]
  %v491 = vld [vmem:[%s1 + $0x20c] sm:$0xf]
  %v492 = vld [vmem:[%s1 + $0x210] sm:$0xf]
  %v493 = vld [vmem:[%s1 + $0x214] sm:$0xf]
  %v494 = vld [vmem:[%s1 + $0x218] sm:$0xf]
  %v495 = vld [vmem:[%s1 + $0x21c] sm:$0xf]
  %v496 = vld [vmem:[%s1 + $0x220] sm:$0xf]
  %v497 = vld [vmem:[%s1 + $0x224] sm:$0xf]
  %v498 = vld [vmem:[%s1 + $0x228] sm:$0xf]
  %v499 = vld [vmem:[%s1 + $0x22c] sm:$0xf]
  %v500 = vld [vmem:[%s1 + $0x230] sm:$0xf]
  %v501 = vld [vmem:[%s1 + $0x234] sm:$0xf]
  %v502 = vld [vmem:[%s1 + $0x238] sm:$0xf]
  %v503 = vld [vmem:[%s1 + $0x23c] sm:$0xf]
  %v504 = vld [vmem:[%s1 + $0x240] sm:$0xf]
  %v505 = vld [vmem:[%s1 + $0x244] sm:$0xf]
  %v506 = vld [vmem:[%s1 + $0x248] sm:$0xf]
  %v507 = vld [vmem:[%s1 + $0x24c] sm:$0xf]
  %v508 = vld [vmem:[%s1 + $0x250] sm:$0xf]
  %v509 = vld [vmem:[%s1 + $0x254] sm:$0xf]
  %v510 = vld [vmem:[%s1 + $0x258] sm:$0xf]
  %v511 = vld [vmem:[%s1 + $0x25c] sm:$0xf]
  %v512 = vld [vmem:[%s1 + $0x260] sm:$0xf]
  %v513 = vld [vmem:[%s1 + $0x264] sm:$0xf]
  %v514 = vld [vmem:[%s1 + $0x268] sm:$0xf]
  %v515 = vld [vmem:[%s1 + $0x26c] sm:$0xf]
  %v516 = vld [vmem:[%s1 + $0x270] sm:$0xf]
  %v517 = vld [vmem:[%s1 + $0x274] sm:$0xf]
  %v518 = vld [vmem:[%s1 + $0x278] sm:$0xf]
  %v519 = vld [vmem:[%s1 + $0x27c] sm:$0xf]
  %v520 = vld [vmem:[%s1 + $0x280] sm:$0xf]
  %v521 = vld [vmem:[%s1 + $0x284] sm:$0xf]
  %v522 = vld [vmem:[%s1 + $0x288] sm:$0xf]
  %v523 = vld [vmem:[%s1 + $0x28c] sm:$0xf]
  %v524 = vld [vmem:[%s1 + $0x290] sm:$0xf]
  %v525 = vld [vmem:[%s1 + $0x294] sm:$0xf]
  %v526 = vld [vmem:[%s1 + $0x298] sm:$0xf]
  %v527 = vld [vmem:[%s1 + $0x29c] sm:$0xf]
  %v528 = vld [vmem:[%s1 + $0x2a0] sm:$0xf]
  %v529 = vld [vmem:[%s1 + $0x2a4] sm:$0xf]
  %v530 = vld [vmem:[%s1 + $0x2a8] sm:$0xf]
  %v531 = vld [vmem:[%s1 + $0x2ac] sm:$0xf]
  %v532 = vld [vmem:[%s1 + $0x2b0] sm:$0xf]
  %v533 = vld [vmem:[%s1 + $0x2b4] sm:$0xf]
  %v534 = vld [vmem:[%s1 + $0x2b8] sm:$0xf]
  %v535 = vld [vmem:[%s1 + $0x2bc] sm:$0xf]
  %v536 = vld [vmem:[%s1 + $0x2c0] sm:$0xf]
  %v537 = vld [vmem:[%s1 + $0x2c4] sm:$0xf]
  %v538 = vld [vmem:[%s1 + $0x2c8] sm:$0xf]
  %v539 = vld [vmem:[%s1 + $0x2cc] sm:$0xf]
  %v540 = vld [vmem:[%s1 + $0x2d0] sm:$0xf]
  %v541 = vld [vmem:[%s1 + $0x2d4] sm:$0xf]
  %v542 = vld [vmem:[%s1 + $0x2d8] sm:$0xf]
  %v543 = vld [vmem:[%s1 + $0x2dc] sm:$0xf]
  %v544 = vld [vmem:[%s1 + $0x2e0] sm:$0xf]
  %v545 = vld [vmem:[%s1 + $0x2e4] sm:$0xf]
  %v546 = vld [vmem:[%s1 + $0x2e8] sm:$0xf]
  %v547 = vld [vmem:[%s1 + $0x2ec] sm:$0xf]
  %v548 = vld [vmem:[%s1 + $0x2f0] sm:$0xf]
  %v549 = vld [vmem:[%s1 + $0x2f4] sm:$0xf]
  %v550 = vld [vmem:[%s1 + $0x2f8] sm:$0xf]
  %v551 = vld [vmem:[%s1 + $0x2fc] sm:$0xf]
  %v552 = vld [vmem:[%s1 + $0x300] sm:$0xf]
  %v553 = vld [vmem:[%s1 + $0x304] sm:$0xf]
  %v554 = vld [vmem:[%s1 + $0x308] sm:$0xf]
  %v555 = vld [vmem:[%s1 + $0x30c] sm:$0xf]
  %v556 = vld [vmem:[%s1 + $0x310] sm:$0xf]
  %v557 = vld [vmem:[%s1 + $0x314] sm:$0xf]
  %v558 = vld [vmem:[%s1 + $0x318] sm:$0xf]
  %v559 = vld [vmem:[%s1 + $0x31c] sm:$0xf]
  %v560 = vld [vmem:[%s1 + $0x320] sm:$0xf]
  %v561 = vld [vmem:[%s1 + $0x324] sm:$0xf]
  %v562 = vld [vmem:[%s1 + $0x328] sm:$0xf]
  %v563 = vld [vmem:[%s1 + $0x32c] sm:$0xf]
  %v564 = vld [vmem:[%s1 + $0x330] sm:$0xf]
  %v565 = vld [vmem:[%s1 + $0x334] sm:$0xf]
  %v566 = vld [vmem:[%s1 + $0x338] sm:$0xf]
  %v567 = vld [vmem:[%s1 + $0x33c] sm:$0xf]
  %v568 = vld [vmem:[%s1 + $0x340] sm:$0xf]
  %v569 = vld [vmem:[%s1 + $0x344] sm:$0xf]
  %v570 = vld [vmem:[%s1 + $0x348] sm:$0xf]
  %v571 = vld [vmem:[%s1 + $0x34c] sm:$0xf]
  %v572 = vld [vmem:[%s1 + $0x350] sm:$0xf]
  %v573 = vld [vmem:[%s1 + $0x354] sm:$0xf]
  %v574 = vld [vmem:[%s1 + $0x358] sm:$0xf]
  %v575 = vld [vmem:[%s1 + $0x35c] sm:$0xf]
  %v576 = vld [vmem:[%s1 + $0x360] sm:$0xf]
  %v577 = vld [vmem:[%s1 + $0x364] sm:$0xf]
  %v578 = vld [vmem:[%s1 + $0x368] sm:$0xf]
  %v579 = vld [vmem:[%s1 + $0x36c] sm:$0xf]
  %v580 = vld [vmem:[%s1 + $0x370] sm:$0xf]
  %v581 = vld [vmem:[%s1 + $0x374] sm:$0xf]
  %v582 = vld [vmem:[%s1 + $0x378] sm:$0xf]
  %v583 = vld [vmem:[%s1 + $0x37c] sm:$0xf]
  %v584 = vld [vmem:[%s1 + $0x380] sm:$0xf]
  %v585 = vld [vmem:[%s1 + $0x384] sm:$0xf]
  %v586 = vld [vmem:[%s1 + $0x388] sm:$0xf]
  %v587 = vld [vmem:[%s1 + $0x38c] sm:$0xf]
  %v588 = vld [vmem:[%s1 + $0x390] sm:$0xf]
  %v589 = vld [vmem:[%s1 + $0x394] sm:$0xf]
  %v590 = vld [vmem:[%s1 + $0x398] sm:$0xf]
  %v591 = vld [vmem:[%s1 + $0x39c] sm:$0xf]
  %v592 = vld [vmem:[%s1 + $0x3a0] sm:$0xf]
  %v593 = vld [vmem:[%s1 + $0x3a4] sm:$0xf]
  %v594 = vld [vmem:[%s1 + $0x3a8] sm:$0xf]
  %v595 = vld [vmem:[%s1 + $0x3ac] sm:$0xf]
  %v596 = vld [vmem:[%s1 + $0x3b0] sm:$0xf]
  %v597 = vld [vmem:[%s1 + $0x3b4] sm:$0xf]
  %v598 = vld [vmem:[%s1 + $0x3b8] sm:$0xf]
  %v599 = vld [vmem:[%s1 + $0x3bc] sm:$0xf]
  %v600 = vld [vmem:[%s1 + $0x3c0] sm:$0xf]
  %v601 = vld [vmem:[%s1 + $0x3c4] sm:$0xf]
  %v602 = vld [vmem:[%s1 + $0x3c8] sm:$0xf]
  %v603 = vld [vmem:[%s1 + $0x3cc] sm:$0xf]
  %v604 = vld [vmem:[%s1 + $0x3d0] sm:$0xf]
  %v605 = vld [vmem:[%s1 + $0x3d4] sm:$0xf]
  %v606 = vld [vmem:[%s1 + $0x3d8] sm:$0xf]
  %v607 = vld [vmem:[%s1 + $0x3dc] sm:$0xf]
  %v608 = vld [vmem:[%s1 + $0x3e0] sm:$0xf]
  %v609 = vld [vmem:[%s1 + $0x3e4] sm:$0xf]
  %v610 = vld [vmem:[%s1 + $0x3e8] sm:$0xf]
  %v611 = vld [vmem:[%s1 + $0x3ec] sm:$0xf]
  %v612 = vld [vmem:[%s1 + $0x3f0] sm:$0xf]
  %v613 = vld [vmem:[%s1 + $0x3f4] sm:$0xf]
  %v614 = vld [vmem:[%s1 + $0x3f8] sm:$0xf]
  %v615 = vld [vmem:[%s1 + $0x3fc] sm:$0xf]
  %v616 = vld [vmem:[%s1 + $0x400] sm:$0xf]
  %v617 = vld [vmem:[%s1 + $0x404] sm:$0xf]
  %v618 = vld [vmem:[%s1 + $0x408] sm:$0xf]
  %v619 = vld [vmem:[%s1 + $0x40c] sm:$0xf]
  %v620 = vld [vmem:[%s1 + $0x410] sm:$0xf]
  %v621 = vld [vmem:[%s1 + $0x414] sm:$0xf]
  %v622 = vld [vmem:[%s1 + $0x418] sm:$0xf]
  %v623 = vld [vmem:[%s1 + $0x41c] sm:$0xf]
  %v624 = vld [vmem:[%s1 + $0x420] sm:$0xf]
  %v625 = vld [vmem:[%s1 + $0x424] sm:$0xf]
  %v626 = vld [vmem:[%s1 + $0x428] sm:$0xf]
  %v627 = vld [vmem:[%s1 + $0x42c] sm:$0xf]
  %v628 = vld [vmem:[%s1 + $0x430] sm:$0xf]
  %v629 = vld [vmem:[%s1 + $0x434] sm:$0xf]
  %v630 = vld [vmem:[%s1 + $0x438] sm:$0xf]
  %v631 = vld [vmem:[%s1 + $0x43c] sm:$0xf]
  %v632 = vld [vmem:[%s1 + $0x440] sm:$0xf]
  %v633 = vld [vmem:[%s1 + $0x444] sm:$0xf]
  %v634 = vld [vmem:[%s1 + $0x448] sm:$0xf]
  %v635 = vld [vmem:[%s1 + $0x44c] sm:$0xf]
  %v636 = vld [vmem:[%s1 + $0x450] sm:$0xf]
  %v637 = vld [vmem:[%s1 + $0x454] sm:$0xf]
  %v638 = vld [vmem:[%s1 + $0x458] sm:$0xf]
  %v639 = vld [vmem:[%s1 + $0x45c] sm:$0xf]
  %v640 = vld [vmem:[%s1 + $0x460] sm:$0xf]
  %v641 = vld [vmem:[%s1 + $0x464] sm:$0xf]
  %v642 = vld [vmem:[%s1 + $0x468] sm:$0xf]
  %v643 = vld [vmem:[%s1 + $0x46c] sm:$0xf]
  %v644 = vld [vmem:[%s1 + $0x470] sm:$0xf]
  %v645 = vld [vmem:[%s1 + $0x474] sm:$0xf]
  %v646 = vld [vmem:[%s1 + $0x478] sm:$0xf]
  %v647 = vld [vmem:[%s1 + $0x47c] sm:$0xf]
  %v648 = vld [vmem:[%s1 + $0x480] sm:$0xf]
  %v649 = vld [vmem:[%s1 + $0x484] sm:$0xf]
  %v650 = vld [vmem:[%s1 + $0x488] sm:$0xf]
  %v651 = vld [vmem:[%s1 + $0x48c] sm:$0xf]
  %v652 = vld [vmem:[%s1 + $0x490] sm:$0xf]
  %v653 = vld [vmem:[%s1 + $0x494] sm:$0xf]
  %v654 = vld [vmem:[%s1 + $0x498] sm:$0xf]
  %v655 = vld [vmem:[%s1 + $0x49c] sm:$0xf]
  %v656 = vld [vmem:[%s1 + $0x4a0] sm:$0xf]
  %v657 = vld [vmem:[%s1 + $0x4a4] sm:$0xf]
  %v658 = vld [vmem:[%s1 + $0x4a8] sm:$0xf]
  %v659 = vld [vmem:[%s1 + $0x4ac] sm:$0xf]
  %v660 = vld [vmem:[%s1 + $0x4b0] sm:$0xf]
  %v661 = vld [vmem:[%s1 + $0x4b4] sm:$0xf]
  %v662 = vld [vmem:[%s1 + $0x4b8] sm:$0xf]
  %v663 = vld [vmem:[%s1 + $0x4bc] sm:$0xf]
  %v664 = vld [vmem:[%s1 + $0x4c0] sm:$0xf]
  %v665 = vld [vmem:[%s1 + $0x4c4] sm:$0xf]
  %v666 = vld [vmem:[%s1 + $0x4c8] sm:$0xf]
  %v667 = vld [vmem:[%s1 + $0x4cc] sm:$0xf]
  %v668 = vld [vmem:[%s1 + $0x4d0] sm:$0xf]
  %v669 = vld [vmem:[%s1 + $0x4d4] sm:$0xf]
  %v670 = vld [vmem:[%s1 + $0x4d8] sm:$0xf]
  %v671 = vld [vmem:[%s1 + $0x4dc] sm:$0xf]
  %v672 = vld [vmem:[%s1 + $0x4e0] sm:$0xf]
  %v673 = vld [vmem:[%s1 + $0x4e4] sm:$0xf]
  %v674 = vld [vmem:[%s1 + $0x4e8] sm:$0xf]
  %v675 = vld [vmem:[%s1 + $0x4ec] sm:$0xf]
  %v676 = vld [vmem:[%s1 + $0x4f0] sm:$0xf]
  %v677 = vld [vmem:[%s1 + $0x4f4] sm:$0xf]
  %v678 = vld [vmem:[%s1 + $0x4f8] sm:$0xf]
  %v679 = vld [vmem:[%s1 + $0x4fc] sm:$0xf]
  %v680 = vld [vmem:[%s1 + $0x500] sm:$0xf]
  %v681 = vld [vmem:[%s1 + $0x504] sm:$0xf]
  %v682 = vld [vmem:[%s1 + $0x508] sm:$0xf]
  %v683 = vld [vmem:[%s1 + $0x50c] sm:$0xf]
  %v684 = vld [vmem:[%s1 + $0x510] sm:$0xf]
  %v685 = vld [vmem:[%s1 + $0x514] sm:$0xf]
  %v686 = vld [vmem:[%s1 + $0x518] sm:$0xf]
  %v687 = vld [vmem:[%s1 + $0x51c] sm:$0xf]
  %v688 = vld [vmem:[%s1 + $0x520] sm:$0xf]
  %v689 = vld [vmem:[%s1 + $0x524] sm:$0xf]
  %v690 = vld [vmem:[%s1 + $0x528] sm:$0xf]
  %v691 = vld [vmem:[%s1 + $0x52c] sm:$0xf]
  %v692 = vld [vmem:[%s1 + $0x530] sm:$0xf]
  %v693 = vld [vmem:[%s1 + $0x534] sm:$0xf]
  %v694 = vld [vmem:[%s1 + $0x538] sm:$0xf]
  %v695 = vld [vmem:[%s1 + $0x53c] sm:$0xf]
  %v696 = vld [vmem:[%s1 + $0x540] sm:$0xf]
  %v697 = vld [vmem:[%s1 + $0x544] sm:$0xf]
  %v698 = vld [vmem:[%s1 + $0x548] sm:$0xf]
  %v699 = vld [vmem:[%s1 + $0x54c] sm:$0xf]
  %v700 = vld [vmem:[%s1 + $0x550] sm:$0xf]
  %v701 = vld [vmem:[%s1 + $0x554] sm:$0xf]
  %v702 = vld [vmem:[%s1 + $0x558] sm:$0xf]
  %v703 = vld [vmem:[%s1 + $0x55c] sm:$0xf]
  %v704 = vld [vmem:[%s1 + $0x560] sm:$0xf]
  %v705 = vld [vmem:[%s1 + $0x564] sm:$0xf]
  %v706 = vld [vmem:[%s1 + $0x568] sm:$0xf]
  %v707 = vld [vmem:[%s1 + $0x56c] sm:$0xf]
  %v708 = vld [vmem:[%s1 + $0x570] sm:$0xf]
  %v709 = vld [vmem:[%s1 + $0x574] sm:$0xf]
  %v710 = vld [vmem:[%s1 + $0x578] sm:$0xf]
  %v711 = vld [vmem:[%s1 + $0x57c] sm:$0xf]
  %v712 = vld [vmem:[%s1 + $0x580] sm:$0xf]
  %v713 = vld [vmem:[%s1 + $0x584] sm:$0xf]
  %v714 = vld [vmem:[%s1 + $0x588] sm:$0xf]
  %v715 = vld [vmem:[%s1 + $0x58c] sm:$0xf]
  %v716 = vld [vmem:[%s1 + $0x590] sm:$0xf]
  %v717 = vld [vmem:[%s1 + $0x594] sm:$0xf]
  %v718 = vld [vmem:[%s1 + $0x598] sm:$0xf]
  %v719 = vld [vmem:[%s1 + $0x59c] sm:$0xf]
  %v720 = vld [vmem:[%s1 + $0x5a0] sm:$0xf]
  %v721 = vld [vmem:[%s1 + $0x5a4] sm:$0xf]
  %v722 = vld [vmem:[%s1 + $0x5a8] sm:$0xf]
  %v723 = vld [vmem:[%s1 + $0x5ac] sm:$0xf]
  %v724 = vld [vmem:[%s1 + $0x5b0] sm:$0xf]
  %v725 = vld [vmem:[%s1 + $0x5b4] sm:$0xf]
  %v726 = vld [vmem:[%s1 + $0x5b8] sm:$0xf]
  %v727 = vld [vmem:[%s1 + $0x5bc] sm:$0xf]
  %v728 = vld [vmem:[%s1 + $0x5c0] sm:$0xf]
  %v729 = vld [vmem:[%s1 + $0x5c4] sm:$0xf]
  %v730 = vld [vmem:[%s1 + $0x5c8] sm:$0xf]
  %v731 = vld [vmem:[%s1 + $0x5cc] sm:$0xf]
  %v732 = vld [vmem:[%s1 + $0x5d0] sm:$0xf]
  %v733 = vld [vmem:[%s1 + $0x5d4] sm:$0xf]
  %v734 = vld [vmem:[%s1 + $0x5d8] sm:$0xf]
  %v735 = vld [vmem:[%s1 + $0x5dc] sm:$0xf]
  %v736 = vld [vmem:[%s1 + $0x5e0] sm:$0xf]
  %v737 = vld [vmem:[%s1 + $0x5e4] sm:$0xf]
  %v738 = vld [vmem:[%s1 + $0x5e8] sm:$0xf]
  %v739 = vld [vmem:[%s1 + $0x5ec] sm:$0xf]
  %v740 = vld [vmem:[%s1 + $0x5f0] sm:$0xf]
  %v741 = vld [vmem:[%s1 + $0x5f4] sm:$0xf]
  %v742 = vld [vmem:[%s1 + $0x5f8] sm:$0xf]
  %v743 = vld [vmem:[%s1 + $0x5fc] sm:$0xf]
  %v744 = vld [vmem:[%s1 + $0x600] sm:$0xf]
  %v745 = vld [vmem:[%s1 + $0x604] sm:$0xf]
  %v746 = vld [vmem:[%s1 + $0x608] sm:$0xf]
  %v747 = vld [vmem:[%s1 + $0x60c] sm:$0xf]
  %v748 = vld [vmem:[%s1 + $0x610] sm:$0xf]
  %v749 = vld [vmem:[%s1 + $0x614] sm:$0xf]
  %v750 = vld [vmem:[%s1 + $0x618] sm:$0xf]
  %v751 = vld [vmem:[%s1 + $0x61c] sm:$0xf]
  %v752 = vld [vmem:[%s1 + $0x620] sm:$0xf]
  %v753 = vld [vmem:[%s1 + $0x624] sm:$0xf]
  %v754 = vld [vmem:[%s1 + $0x628] sm:$0xf]
  %v755 = vld [vmem:[%s1 + $0x62c] sm:$0xf]
  %v756 = vld [vmem:[%s1 + $0x630] sm:$0xf]
  %v757 = vld [vmem:[%s1 + $0x634] sm:$0xf]
  %v758 = vld [vmem:[%s1 + $0x638] sm:$0xf]
  %v759 = vld [vmem:[%s1 + $0x63c] sm:$0xf]
  %v760 = vld [vmem:[%s1 + $0x640] sm:$0xf]
  %v761 = vld [vmem:[%s1 + $0x644] sm:$0xf]
  %v762 = vld [vmem:[%s1 + $0x648] sm:$0xf]
  %v763 = vld [vmem:[%s1 + $0x64c] sm:$0xf]
  %v764 = vld [vmem:[%s1 + $0x650] sm:$0xf]
  %v765 = vld [vmem:[%s1 + $0x654] sm:$0xf]
  %v766 = vld [vmem:[%s1 + $0x658] sm:$0xf]
  %v767 = vld [vmem:[%s1 + $0x65c] sm:$0xf]
  %v768 = vld [vmem:[%s1 + $0x660] sm:$0xf]
  %v769 = vld [vmem:[%s1 + $0x664] sm:$0xf]
  %v770 = vld [vmem:[%s1 + $0x668] sm:$0xf]
  %v771 = vld [vmem:[%s1 + $0x66c] sm:$0xf]
  %v772 = vld [vmem:[%s1 + $0x670] sm:$0xf]
  %v773 = vld [vmem:[%s1 + $0x674] sm:$0xf]
  %v774 = vld [vmem:[%s1 + $0x678] sm:$0xf]
  %v775 = vld [vmem:[%s1 + $0x67c] sm:$0xf]
  %v776 = vld [vmem:[%s1 + $0x680] sm:$0xf]
  %v777 = vld [vmem:[%s1 + $0x684] sm:$0xf]
  %v778 = vld [vmem:[%s1 + $0x688] sm:$0xf]
  %v779 = vld [vmem:[%s1 + $0x68c] sm:$0xf]
  %v780 = vld [vmem:[%s1 + $0x690] sm:$0xf]
  %v781 = vld [vmem:[%s1 + $0x694] sm:$0xf]
  %v782 = vld [vmem:[%s1 + $0x698] sm:$0xf]
  %v783 = vld [vmem:[%s1 + $0x69c] sm:$0xf]
  %v784 = vld [vmem:[%s1 + $0x6a0] sm:$0xf]
  %v785 = vld [vmem:[%s1 + $0x6a4] sm:$0xf]
  %v786 = vld [vmem:[%s1 + $0x6a8] sm:$0xf]
  %v787 = vld [vmem:[%s1 + $0x6ac] sm:$0xf]
  %v788 = vld [vmem:[%s1 + $0x6b0] sm:$0xf]
  %v789 = vld [vmem:[%s1 + $0x6b4] sm:$0xf]
  %v790 = vld [vmem:[%s1 + $0x6b8] sm:$0xf]
  %v791 = vld [vmem:[%s1 + $0x6bc] sm:$0xf]
  %v792 = vld [vmem:[%s1 + $0x6c0] sm:$0xf]
  %v793 = vld [vmem:[%s1 + $0x6c4] sm:$0xf]
  %v794 = vld [vmem:[%s1 + $0x6c8] sm:$0xf]
  %v795 = vld [vmem:[%s1 + $0x6cc] sm:$0xf]
  %v796 = vld [vmem:[%s1 + $0x6d0] sm:$0xf]
  %v797 = vld [vmem:[%s1 + $0x6d4] sm:$0xf]
  %v798 = vld [vmem:[%s1 + $0x6d8] sm:$0xf]
  %v799 = vld [vmem:[%s1 + $0x6dc] sm:$0xf]
  %v800 = vld [vmem:[%s1 + $0x6e0] sm:$0xf]
  %v801 = vld [vmem:[%s1 + $0x6e4] sm:$0xf]
  %v802 = vld [vmem:[%s1 + $0x6e8] sm:$0xf]
  %v803 = vld [vmem:[%s1 + $0x6ec] sm:$0xf]
  %v804 = vld [vmem:[%s1 + $0x6f0] sm:$0xf]
  %v805 = vld [vmem:[%s1 + $0x6f4] sm:$0xf]
  %v806 = vld [vmem:[%s1 + $0x6f8] sm:$0xf]
  %v807 = vld [vmem:[%s1 + $0x6fc] sm:$0xf]
  %v808 = vld [vmem:[%s1 + $0x700] sm:$0xf]
  %v809 = vld [vmem:[%s1 + $0x704] sm:$0xf]
  %v810 = vld [vmem:[%s1 + $0x708] sm:$0xf]
  %v811 = vld [vmem:[%s1 + $0x70c] sm:$0xf]
  %v812 = vld [vmem:[%s1 + $0x710] sm:$0xf]
  %v813 = vld [vmem:[%s1 + $0x714] sm:$0xf]
  %v814 = vld [vmem:[%s1 + $0x718] sm:$0xf]
  %v815 = vld [vmem:[%s1 + $0x71c] sm:$0xf]
  %v816 = vld [vmem:[%s1 + $0x720] sm:$0xf]
  %v817 = vld [vmem:[%s1 + $0x724] sm:$0xf]
  %v818 = vld [vmem:[%s1 + $0x728] sm:$0xf]
  %v819 = vld [vmem:[%s1 + $0x72c] sm:$0xf]
  %v820 = vld [vmem:[%s1 + $0x730] sm:$0xf]
  %v821 = vld [vmem:[%s1 + $0x734] sm:$0xf]
  %v822 = vld [vmem:[%s1 + $0x738] sm:$0xf]
  %v823 = vld [vmem:[%s1 + $0x73c] sm:$0xf]
  %v1288 = vunpack.c.l.b16 %v360
  %v1289 = vunpack.c.l.b16 %v361
  %v1290 = vunpack.c.l.b16 %v362
  %v1291 = vunpack.c.l.b16 %v363
  %v1292 = vunpack.c.l.b16 %v364
  %v1293 = vunpack.c.l.b16 %v365
  %v1294 = vunpack.c.l.b16 %v366
  %v1295 = vunpack.c.l.b16 %v367
  %v1296 = vunpack.c.l.b16 %v368
  %v1297 = vunpack.c.l.b16 %v369
  %v1298 = vunpack.c.l.b16 %v370
  %v1299 = vunpack.c.l.b16 %v371
  %v1300 = vunpack.c.l.b16 %v372
  %v1301 = vunpack.c.l.b16 %v373
  %v1302 = vunpack.c.l.b16 %v374
  %v1303 = vunpack.c.l.b16 %v375
  %v1304 = vunpack.c.l.b16 %v376
  %v1305 = vunpack.c.l.b16 %v377
  %v1306 = vunpack.c.l.b16 %v378
  %v1307 = vunpack.c.l.b16 %v379
  %v1308 = vunpack.c.l.b16 %v380
  %v1309 = vunpack.c.l.b16 %v381
  %v1310 = vunpack.c.l.b16 %v382
  %v1311 = vunpack.c.l.b16 %v383
  %v1312 = vunpack.c.l.b16 %v384
  %v1313 = vunpack.c.l.b16 %v385
  %v1314 = vunpack.c.l.b16 %v386
  %v1315 = vunpack.c.l.b16 %v387
  %v1316 = vunpack.c.l.b16 %v388
  %v1317 = vunpack.c.l.b16 %v389
  %v1318 = vunpack.c.l.b16 %v390
  %v1319 = vunpack.c.l.b16 %v391
  %v1320 = vunpack.c.l.b16 %v392
  %v1321 = vunpack.c.l.b16 %v393
  %v1322 = vunpack.c.l.b16 %v394
  %v1323 = vunpack.c.l.b16 %v395
  %v1324 = vunpack.c.l.b16 %v396
  %v1325 = vunpack.c.l.b16 %v397
  %v1326 = vunpack.c.l.b16 %v398
  %v1327 = vunpack.c.l.b16 %v399
  %v1328 = vunpack.c.l.b16 %v400
  %v1329 = vunpack.c.l.b16 %v401
  %v1330 = vunpack.c.l.b16 %v402
  %v1331 = vunpack.c.l.b16 %v403
  %v1332 = vunpack.c.l.b16 %v404
  %v1333 = vunpack.c.l.b16 %v405
  %v1334 = vunpack.c.l.b16 %v406
  %v1335 = vunpack.c.l.b16 %v407
  %v1336 = vunpack.c.l.b16 %v408
  %v1337 = vunpack.c.l.b16 %v409
  %v1338 = vunpack.c.l.b16 %v410
  %v1339 = vunpack.c.l.b16 %v411
  %v1340 = vunpack.c.l.b16 %v412
  %v1341 = vunpack.c.l.b16 %v413
  %v1342 = vunpack.c.l.b16 %v414
  %v1343 = vunpack.c.l.b16 %v415
  %v1344 = vunpack.c.l.b16 %v416
  %v1345 = vunpack.c.l.b16 %v417
  %v1346 = vunpack.c.l.b16 %v418
  %v1347 = vunpack.c.l.b16 %v419
  %v1348 = vunpack.c.l.b16 %v420
  %v1349 = vunpack.c.l.b16 %v421
  %v1350 = vunpack.c.l.b16 %v422
  %v1351 = vunpack.c.l.b16 %v423
  %v1352 = vunpack.c.l.b16 %v424
  %v1353 = vunpack.c.l.b16 %v425
  %v1354 = vunpack.c.l.b16 %v426
  %v1355 = vunpack.c.l.b16 %v427
  %v1356 = vunpack.c.l.b16 %v428
  %v1357 = vunpack.c.l.b16 %v429
  %v1358 = vunpack.c.l.b16 %v430
  %v1359 = vunpack.c.l.b16 %v431
  %v1360 = vunpack.c.l.b16 %v432
  %v1361 = vunpack.c.l.b16 %v433
  %v1362 = vunpack.c.l.b16 %v434
  %v1363 = vunpack.c.l.b16 %v435
  %v1364 = vunpack.c.l.b16 %v436
  %v1365 = vunpack.c.l.b16 %v437
  %v1366 = vunpack.c.l.b16 %v438
  %v1367 = vunpack.c.l.b16 %v439
  %v1368 = vunpack.c.l.b16 %v440
  %v1369 = vunpack.c.l.b16 %v441
  %v1370 = vunpack.c.l.b16 %v442
  %v1371 = vunpack.c.l.b16 %v443
  %v1372 = vunpack.c.l.b16 %v444
  %v1373 = vunpack.c.l.b16 %v445
  %v1374 = vunpack.c.l.b16 %v446
  %v1375 = vunpack.c.l.b16 %v447
  %v1376 = vunpack.c.l.b16 %v448
  %v1377 = vunpack.c.l.b16 %v449
  %v1378 = vunpack.c.l.b16 %v450
  %v1379 = vunpack.c.l.b16 %v451
  %v1380 = vunpack.c.l.b16 %v452
  %v1381 = vunpack.c.l.b16 %v453
  %v1382 = vunpack.c.l.b16 %v454
  %v1383 = vunpack.c.l.b16 %v455
  %v1384 = vunpack.c.l.b16 %v456
  %v1385 = vunpack.c.l.b16 %v457
  %v1386 = vunpack.c.l.b16 %v458
  %v1387 = vunpack.c.l.b16 %v459
  %v1388 = vunpack.c.l.b16 %v460
  %v1389 = vunpack.c.l.b16 %v461
  %v1390 = vunpack.c.l.b16 %v462
  %v1391 = vunpack.c.l.b16 %v463
  %v1392 = vunpack.c.l.b16 %v464
  %v1393 = vunpack.c.l.b16 %v465
  %v1394 = vunpack.c.l.b16 %v466
  %v1395 = vunpack.c.l.b16 %v467
  %v1396 = vunpack.c.l.b16 %v468
  %v1397 = vunpack.c.l.b16 %v469
  %v1398 = vunpack.c.l.b16 %v470
  %v1399 = vunpack.c.l.b16 %v471
  %v1400 = vunpack.c.l.b16 %v472
  %v1401 = vunpack.c.l.b16 %v473
  %v1402 = vunpack.c.l.b16 %v474
  %v1403 = vunpack.c.l.b16 %v475
  %v1404 = vunpack.c.l.b16 %v476
  %v1405 = vunpack.c.l.b16 %v477
  %v1406 = vunpack.c.l.b16 %v478
  %v1407 = vunpack.c.l.b16 %v479
  %v1408 = vunpack.c.l.b16 %v480
  %v1409 = vunpack.c.l.b16 %v481
  %v1410 = vunpack.c.l.b16 %v482
  %v1411 = vunpack.c.l.b16 %v483
  %v1412 = vunpack.c.l.b16 %v484
  %v1413 = vunpack.c.l.b16 %v485
  %v1414 = vunpack.c.l.b16 %v486
  %v1415 = vunpack.c.l.b16 %v487
  %v1416 = vunpack.c.l.b16 %v488
  %v1417 = vunpack.c.l.b16 %v489
  %v1418 = vunpack.c.l.b16 %v490
  %v1419 = vunpack.c.l.b16 %v491
  %v1420 = vunpack.c.l.b16 %v492
  %v1421 = vunpack.c.l.b16 %v493
  %v1422 = vunpack.c.l.b16 %v494
  %v1423 = vunpack.c.l.b16 %v495
  %v1424 = vunpack.c.l.b16 %v496
  %v1425 = vunpack.c.l.b16 %v497
  %v1426 = vunpack.c.l.b16 %v498
  %v1427 = vunpack.c.l.b16 %v499
  %v1428 = vunpack.c.l.b16 %v500
  %v1429 = vunpack.c.l.b16 %v501
  %v1430 = vunpack.c.l.b16 %v502
  %v1431 = vunpack.c.l.b16 %v503
  %v1432 = vunpack.c.l.b16 %v504
  %v1433 = vunpack.c.l.b16 %v505
  %v1434 = vunpack.c.l.b16 %v506
  %v1435 = vunpack.c.l.b16 %v507
  %v1436 = vunpack.c.l.b16 %v508
  %v1437 = vunpack.c.l.b16 %v509
  %v1438 = vunpack.c.l.b16 %v510
  %v1439 = vunpack.c.l.b16 %v511
  %v1440 = vunpack.c.l.b16 %v512
  %v1441 = vunpack.c.l.b16 %v513
  %v1442 = vunpack.c.l.b16 %v514
  %v1443 = vunpack.c.l.b16 %v515
  %v1444 = vunpack.c.l.b16 %v516
  %v1445 = vunpack.c.l.b16 %v517
  %v1446 = vunpack.c.l.b16 %v518
  %v1447 = vunpack.c.l.b16 %v519
  %v1448 = vunpack.c.l.b16 %v520
  %v1449 = vunpack.c.l.b16 %v521
  %v1450 = vunpack.c.l.b16 %v522
  %v1451 = vunpack.c.l.b16 %v523
  %v1452 = vunpack.c.l.b16 %v524
  %v1453 = vunpack.c.l.b16 %v525
  %v1454 = vunpack.c.l.b16 %v526
  %v1455 = vunpack.c.l.b16 %v527
  %v1456 = vunpack.c.l.b16 %v528
  %v1457 = vunpack.c.l.b16 %v529
  %v1458 = vunpack.c.l.b16 %v530
  %v1459 = vunpack.c.l.b16 %v531
  %v1460 = vunpack.c.l.b16 %v532
  %v1461 = vunpack.c.l.b16 %v533
  %v1462 = vunpack.c.l.b16 %v534
  %v1463 = vunpack.c.l.b16 %v535
  %v1464 = vunpack.c.l.b16 %v536
  %v1465 = vunpack.c.l.b16 %v537
  %v1466 = vunpack.c.l.b16 %v538
  %v1467 = vunpack.c.l.b16 %v539
  %v1468 = vunpack.c.l.b16 %v540
  %v1469 = vunpack.c.l.b16 %v541
  %v1470 = vunpack.c.l.b16 %v542
  %v1471 = vunpack.c.l.b16 %v543
  %v1472 = vunpack.c.l.b16 %v544
  %v1473 = vunpack.c.l.b16 %v545
  %v1474 = vunpack.c.l.b16 %v546
  %v1475 = vunpack.c.l.b16 %v547
  %v1476 = vunpack.c.l.b16 %v548
  %v1477 = vunpack.c.l.b16 %v549
  %v1478 = vunpack.c.l.b16 %v550
  %v1479 = vunpack.c.l.b16 %v551
  %v1480 = vunpack.c.l.b16 %v552
  %v1481 = vunpack.c.l.b16 %v553
  %v1482 = vunpack.c.l.b16 %v554
  %v1483 = vunpack.c.l.b16 %v555
  %v1484 = vunpack.c.l.b16 %v556
  %v1485 = vunpack.c.l.b16 %v557
  %v1486 = vunpack.c.l.b16 %v558
  %v1487 = vunpack.c.l.b16 %v559
  %v1488 = vunpack.c.l.b16 %v560
  %v1489 = vunpack.c.l.b16 %v561
  %v1490 = vunpack.c.l.b16 %v562
  %v1491 = vunpack.c.l.b16 %v563
  %v1492 = vunpack.c.l.b16 %v564
  %v1493 = vunpack.c.l.b16 %v565
  %v1494 = vunpack.c.l.b16 %v566
  %v1495 = vunpack.c.l.b16 %v567
  %v1496 = vunpack.c.l.b16 %v568
  %v1497 = vunpack.c.l.b16 %v569
  %v1498 = vunpack.c.l.b16 %v570
  %v1499 = vunpack.c.l.b16 %v571
  %v1500 = vunpack.c.l.b16 %v572
  %v1501 = vunpack.c.l.b16 %v573
  %v1502 = vunpack.c.l.b16 %v574
  %v1503 = vunpack.c.l.b16 %v575
  %v1504 = vunpack.c.l.b16 %v576
  %v1505 = vunpack.c.l.b16 %v577
  %v1506 = vunpack.c.l.b16 %v578
  %v1507 = vunpack.c.l.b16 %v579
  %v1508 = vunpack.c.l.b16 %v580
  %v1509 = vunpack.c.l.b16 %v581
  %v1510 = vunpack.c.l.b16 %v582
  %v1511 = vunpack.c.l.b16 %v583
  %v1512 = vunpack.c.l.b16 %v584
  %v1513 = vunpack.c.l.b16 %v585
  %v1514 = vunpack.c.l.b16 %v586
  %v1515 = vunpack.c.l.b16 %v587
  %v1516 = vunpack.c.l.b16 %v588
  %v1517 = vunpack.c.l.b16 %v589
  %v1518 = vunpack.c.l.b16 %v590
  %v1519 = vunpack.c.l.b16 %v591
  %v1520 = vunpack.c.l.b16 %v592
  %v1521 = vunpack.c.l.b16 %v593
  %v1522 = vunpack.c.l.b16 %v594
  %v1523 = vunpack.c.l.b16 %v595
  %v1524 = vunpack.c.l.b16 %v596
  %v1525 = vunpack.c.l.b16 %v597
  %v1526 = vunpack.c.l.b16 %v598
  %v1527 = vunpack.c.l.b16 %v599
  %v1528 = vunpack.c.l.b16 %v600
  %v1529 = vunpack.c.l.b16 %v601
  %v1530 = vunpack.c.l.b16 %v602
  %v1531 = vunpack.c.l.b16 %v603
  %v1532 = vunpack.c.l.b16 %v604
  %v1533 = vunpack.c.l.b16 %v605
  %v1534 = vunpack.c.l.b16 %v606
  %v1535 = vunpack.c.l.b16 %v607
  %v1536 = vunpack.c.l.b16 %v608
  %v1537 = vunpack.c.l.b16 %v609
  %v1538 = vunpack.c.l.b16 %v610
  %v1539 = vunpack.c.l.b16 %v611
  %v1540 = vunpack.c.l.b16 %v612
  %v1541 = vunpack.c.l.b16 %v613
  %v1542 = vunpack.c.l.b16 %v614
  %v1543 = vunpack.c.l.b16 %v615
  %v1544 = vunpack.c.l.b16 %v616
  %v1545 = vunpack.c.l.b16 %v617
  %v1546 = vunpack.c.l.b16 %v618
  %v1547 = vunpack.c.l.b16 %v619
  %v1548 = vunpack.c.l.b16 %v620
  %v1549 = vunpack.c.l.b16 %v621
  %v1550 = vunpack.c.l.b16 %v622
  %v1551 = vunpack.c.l.b16 %v623
  %v1552 = vunpack.c.l.b16 %v624
  %v1553 = vunpack.c.l.b16 %v625
  %v1554 = vunpack.c.l.b16 %v626
  %v1555 = vunpack.c.l.b16 %v627
  %v1556 = vunpack.c.l.b16 %v628
  %v1557 = vunpack.c.l.b16 %v629
  %v1558 = vunpack.c.l.b16 %v630
  %v1559 = vunpack.c.l.b16 %v631
  %v1560 = vunpack.c.l.b16 %v632
  %v1561 = vunpack.c.l.b16 %v633
  %v1562 = vunpack.c.l.b16 %v634
  %v1563 = vunpack.c.l.b16 %v635
  %v1564 = vunpack.c.l.b16 %v636
  %v1565 = vunpack.c.l.b16 %v637
  %v1566 = vunpack.c.l.b16 %v638
  %v1567 = vunpack.c.l.b16 %v639
  %v1568 = vunpack.c.l.b16 %v640
  %v1569 = vunpack.c.l.b16 %v641
  %v1570 = vunpack.c.l.b16 %v642
  %v1571 = vunpack.c.l.b16 %v643
  %v1572 = vunpack.c.l.b16 %v644
  %v1573 = vunpack.c.l.b16 %v645
  %v1574 = vunpack.c.l.b16 %v646
  %v1575 = vunpack.c.l.b16 %v647
  %v1576 = vunpack.c.l.b16 %v648
  %v1577 = vunpack.c.l.b16 %v649
  %v1578 = vunpack.c.l.b16 %v650
  %v1579 = vunpack.c.l.b16 %v651
  %v1580 = vunpack.c.l.b16 %v652
  %v1581 = vunpack.c.l.b16 %v653
  %v1582 = vunpack.c.l.b16 %v654
  %v1583 = vunpack.c.l.b16 %v655
  %v1584 = vunpack.c.l.b16 %v656
  %v1585 = vunpack.c.l.b16 %v657
  %v1586 = vunpack.c.l.b16 %v658
  %v1587 = vunpack.c.l.b16 %v659
  %v1588 = vunpack.c.l.b16 %v660
  %v1589 = vunpack.c.l.b16 %v661
  %v1590 = vunpack.c.l.b16 %v662
  %v1591 = vunpack.c.l.b16 %v663
  %v1592 = vunpack.c.l.b16 %v664
  %v1593 = vunpack.c.l.b16 %v665
  %v1594 = vunpack.c.l.b16 %v666
  %v1595 = vunpack.c.l.b16 %v667
  %v1596 = vunpack.c.l.b16 %v668
  %v1597 = vunpack.c.l.b16 %v669
  %v1598 = vunpack.c.l.b16 %v670
  %v1599 = vunpack.c.l.b16 %v671
  %v1600 = vunpack.c.l.b16 %v672
  %v1601 = vunpack.c.l.b16 %v673
  %v1602 = vunpack.c.l.b16 %v674
  %v1603 = vunpack.c.l.b16 %v675
  %v1604 = vunpack.c.l.b16 %v676
  %v1605 = vunpack.c.l.b16 %v677
  %v1606 = vunpack.c.l.b16 %v678
  %v1607 = vunpack.c.l.b16 %v679
  %v1608 = vunpack.c.l.b16 %v680
  %v1609 = vunpack.c.l.b16 %v681
  %v1610 = vunpack.c.l.b16 %v682
  %v1611 = vunpack.c.l.b16 %v683
  %v1612 = vunpack.c.l.b16 %v684
  %v1613 = vunpack.c.l.b16 %v685
  %v1614 = vunpack.c.l.b16 %v686
  %v1615 = vunpack.c.l.b16 %v687
  %v1616 = vunpack.c.l.b16 %v688
  %v1617 = vunpack.c.l.b16 %v689
  %v1618 = vunpack.c.l.b16 %v690
  %v1619 = vunpack.c.l.b16 %v691
  %v1620 = vunpack.c.l.b16 %v692
  %v1621 = vunpack.c.l.b16 %v693
  %v1622 = vunpack.c.l.b16 %v694
  %v1623 = vunpack.c.l.b16 %v695
  %v1624 = vunpack.c.l.b16 %v696
  %v1625 = vunpack.c.l.b16 %v697
  %v1626 = vunpack.c.l.b16 %v698
  %v1627 = vunpack.c.l.b16 %v699
  %v1628 = vunpack.c.l.b16 %v700
  %v1629 = vunpack.c.l.b16 %v701
  %v1630 = vunpack.c.l.b16 %v702
  %v1631 = vunpack.c.l.b16 %v703
  %v1632 = vunpack.c.l.b16 %v704
  %v1633 = vunpack.c.l.b16 %v705
  %v1634 = vunpack.c.l.b16 %v706
  %v1635 = vunpack.c.l.b16 %v707
  %v1636 = vunpack.c.l.b16 %v708
  %v1637 = vunpack.c.l.b16 %v709
  %v1638 = vunpack.c.l.b16 %v710
  %v1639 = vunpack.c.l.b16 %v711
  %v1640 = vunpack.c.l.b16 %v712
  %v1641 = vunpack.c.l.b16 %v713
  %v1642 = vunpack.c.l.b16 %v714
  %v1643 = vunpack.c.l.b16 %v715
  %v1644 = vunpack.c.l.b16 %v716
  %v1645 = vunpack.c.l.b16 %v717
  %v1646 = vunpack.c.l.b16 %v718
  %v1647 = vunpack.c.l.b16 %v719
  %v1648 = vunpack.c.l.b16 %v720
  %v1649 = vunpack.c.l.b16 %v721
  %v1650 = vunpack.c.l.b16 %v722
  %v1651 = vunpack.c.l.b16 %v723
  %v1652 = vunpack.c.l.b16 %v724
  %v1653 = vunpack.c.l.b16 %v725
  %v1654 = vunpack.c.l.b16 %v726
  %v1655 = vunpack.c.l.b16 %v727
  %v1656 = vunpack.c.l.b16 %v728
  %v1657 = vunpack.c.l.b16 %v729
  %v1658 = vunpack.c.l.b16 %v730
  %v1659 = vunpack.c.l.b16 %v731
  %v1660 = vunpack.c.l.b16 %v732
  %v1661 = vunpack.c.l.b16 %v733
  %v1662 = vunpack.c.l.b16 %v734
  %v1663 = vunpack.c.l.b16 %v735
  %v1664 = vunpack.c.l.b16 %v736
  %v1665 = vunpack.c.l.b16 %v737
  %v1666 = vunpack.c.l.b16 %v738
  %v1667 = vunpack.c.l.b16 %v739
  %v1668 = vunpack.c.l.b16 %v740
  %v1669 = vunpack.c.l.b16 %v741
  %v1670 = vunpack.c.l.b16 %v742
  %v1671 = vunpack.c.l.b16 %v743
  %v1672 = vunpack.c.l.b16 %v744
  %v1673 = vunpack.c.l.b16 %v745
  %v1674 = vunpack.c.l.b16 %v746
  %v1675 = vunpack.c.l.b16 %v747
  %v1676 = vunpack.c.l.b16 %v748
  %v1677 = vunpack.c.l.b16 %v749
  %v1678 = vunpack.c.l.b16 %v750
  %v1679 = vunpack.c.l.b16 %v751
  %v1680 = vunpack.c.l.b16 %v752
  %v1681 = vunpack.c.l.b16 %v753
  %v1682 = vunpack.c.l.b16 %v754
  %v1683 = vunpack.c.l.b16 %v755
  %v1684 = vunpack.c.l.b16 %v756
  %v1685 = vunpack.c.l.b16 %v757
  %v1686 = vunpack.c.l.b16 %v758
  %v1687 = vunpack.c.l.b16 %v759
  %v1688 = vunpack.c.l.b16 %v760
  %v1689 = vunpack.c.l.b16 %v761
  %v1690 = vunpack.c.l.b16 %v762
  %v1691 = vunpack.c.l.b16 %v763
  %v1692 = vunpack.c.l.b16 %v764
  %v1693 = vunpack.c.l.b16 %v765
  %v1694 = vunpack.c.l.b16 %v766
  %v1695 = vunpack.c.l.b16 %v767
  %v1696 = vunpack.c.l.b16 %v768
  %v1697 = vunpack.c.l.b16 %v769
  %v1698 = vunpack.c.l.b16 %v770
  %v1699 = vunpack.c.l.b16 %v771
  %v1700 = vunpack.c.l.b16 %v772
  %v1701 = vunpack.c.l.b16 %v773
  %v1702 = vunpack.c.l.b16 %v774
  %v1703 = vunpack.c.l.b16 %v775
  %v1704 = vunpack.c.l.b16 %v776
  %v1705 = vunpack.c.l.b16 %v777
  %v1706 = vunpack.c.l.b16 %v778
  %v1707 = vunpack.c.l.b16 %v779
  %v1708 = vunpack.c.l.b16 %v780
  %v1709 = vunpack.c.l.b16 %v781
  %v1710 = vunpack.c.l.b16 %v782
  %v1711 = vunpack.c.l.b16 %v783
  %v1712 = vunpack.c.l.b16 %v784
  %v1713 = vunpack.c.l.b16 %v785
  %v1714 = vunpack.c.l.b16 %v786
  %v1715 = vunpack.c.l.b16 %v787
  %v1716 = vunpack.c.l.b16 %v788
  %v1717 = vunpack.c.l.b16 %v789
  %v1718 = vunpack.c.l.b16 %v790
  %v1719 = vunpack.c.l.b16 %v791
  %v1720 = vunpack.c.l.b16 %v792
  %v1721 = vunpack.c.l.b16 %v793
  %v1722 = vunpack.c.l.b16 %v794
  %v1723 = vunpack.c.l.b16 %v795
  %v1724 = vunpack.c.l.b16 %v796
  %v1725 = vunpack.c.l.b16 %v797
  %v1726 = vunpack.c.l.b16 %v798
  %v1727 = vunpack.c.l.b16 %v799
  %v1728 = vunpack.c.l.b16 %v800
  %v1729 = vunpack.c.l.b16 %v801
  %v1730 = vunpack.c.l.b16 %v802
  %v1731 = vunpack.c.l.b16 %v803
  %v1732 = vunpack.c.l.b16 %v804
  %v1733 = vunpack.c.l.b16 %v805
  %v1734 = vunpack.c.l.b16 %v806
  %v1735 = vunpack.c.l.b16 %v807
  %v1736 = vunpack.c.l.b16 %v808
  %v1737 = vunpack.c.l.b16 %v809
  %v1738 = vunpack.c.l.b16 %v810
  %v1739 = vunpack.c.l.b16 %v811
  %v1740 = vunpack.c.l.b16 %v812
  %v1741 = vunpack.c.l.b16 %v813
  %v1742 = vunpack.c.l.b16 %v814
  %v1743 = vunpack.c.l.b16 %v815
  %v1744 = vunpack.c.l.b16 %v816
  %v1745 = vunpack.c.l.b16 %v817
  %v1746 = vunpack.c.l.b16 %v818
  %v1747 = vunpack.c.l.b16 %v819
  %v1748 = vunpack.c.l.b16 %v820
  %v1749 = vunpack.c.l.b16 %v821
  %v1750 = vunpack.c.l.b16 %v822
  %v1751 = vunpack.c.l.b16 %v823
  %v1752 = vpack.c.b16 %v1289, %v1288
  %v1753 = vpack.c.b16 %v1291, %v1290
  %v1754 = vpack.c.b16 %v1293, %v1292
  %v1755 = vpack.c.b16 %v1295, %v1294
  %v1756 = vpack.c.b16 %v1297, %v1296
  %v1757 = vpack.c.b16 %v1299, %v1298
  %v1758 = vpack.c.b16 %v1301, %v1300
  %v1759 = vpack.c.b16 %v1303, %v1302
  %v1760 = vpack.c.b16 %v1305, %v1304
  %v1761 = vpack.c.b16 %v1307, %v1306
  %v1762 = vpack.c.b16 %v1309, %v1308
  %v1763 = vpack.c.b16 %v1311, %v1310
  %v1764 = vpack.c.b16 %v1313, %v1312
  %v1765 = vpack.c.b16 %v1315, %v1314
  %v1766 = vpack.c.b16 %v1317, %v1316
  %v1767 = vpack.c.b16 %v1319, %v1318
  %v1768 = vpack.c.b16 %v1321, %v1320
  %v1769 = vpack.c.b16 %v1323, %v1322
  %v1770 = vpack.c.b16 %v1325, %v1324
  %v1771 = vpack.c.b16 %v1327, %v1326
  %v1772 = vpack.c.b16 %v1329, %v1328
  %v1773 = vpack.c.b16 %v1331, %v1330
  %v1774 = vpack.c.b16 %v1333, %v1332
  %v1775 = vpack.c.b16 %v1335, %v1334
  %v1776 = vpack.c.b16 %v1337, %v1336
  %v1777 = vpack.c.b16 %v1339, %v1338
  %v1778 = vpack.c.b16 %v1341, %v1340
  %v1779 = vpack.c.b16 %v1343, %v1342
  %v1780 = vpack.c.b16 %v1345, %v1344
  %v1781 = vpack.c.b16 %v1347, %v1346
  %v1782 = vpack.c.b16 %v1349, %v1348
  %v1783 = vpack.c.b16 %v1351, %v1350
  %v1784 = vpack.c.b16 %v1353, %v1352
  %v1785 = vpack.c.b16 %v1355, %v1354
  %v1786 = vpack.c.b16 %v1357, %v1356
  %v1787 = vpack.c.b16 %v1359, %v1358
  %v1788 = vpack.c.b16 %v1361, %v1360
  %v1789 = vpack.c.b16 %v1363, %v1362
  %v1790 = vpack.c.b16 %v1365, %v1364
  %v1791 = vpack.c.b16 %v1367, %v1366
  %v1792 = vpack.c.b16 %v1369, %v1368
  %v1793 = vpack.c.b16 %v1371, %v1370
  %v1794 = vpack.c.b16 %v1373, %v1372
  %v1795 = vpack.c.b16 %v1375, %v1374
  %v1796 = vpack.c.b16 %v1377, %v1376
  %v1797 = vpack.c.b16 %v1379, %v1378
  %v1798 = vpack.c.b16 %v1381, %v1380
  %v1799 = vpack.c.b16 %v1383, %v1382
  %v1800 = vpack.c.b16 %v1385, %v1384
  %v1801 = vpack.c.b16 %v1387, %v1386
  %v1802 = vpack.c.b16 %v1389, %v1388
  %v1803 = vpack.c.b16 %v1391, %v1390
  %v1804 = vpack.c.b16 %v1393, %v1392
  %v1805 = vpack.c.b16 %v1395, %v1394
  %v1806 = vpack.c.b16 %v1397, %v1396
  %v1807 = vpack.c.b16 %v1399, %v1398
  %v1808 = vpack.c.b16 %v1401, %v1400
  %v1809 = vpack.c.b16 %v1403, %v1402
  %v1810 = vpack.c.b16 %v1405, %v1404
  %v1811 = vpack.c.b16 %v1407, %v1406
  %v1812 = vpack.c.b16 %v1409, %v1408
  %v1813 = vpack.c.b16 %v1411, %v1410
  %v1814 = vpack.c.b16 %v1413, %v1412
  %v1815 = vpack.c.b16 %v1415, %v1414
  %v1816 = vpack.c.b16 %v1417, %v1416
  %v1817 = vpack.c.b16 %v1419, %v1418
  %v1818 = vpack.c.b16 %v1421, %v1420
  %v1819 = vpack.c.b16 %v1423, %v1422
  %v1820 = vpack.c.b16 %v1425, %v1424
  %v1821 = vpack.c.b16 %v1427, %v1426
  %v1822 = vpack.c.b16 %v1429, %v1428
  %v1823 = vpack.c.b16 %v1431, %v1430
  %v1824 = vpack.c.b16 %v1433, %v1432
  %v1825 = vpack.c.b16 %v1435, %v1434
  %v1826 = vpack.c.b16 %v1437, %v1436
  %v1827 = vpack.c.b16 %v1439, %v1438
  %v1828 = vpack.c.b16 %v1441, %v1440
  %v1829 = vpack.c.b16 %v1443, %v1442
  %v1830 = vpack.c.b16 %v1445, %v1444
  %v1831 = vpack.c.b16 %v1447, %v1446
  %v1832 = vpack.c.b16 %v1449, %v1448
  %v1833 = vpack.c.b16 %v1451, %v1450
  %v1834 = vpack.c.b16 %v1453, %v1452
  %v1835 = vpack.c.b16 %v1455, %v1454
  %v1836 = vpack.c.b16 %v1457, %v1456
  %v1837 = vpack.c.b16 %v1459, %v1458
  %v1838 = vpack.c.b16 %v1461, %v1460
  %v1839 = vpack.c.b16 %v1463, %v1462
  %v1840 = vpack.c.b16 %v1465, %v1464
  %v1841 = vpack.c.b16 %v1467, %v1466
  %v1842 = vpack.c.b16 %v1469, %v1468
  %v1843 = vpack.c.b16 %v1471, %v1470
  %v1844 = vpack.c.b16 %v1473, %v1472
  %v1845 = vpack.c.b16 %v1475, %v1474
  %v1846 = vpack.c.b16 %v1477, %v1476
  %v1847 = vpack.c.b16 %v1479, %v1478
  %v1848 = vpack.c.b16 %v1481, %v1480
  %v1849 = vpack.c.b16 %v1483, %v1482
  %v1850 = vpack.c.b16 %v1485, %v1484
  %v1851 = vpack.c.b16 %v1487, %v1486
  %v1852 = vpack.c.b16 %v1489, %v1488
  %v1853 = vpack.c.b16 %v1491, %v1490
  %v1854 = vpack.c.b16 %v1493, %v1492
  %v1855 = vpack.c.b16 %v1495, %v1494
  %v1856 = vpack.c.b16 %v1497, %v1496
  %v1857 = vpack.c.b16 %v1499, %v1498
  %v1858 = vpack.c.b16 %v1501, %v1500
  %v1859 = vpack.c.b16 %v1503, %v1502
  %v1860 = vpack.c.b16 %v1505, %v1504
  %v1861 = vpack.c.b16 %v1507, %v1506
  %v1862 = vpack.c.b16 %v1509, %v1508
  %v1863 = vpack.c.b16 %v1511, %v1510
  %v1864 = vpack.c.b16 %v1513, %v1512
  %v1865 = vpack.c.b16 %v1515, %v1514
  %v1866 = vpack.c.b16 %v1517, %v1516
  %v1867 = vpack.c.b16 %v1519, %v1518
  %v1868 = vpack.c.b16 %v1521, %v1520
  %v1869 = vpack.c.b16 %v1523, %v1522
  %v1870 = vpack.c.b16 %v1525, %v1524
  %v1871 = vpack.c.b16 %v1527, %v1526
  %v1872 = vpack.c.b16 %v1529, %v1528
  %v1873 = vpack.c.b16 %v1531, %v1530
  %v1874 = vpack.c.b16 %v1533, %v1532
  %v1875 = vpack.c.b16 %v1535, %v1534
  %v1876 = vpack.c.b16 %v1537, %v1536
  %v1877 = vpack.c.b16 %v1539, %v1538
  %v1878 = vpack.c.b16 %v1541, %v1540
  %v1879 = vpack.c.b16 %v1543, %v1542
  %v1880 = vpack.c.b16 %v1545, %v1544
  %v1881 = vpack.c.b16 %v1547, %v1546
  %v1882 = vpack.c.b16 %v1549, %v1548
  %v1883 = vpack.c.b16 %v1551, %v1550
  %v1884 = vpack.c.b16 %v1553, %v1552
  %v1885 = vpack.c.b16 %v1555, %v1554
  %v1886 = vpack.c.b16 %v1557, %v1556
  %v1887 = vpack.c.b16 %v1559, %v1558
  %v1888 = vpack.c.b16 %v1561, %v1560
  %v1889 = vpack.c.b16 %v1563, %v1562
  %v1890 = vpack.c.b16 %v1565, %v1564
  %v1891 = vpack.c.b16 %v1567, %v1566
  %v1892 = vpack.c.b16 %v1569, %v1568
  %v1893 = vpack.c.b16 %v1571, %v1570
  %v1894 = vpack.c.b16 %v1573, %v1572
  %v1895 = vpack.c.b16 %v1575, %v1574
  %v1896 = vpack.c.b16 %v1577, %v1576
  %v1897 = vpack.c.b16 %v1579, %v1578
  %v1898 = vpack.c.b16 %v1581, %v1580
  %v1899 = vpack.c.b16 %v1583, %v1582
  %v1900 = vpack.c.b16 %v1585, %v1584
  %v1901 = vpack.c.b16 %v1587, %v1586
  %v1902 = vpack.c.b16 %v1589, %v1588
  %v1903 = vpack.c.b16 %v1591, %v1590
  %v1904 = vpack.c.b16 %v1593, %v1592
  %v1905 = vpack.c.b16 %v1595, %v1594
  %v1906 = vpack.c.b16 %v1597, %v1596
  %v1907 = vpack.c.b16 %v1599, %v1598
  %v1908 = vpack.c.b16 %v1601, %v1600
  %v1909 = vpack.c.b16 %v1603, %v1602
  %v1910 = vpack.c.b16 %v1605, %v1604
  %v1911 = vpack.c.b16 %v1607, %v1606
  %v1912 = vpack.c.b16 %v1609, %v1608
  %v1913 = vpack.c.b16 %v1611, %v1610
  %v1914 = vpack.c.b16 %v1613, %v1612
  %v1915 = vpack.c.b16 %v1615, %v1614
  %v1916 = vpack.c.b16 %v1617, %v1616
  %v1917 = vpack.c.b16 %v1619, %v1618
  %v1918 = vpack.c.b16 %v1621, %v1620
  %v1919 = vpack.c.b16 %v1623, %v1622
  %v1920 = vpack.c.b16 %v1625, %v1624
  %v1921 = vpack.c.b16 %v1627, %v1626
  %v1922 = vpack.c.b16 %v1629, %v1628
  %v1923 = vpack.c.b16 %v1631, %v1630
  %v1924 = vpack.c.b16 %v1633, %v1632
  %v1925 = vpack.c.b16 %v1635, %v1634
  %v1926 = vpack.c.b16 %v1637, %v1636
  %v1927 = vpack.c.b16 %v1639, %v1638
  %v1928 = vpack.c.b16 %v1641, %v1640
  %v1929 = vpack.c.b16 %v1643, %v1642
  %v1930 = vpack.c.b16 %v1645, %v1644
  %v1931 = vpack.c.b16 %v1647, %v1646
  %v1932 = vpack.c.b16 %v1649, %v1648
  %v1933 = vpack.c.b16 %v1651, %v1650
  %v1934 = vpack.c.b16 %v1653, %v1652
  %v1935 = vpack.c.b16 %v1655, %v1654
  %v1936 = vpack.c.b16 %v1657, %v1656
  %v1937 = vpack.c.b16 %v1659, %v1658
  %v1938 = vpack.c.b16 %v1661, %v1660
  %v1939 = vpack.c.b16 %v1663, %v1662
  %v1940 = vpack.c.b16 %v1665, %v1664
  %v1941 = vpack.c.b16 %v1667, %v1666
  %v1942 = vpack.c.b16 %v1669, %v1668
  %v1943 = vpack.c.b16 %v1671, %v1670
  %v1944 = vpack.c.b16 %v1673, %v1672
  %v1945 = vpack.c.b16 %v1675, %v1674
  %v1946 = vpack.c.b16 %v1677, %v1676
  %v1947 = vpack.c.b16 %v1679, %v1678
  %v1948 = vpack.c.b16 %v1681, %v1680
  %v1949 = vpack.c.b16 %v1683, %v1682
  %v1950 = vpack.c.b16 %v1685, %v1684
  %v1951 = vpack.c.b16 %v1687, %v1686
  %v1952 = vpack.c.b16 %v1689, %v1688
  %v1953 = vpack.c.b16 %v1691, %v1690
  %v1954 = vpack.c.b16 %v1693, %v1692
  %v1955 = vpack.c.b16 %v1695, %v1694
  %v1956 = vpack.c.b16 %v1697, %v1696
  %v1957 = vpack.c.b16 %v1699, %v1698
  %v1958 = vpack.c.b16 %v1701, %v1700
  %v1959 = vpack.c.b16 %v1703, %v1702
  %v1960 = vpack.c.b16 %v1705, %v1704
  %v1961 = vpack.c.b16 %v1707, %v1706
  %v1962 = vpack.c.b16 %v1709, %v1708
  %v1963 = vpack.c.b16 %v1711, %v1710
  %v1964 = vpack.c.b16 %v1713, %v1712
  %v1965 = vpack.c.b16 %v1715, %v1714
  %v1966 = vpack.c.b16 %v1717, %v1716
  %v1967 = vpack.c.b16 %v1719, %v1718
  %v1968 = vpack.c.b16 %v1721, %v1720
  %v1969 = vpack.c.b16 %v1723, %v1722
  %v1970 = vpack.c.b16 %v1725, %v1724
  %v1971 = vpack.c.b16 %v1727, %v1726
  %v1972 = vpack.c.b16 %v1729, %v1728
  %v1973 = vpack.c.b16 %v1731, %v1730
  %v1974 = vpack.c.b16 %v1733, %v1732
  %v1975 = vpack.c.b16 %v1735, %v1734
  %v1976 = vpack.c.b16 %v1737, %v1736
  %v1977 = vpack.c.b16 %v1739, %v1738
  %v1978 = vpack.c.b16 %v1741, %v1740
  %v1979 = vpack.c.b16 %v1743, %v1742
  %v1980 = vpack.c.b16 %v1745, %v1744
  %v1981 = vpack.c.b16 %v1747, %v1746
  %v1982 = vpack.c.b16 %v1749, %v1748
  %v1983 = vpack.c.b16 %v1751, %v1750
  %2216 = vmatprep.subr.bf16.mxu0 0
  %2217 = vmatpush1.bf16.msra.mxu0 %v1759
  %2218 = vmatprep.subr.bf16.mxu0 0
  %2219 = vmatpush1.bf16.msra.mxu0 %v1758
  %2220 = vmatprep.subr.bf16.mxu0 0
  %2221 = vmatpush1.bf16.msra.mxu0 %v1757
  %2222 = vmatprep.subr.bf16.mxu0 0
  %2223 = vmatpush1.bf16.msra.mxu0 %v1756
  %2224 = vmatprep.subr.bf16.mxu0 0
  %2225 = vmatpush1.bf16.msra.mxu0 %v1755
  %2226 = vmatprep.subr.bf16.mxu0 0
  %2227 = vmatpush1.bf16.msra.mxu0 %v1754
  %2228 = vmatprep.subr.bf16.mxu0 0
  %2229 = vmatpush1.bf16.msra.mxu0 %v1753
  %2230 = vmatprep.subr.bf16.mxu0 0
  %2231 = vmatpush1.bf16.msra.mxu0 %v1752
  %2232 = vmatprep.subr.bf16.mxu0 0
  %2233 = vmatpush2.bf16.msra.mxu0 %v1767
  %2234 = vmatprep.subr.bf16.mxu0 0
  %2235 = vmatpush2.bf16.msra.mxu0 %v1766
  %2236 = vmatprep.subr.bf16.mxu0 0
  %2237 = vmatpush2.bf16.msra.mxu0 %v1765
  %2238 = vmatprep.subr.bf16.mxu0 0
  %2239 = vmatpush2.bf16.msra.mxu0 %v1764
  %2240 = vmatprep.subr.bf16.mxu0 0
  %2241 = vmatpush2.bf16.msra.mxu0 %v1763
  %2242 = vmatprep.subr.bf16.mxu0 0
  %2243 = vmatpush2.bf16.msra.mxu0 %v1762
  %2244 = vmatprep.subr.bf16.mxu0 0
  %2245 = vmatpush2.bf16.msra.mxu0 %v1761
  %2246 = vmatprep.subr.bf16.mxu0 0
  %2247 = vmatpush2.bf16.msra.mxu0 %v1760
  %2248 = vmatprep.mubr.bf16.mxu0 %v129
  %2249 = vmatmul.mubr.bf16.gmra.mxu0 %v128
  %v2250 = vpop.f32.mrf.mxu0
  %v2251 = vadd.f32 0.0, %v2250
  %v2252 = vpop.f32.mrf.mxu0
  %v2253 = vpop.f32.mrf.mxu0
  %v2254 = vadd.f32 0.0, %v2253
  %v2255 = vpop.f32.mrf.mxu0
  %2256 = vmatprep.mubr.bf16.mxu0 %v158
  %2257 = vmatmul.mubr.bf16.gmra.mxu0 %v157
  %v2258 = vpop.f32.mrf.mxu0
  %v2259 = vadd.f32 0.0, %v2258
  %v2260 = vpop.f32.mrf.mxu0
  %v2261 = vpop.f32.mrf.mxu0
  %v2262 = vadd.f32 0.0, %v2261
  %v2263 = vpop.f32.mrf.mxu0
  %2264 = vmatprep.mubr.bf16.mxu0 %v187
  %2265 = vmatmul.mubr.bf16.gmra.mxu0 %v186
  %v2266 = vpop.f32.mrf.mxu0
  %v2267 = vadd.f32 0.0, %v2266
  %v2268 = vpop.f32.mrf.mxu0
  %v2269 = vpop.f32.mrf.mxu0
  %v2270 = vadd.f32 0.0, %v2269
  %v2271 = vpop.f32.mrf.mxu0
  %2272 = vmatprep.mubr.bf16.mxu0 %v216
  %2273 = vmatmul.mubr.bf16.gmra.mxu0 %v215
  %v2274 = vpop.f32.mrf.mxu0
  %v2275 = vadd.f32 0.0, %v2274
  %v2276 = vpop.f32.mrf.mxu0
  %v2277 = vpop.f32.mrf.mxu0
  %v2278 = vadd.f32 0.0, %v2277
  %v2279 = vpop.f32.mrf.mxu0
  %2280 = vmatprep.mubr.bf16.mxu0 %v245
  %2281 = vmatmul.mubr.bf16.gmra.mxu0 %v244
  %v2282 = vpop.f32.mrf.mxu0
  %v2283 = vadd.f32 0.0, %v2282
  %v2284 = vpop.f32.mrf.mxu0
  %v2285 = vpop.f32.mrf.mxu0
  %v2286 = vadd.f32 0.0, %v2285
  %v2287 = vpop.f32.mrf.mxu0
  %2288 = vmatprep.mubr.bf16.mxu0 %v274
  %2289 = vmatmul.mubr.bf16.gmra.mxu0 %v273
  %v2290 = vpop.f32.mrf.mxu0
  %v2291 = vadd.f32 0.0, %v2290
  %v2292 = vpop.f32.mrf.mxu0
  %v2293 = vpop.f32.mrf.mxu0
  %v2294 = vadd.f32 0.0, %v2293
  %v2295 = vpop.f32.mrf.mxu0
  %2296 = vmatprep.mubr.bf16.mxu0 %v303
  %2297 = vmatmul.mubr.bf16.gmra.mxu0 %v302
  %v2298 = vpop.f32.mrf.mxu0
  %v2299 = vadd.f32 0.0, %v2298
  %v2300 = vpop.f32.mrf.mxu0
  %v2301 = vpop.f32.mrf.mxu0
  %v2302 = vadd.f32 0.0, %v2301
  %v2303 = vpop.f32.mrf.mxu0
  %2304 = vmatprep.mubr.bf16.mxu0 %v332
  %2305 = vmatmul.mubr.bf16.gmra.mxu0 %v331
  %v2306 = vpop.f32.mrf.mxu0
  %v2307 = vadd.f32 0.0, %v2306
  %v2308 = vpop.f32.mrf.mxu0
  %v2309 = vpop.f32.mrf.mxu0
  %v2310 = vadd.f32 0.0, %v2309
  %v2311 = vpop.f32.mrf.mxu0
  %2312 = vdwg.mxu0
  %2313 = vmatprep.subr.bf16.mxu0 0
  %2314 = vmatpush1.bf16.msra.mxu0 %v1775
  %2315 = vmatprep.subr.bf16.mxu0 0
  %2316 = vmatpush1.bf16.msra.mxu0 %v1774
  %2317 = vmatprep.subr.bf16.mxu0 0
  %2318 = vmatpush1.bf16.msra.mxu0 %v1773
  %2319 = vmatprep.subr.bf16.mxu0 0
  %2320 = vmatpush1.bf16.msra.mxu0 %v1772
  %2321 = vmatprep.subr.bf16.mxu0 0
  %2322 = vmatpush1.bf16.msra.mxu0 %v1771
  %2323 = vmatprep.subr.bf16.mxu0 0
  %2324 = vmatpush1.bf16.msra.mxu0 %v1770
  %2325 = vmatprep.subr.bf16.mxu0 0
  %2326 = vmatpush1.bf16.msra.mxu0 %v1769
  %2327 = vmatprep.subr.bf16.mxu0 0
  %2328 = vmatpush1.bf16.msra.mxu0 %v1768
  %2329 = vmatprep.subr.bf16.mxu0 0
  %2330 = vmatpush2.bf16.msra.mxu0 %v1783
  %2331 = vmatprep.subr.bf16.mxu0 0
  %2332 = vmatpush2.bf16.msra.mxu0 %v1782
  %2333 = vmatprep.subr.bf16.mxu0 0
  %2334 = vmatpush2.bf16.msra.mxu0 %v1781
  %2335 = vmatprep.subr.bf16.mxu0 0
  %2336 = vmatpush2.bf16.msra.mxu0 %v1780
  %2337 = vmatprep.subr.bf16.mxu0 0
  %2338 = vmatpush2.bf16.msra.mxu0 %v1779
  %2339 = vmatprep.subr.bf16.mxu0 0
  %2340 = vmatpush2.bf16.msra.mxu0 %v1778
  %2341 = vmatprep.subr.bf16.mxu0 0
  %2342 = vmatpush2.bf16.msra.mxu0 %v1777
  %2343 = vmatprep.subr.bf16.mxu0 0
  %2344 = vmatpush2.bf16.msra.mxu0 %v1776
  %2345 = vmatprep.mubr.bf16.mxu0 %v131
  %2346 = vmatmul.mubr.bf16.gmra.mxu0 %v130
  %v2347 = vpop.f32.mrf.mxu0
  %v2348 = vadd.f32 %v2251, %v2347
  %v2349 = vpop.f32.mrf.mxu0
  %v2350 = vpop.f32.mrf.mxu0
  %v2351 = vadd.f32 %v2254, %v2350
  %v2352 = vpop.f32.mrf.mxu0
  %2353 = vmatprep.mubr.bf16.mxu0 %v160
  %2354 = vmatmul.mubr.bf16.gmra.mxu0 %v159
  %v2355 = vpop.f32.mrf.mxu0
  %v2356 = vadd.f32 %v2259, %v2355
  %v2357 = vpop.f32.mrf.mxu0
  %v2358 = vpop.f32.mrf.mxu0
  %v2359 = vadd.f32 %v2262, %v2358
  %v2360 = vpop.f32.mrf.mxu0
  %2361 = vmatprep.mubr.bf16.mxu0 %v189
  %2362 = vmatmul.mubr.bf16.gmra.mxu0 %v188
  %v2363 = vpop.f32.mrf.mxu0
  %v2364 = vadd.f32 %v2267, %v2363
  %v2365 = vpop.f32.mrf.mxu0
  %v2366 = vpop.f32.mrf.mxu0
  %v2367 = vadd.f32 %v2270, %v2366
  %v2368 = vpop.f32.mrf.mxu0
  %2369 = vmatprep.mubr.bf16.mxu0 %v218
  %2370 = vmatmul.mubr.bf16.gmra.mxu0 %v217
  %v2371 = vpop.f32.mrf.mxu0
  %v2372 = vadd.f32 %v2275, %v2371
  %v2373 = vpop.f32.mrf.mxu0
  %v2374 = vpop.f32.mrf.mxu0
  %v2375 = vadd.f32 %v2278, %v2374
  %v2376 = vpop.f32.mrf.mxu0
  %2377 = vmatprep.mubr.bf16.mxu0 %v247
  %2378 = vmatmul.mubr.bf16.gmra.mxu0 %v246
  %v2379 = vpop.f32.mrf.mxu0
  %v2380 = vadd.f32 %v2283, %v2379
  %v2381 = vpop.f32.mrf.mxu0
  %v2382 = vpop.f32.mrf.mxu0
  %v2383 = vadd.f32 %v2286, %v2382
  %v2384 = vpop.f32.mrf.mxu0
  %2385 = vmatprep.mubr.bf16.mxu0 %v276
  %2386 = vmatmul.mubr.bf16.gmra.mxu0 %v275
  %v2387 = vpop.f32.mrf.mxu0
  %v2388 = vadd.f32 %v2291, %v2387
  %v2389 = vpop.f32.mrf.mxu0
  %v2390 = vpop.f32.mrf.mxu0
  %v2391 = vadd.f32 %v2294, %v2390
  %v2392 = vpop.f32.mrf.mxu0
  %2393 = vmatprep.mubr.bf16.mxu0 %v305
  %2394 = vmatmul.mubr.bf16.gmra.mxu0 %v304
  %v2395 = vpop.f32.mrf.mxu0
  %v2396 = vadd.f32 %v2299, %v2395
  %v2397 = vpop.f32.mrf.mxu0
  %v2398 = vpop.f32.mrf.mxu0
  %v2399 = vadd.f32 %v2302, %v2398
  %v2400 = vpop.f32.mrf.mxu0
  %2401 = vmatprep.mubr.bf16.mxu0 %v334
  %2402 = vmatmul.mubr.bf16.gmra.mxu0 %v333
  %v2403 = vpop.f32.mrf.mxu0
  %v2404 = vadd.f32 %v2307, %v2403
  %v2405 = vpop.f32.mrf.mxu0
  %v2406 = vpop.f32.mrf.mxu0
  %v2407 = vadd.f32 %v2310, %v2406
  %v2408 = vpop.f32.mrf.mxu0
  %2409 = vdwg.mxu0
  %2410 = vmatprep.subr.bf16.mxu0 0
  %2411 = vmatpush1.bf16.msra.mxu0 %v1791
  %2412 = vmatprep.subr.bf16.mxu0 0
  %2413 = vmatpush1.bf16.msra.mxu0 %v1790
  %2414 = vmatprep.subr.bf16.mxu0 0
  %2415 = vmatpush1.bf16.msra.mxu0 %v1789
  %2416 = vmatprep.subr.bf16.mxu0 0
  %2417 = vmatpush1.bf16.msra.mxu0 %v1788
  %2418 = vmatprep.subr.bf16.mxu0 0
  %2419 = vmatpush1.bf16.msra.mxu0 %v1787
  %2420 = vmatprep.subr.bf16.mxu0 0
  %2421 = vmatpush1.bf16.msra.mxu0 %v1786
  %2422 = vmatprep.subr.bf16.mxu0 0
  %2423 = vmatpush1.bf16.msra.mxu0 %v1785
  %2424 = vmatprep.subr.bf16.mxu0 0
  %2425 = vmatpush1.bf16.msra.mxu0 %v1784
  %2426 = vmatprep.subr.bf16.mxu0 0
  %2427 = vmatpush2.bf16.msra.mxu0 %v1799
  %2428 = vmatprep.subr.bf16.mxu0 0
  %2429 = vmatpush2.bf16.msra.mxu0 %v1798
  %2430 = vmatprep.subr.bf16.mxu0 0
  %2431 = vmatpush2.bf16.msra.mxu0 %v1797
  %2432 = vmatprep.subr.bf16.mxu0 0
  %2433 = vmatpush2.bf16.msra.mxu0 %v1796
  %2434 = vmatprep.subr.bf16.mxu0 0
  %2435 = vmatpush2.bf16.msra.mxu0 %v1795
  %2436 = vmatprep.subr.bf16.mxu0 0
  %2437 = vmatpush2.bf16.msra.mxu0 %v1794
  %2438 = vmatprep.subr.bf16.mxu0 0
  %2439 = vmatpush2.bf16.msra.mxu0 %v1793
  %2440 = vmatprep.subr.bf16.mxu0 0
  %2441 = vmatpush2.bf16.msra.mxu0 %v1792
  %2442 = vmatprep.mubr.bf16.mxu0 %v133
  %2443 = vmatmul.mubr.bf16.gmra.mxu0 %v132
  %v2444 = vpop.f32.mrf.mxu0
  %v2445 = vadd.f32 %v2348, %v2444
  %v2446 = vpop.f32.mrf.mxu0
  %v2447 = vpop.f32.mrf.mxu0
  %v2448 = vadd.f32 %v2351, %v2447
  %v2449 = vpop.f32.mrf.mxu0
  %2450 = vmatprep.mubr.bf16.mxu0 %v162
  %2451 = vmatmul.mubr.bf16.gmra.mxu0 %v161
  %v2452 = vpop.f32.mrf.mxu0
  %v2453 = vadd.f32 %v2356, %v2452
  %v2454 = vpop.f32.mrf.mxu0
  %v2455 = vpop.f32.mrf.mxu0
  %v2456 = vadd.f32 %v2359, %v2455
  %v2457 = vpop.f32.mrf.mxu0
  %2458 = vmatprep.mubr.bf16.mxu0 %v191
  %2459 = vmatmul.mubr.bf16.gmra.mxu0 %v190
  %v2460 = vpop.f32.mrf.mxu0
  %v2461 = vadd.f32 %v2364, %v2460
  %v2462 = vpop.f32.mrf.mxu0
  %v2463 = vpop.f32.mrf.mxu0
  %v2464 = vadd.f32 %v2367, %v2463
  %v2465 = vpop.f32.mrf.mxu0
  %2466 = vmatprep.mubr.bf16.mxu0 %v220
  %2467 = vmatmul.mubr.bf16.gmra.mxu0 %v219
  %v2468 = vpop.f32.mrf.mxu0
  %v2469 = vadd.f32 %v2372, %v2468
  %v2470 = vpop.f32.mrf.mxu0
  %v2471 = vpop.f32.mrf.mxu0
  %v2472 = vadd.f32 %v2375, %v2471
  %v2473 = vpop.f32.mrf.mxu0
  %2474 = vmatprep.mubr.bf16.mxu0 %v249
  %2475 = vmatmul.mubr.bf16.gmra.mxu0 %v248
  %v2476 = vpop.f32.mrf.mxu0
  %v2477 = vadd.f32 %v2380, %v2476
  %v2478 = vpop.f32.mrf.mxu0
  %v2479 = vpop.f32.mrf.mxu0
  %v2480 = vadd.f32 %v2383, %v2479
  %v2481 = vpop.f32.mrf.mxu0
  %2482 = vmatprep.mubr.bf16.mxu0 %v278
  %2483 = vmatmul.mubr.bf16.gmra.mxu0 %v277
  %v2484 = vpop.f32.mrf.mxu0
  %v2485 = vadd.f32 %v2388, %v2484
  %v2486 = vpop.f32.mrf.mxu0
  %v2487 = vpop.f32.mrf.mxu0
  %v2488 = vadd.f32 %v2391, %v2487
  %v2489 = vpop.f32.mrf.mxu0
  %2490 = vmatprep.mubr.bf16.mxu0 %v307
  %2491 = vmatmul.mubr.bf16.gmra.mxu0 %v306
  %v2492 = vpop.f32.mrf.mxu0
  %v2493 = vadd.f32 %v2396, %v2492
  %v2494 = vpop.f32.mrf.mxu0
  %v2495 = vpop.f32.mrf.mxu0
  %v2496 = vadd.f32 %v2399, %v2495
  %v2497 = vpop.f32.mrf.mxu0
  %2498 = vmatprep.mubr.bf16.mxu0 %v336
  %2499 = vmatmul.mubr.bf16.gmra.mxu0 %v335
  %v2500 = vpop.f32.mrf.mxu0
  %v2501 = vadd.f32 %v2404, %v2500
  %v2502 = vpop.f32.mrf.mxu0
  %v2503 = vpop.f32.mrf.mxu0
  %v2504 = vadd.f32 %v2407, %v2503
  %v2505 = vpop.f32.mrf.mxu0
  %2506 = vdwg.mxu0
  %2507 = vmatprep.subr.bf16.mxu0 0
  %2508 = vmatpush1.bf16.msra.mxu0 %v1807
  %2509 = vmatprep.subr.bf16.mxu0 0
  %2510 = vmatpush1.bf16.msra.mxu0 %v1806
  %2511 = vmatprep.subr.bf16.mxu0 0
  %2512 = vmatpush1.bf16.msra.mxu0 %v1805
  %2513 = vmatprep.subr.bf16.mxu0 0
  %2514 = vmatpush1.bf16.msra.mxu0 %v1804
  %2515 = vmatprep.subr.bf16.mxu0 0
  %2516 = vmatpush1.bf16.msra.mxu0 %v1803
  %2517 = vmatprep.subr.bf16.mxu0 0
  %2518 = vmatpush1.bf16.msra.mxu0 %v1802
  %2519 = vmatprep.subr.bf16.mxu0 0
  %2520 = vmatpush1.bf16.msra.mxu0 %v1801
  %2521 = vmatprep.subr.bf16.mxu0 0
  %2522 = vmatpush1.bf16.msra.mxu0 %v1800
  %2523 = vmatprep.subr.bf16.mxu0 0
  %2524 = vmatpush2.bf16.msra.mxu0 %v1815
  %2525 = vmatprep.subr.bf16.mxu0 0
  %2526 = vmatpush2.bf16.msra.mxu0 %v1814
  %2527 = vmatprep.subr.bf16.mxu0 0
  %2528 = vmatpush2.bf16.msra.mxu0 %v1813
  %2529 = vmatprep.subr.bf16.mxu0 0
  %2530 = vmatpush2.bf16.msra.mxu0 %v1812
  %2531 = vmatprep.subr.bf16.mxu0 0
  %2532 = vmatpush2.bf16.msra.mxu0 %v1811
  %2533 = vmatprep.subr.bf16.mxu0 0
  %2534 = vmatpush2.bf16.msra.mxu0 %v1810
  %2535 = vmatprep.subr.bf16.mxu0 0
  %2536 = vmatpush2.bf16.msra.mxu0 %v1809
  %2537 = vmatprep.subr.bf16.mxu0 0
  %2538 = vmatpush2.bf16.msra.mxu0 %v1808
  %2539 = vmatprep.mubr.bf16.mxu0 %v135
  %2540 = vmatmul.mubr.bf16.gmra.mxu0 %v134
  %v2541 = vpop.f32.mrf.mxu0
  %v2542 = vadd.f32 %v2445, %v2541
  %v2543 = vpop.f32.mrf.mxu0
  %v2544 = vpop.f32.mrf.mxu0
  %v2545 = vadd.f32 %v2448, %v2544
  %v2546 = vpop.f32.mrf.mxu0
  %2547 = vmatprep.mubr.bf16.mxu0 %v164
  %2548 = vmatmul.mubr.bf16.gmra.mxu0 %v163
  %v2549 = vpop.f32.mrf.mxu0
  %v2550 = vadd.f32 %v2453, %v2549
  %v2551 = vpop.f32.mrf.mxu0
  %v2552 = vpop.f32.mrf.mxu0
  %v2553 = vadd.f32 %v2456, %v2552
  %v2554 = vpop.f32.mrf.mxu0
  %2555 = vmatprep.mubr.bf16.mxu0 %v193
  %2556 = vmatmul.mubr.bf16.gmra.mxu0 %v192
  %v2557 = vpop.f32.mrf.mxu0
  %v2558 = vadd.f32 %v2461, %v2557
  %v2559 = vpop.f32.mrf.mxu0
  %v2560 = vpop.f32.mrf.mxu0
  %v2561 = vadd.f32 %v2464, %v2560
  %v2562 = vpop.f32.mrf.mxu0
  %2563 = vmatprep.mubr.bf16.mxu0 %v222
  %2564 = vmatmul.mubr.bf16.gmra.mxu0 %v221
  %v2565 = vpop.f32.mrf.mxu0
  %v2566 = vadd.f32 %v2469, %v2565
  %v2567 = vpop.f32.mrf.mxu0
  %v2568 = vpop.f32.mrf.mxu0
  %v2569 = vadd.f32 %v2472, %v2568
  %v2570 = vpop.f32.mrf.mxu0
  %2571 = vmatprep.mubr.bf16.mxu0 %v251
  %2572 = vmatmul.mubr.bf16.gmra.mxu0 %v250
  %v2573 = vpop.f32.mrf.mxu0
  %v2574 = vadd.f32 %v2477, %v2573
  %v2575 = vpop.f32.mrf.mxu0
  %v2576 = vpop.f32.mrf.mxu0
  %v2577 = vadd.f32 %v2480, %v2576
  %v2578 = vpop.f32.mrf.mxu0
  %2579 = vmatprep.mubr.bf16.mxu0 %v280
  %2580 = vmatmul.mubr.bf16.gmra.mxu0 %v279
  %v2581 = vpop.f32.mrf.mxu0
  %v2582 = vadd.f32 %v2485, %v2581
  %v2583 = vpop.f32.mrf.mxu0
  %v2584 = vpop.f32.mrf.mxu0
  %v2585 = vadd.f32 %v2488, %v2584
  %v2586 = vpop.f32.mrf.mxu0
  %2587 = vmatprep.mubr.bf16.mxu0 %v309
  %2588 = vmatmul.mubr.bf16.gmra.mxu0 %v308
  %v2589 = vpop.f32.mrf.mxu0
  %v2590 = vadd.f32 %v2493, %v2589
  %v2591 = vpop.f32.mrf.mxu0
  %v2592 = vpop.f32.mrf.mxu0
  %v2593 = vadd.f32 %v2496, %v2592
  %v2594 = vpop.f32.mrf.mxu0
  %2595 = vmatprep.mubr.bf16.mxu0 %v338
  %2596 = vmatmul.mubr.bf16.gmra.mxu0 %v337
  %v2597 = vpop.f32.mrf.mxu0
  %v2598 = vadd.f32 %v2501, %v2597
  %v2599 = vpop.f32.mrf.mxu0
  %v2600 = vpop.f32.mrf.mxu0
  %v2601 = vadd.f32 %v2504, %v2600
  %v2602 = vpop.f32.mrf.mxu0
  %2603 = vdwg.mxu0
  %2604 = vmatprep.subr.bf16.mxu0 0
  %2605 = vmatpush1.bf16.msra.mxu0 %v1823
  %2606 = vmatprep.subr.bf16.mxu0 0
  %2607 = vmatpush1.bf16.msra.mxu0 %v1822
  %2608 = vmatprep.subr.bf16.mxu0 0
  %2609 = vmatpush1.bf16.msra.mxu0 %v1821
  %2610 = vmatprep.subr.bf16.mxu0 0
  %2611 = vmatpush1.bf16.msra.mxu0 %v1820
  %2612 = vmatprep.subr.bf16.mxu0 0
  %2613 = vmatpush1.bf16.msra.mxu0 %v1819
  %2614 = vmatprep.subr.bf16.mxu0 0
  %2615 = vmatpush1.bf16.msra.mxu0 %v1818
  %2616 = vmatprep.subr.bf16.mxu0 0
  %2617 = vmatpush1.bf16.msra.mxu0 %v1817
  %2618 = vmatprep.subr.bf16.mxu0 0
  %2619 = vmatpush1.bf16.msra.mxu0 %v1816
  %2620 = vmatprep.subr.bf16.mxu0 0
  %2621 = vmatpush2.bf16.msra.mxu0 %v1831
  %2622 = vmatprep.subr.bf16.mxu0 0
  %2623 = vmatpush2.bf16.msra.mxu0 %v1830
  %2624 = vmatprep.subr.bf16.mxu0 0
  %2625 = vmatpush2.bf16.msra.mxu0 %v1829
  %2626 = vmatprep.subr.bf16.mxu0 0
  %2627 = vmatpush2.bf16.msra.mxu0 %v1828
  %2628 = vmatprep.subr.bf16.mxu0 0
  %2629 = vmatpush2.bf16.msra.mxu0 %v1827
  %2630 = vmatprep.subr.bf16.mxu0 0
  %2631 = vmatpush2.bf16.msra.mxu0 %v1826
  %2632 = vmatprep.subr.bf16.mxu0 0
  %2633 = vmatpush2.bf16.msra.mxu0 %v1825
  %2634 = vmatprep.subr.bf16.mxu0 0
  %2635 = vmatpush2.bf16.msra.mxu0 %v1824
  %2636 = vmatprep.mubr.bf16.mxu0 %v137
  %2637 = vmatmul.mubr.bf16.gmra.mxu0 %v136
  %v2638 = vpop.f32.mrf.mxu0
  %v2639 = vadd.f32 %v2542, %v2638
  %v2640 = vpop.f32.mrf.mxu0
  %v2641 = vpop.f32.mrf.mxu0
  %v2642 = vadd.f32 %v2545, %v2641
  %v2643 = vpop.f32.mrf.mxu0
  %2644 = vmatprep.mubr.bf16.mxu0 %v166
  %2645 = vmatmul.mubr.bf16.gmra.mxu0 %v165
  %v2646 = vpop.f32.mrf.mxu0
  %v2647 = vadd.f32 %v2550, %v2646
  %v2648 = vpop.f32.mrf.mxu0
  %v2649 = vpop.f32.mrf.mxu0
  %v2650 = vadd.f32 %v2553, %v2649
  %v2651 = vpop.f32.mrf.mxu0
  %2652 = vmatprep.mubr.bf16.mxu0 %v195
  %2653 = vmatmul.mubr.bf16.gmra.mxu0 %v194
  %v2654 = vpop.f32.mrf.mxu0
  %v2655 = vadd.f32 %v2558, %v2654
  %v2656 = vpop.f32.mrf.mxu0
  %v2657 = vpop.f32.mrf.mxu0
  %v2658 = vadd.f32 %v2561, %v2657
  %v2659 = vpop.f32.mrf.mxu0
  %2660 = vmatprep.mubr.bf16.mxu0 %v224
  %2661 = vmatmul.mubr.bf16.gmra.mxu0 %v223
  %v2662 = vpop.f32.mrf.mxu0
  %v2663 = vadd.f32 %v2566, %v2662
  %v2664 = vpop.f32.mrf.mxu0
  %v2665 = vpop.f32.mrf.mxu0
  %v2666 = vadd.f32 %v2569, %v2665
  %v2667 = vpop.f32.mrf.mxu0
  %2668 = vmatprep.mubr.bf16.mxu0 %v253
  %2669 = vmatmul.mubr.bf16.gmra.mxu0 %v252
  %v2670 = vpop.f32.mrf.mxu0
  %v2671 = vadd.f32 %v2574, %v2670
  %v2672 = vpop.f32.mrf.mxu0
  %v2673 = vpop.f32.mrf.mxu0
  %v2674 = vadd.f32 %v2577, %v2673
  %v2675 = vpop.f32.mrf.mxu0
  %2676 = vmatprep.mubr.bf16.mxu0 %v282
  %2677 = vmatmul.mubr.bf16.gmra.mxu0 %v281
  %v2678 = vpop.f32.mrf.mxu0
  %v2679 = vadd.f32 %v2582, %v2678
  %v2680 = vpop.f32.mrf.mxu0
  %v2681 = vpop.f32.mrf.mxu0
  %v2682 = vadd.f32 %v2585, %v2681
  %v2683 = vpop.f32.mrf.mxu0
  %2684 = vmatprep.mubr.bf16.mxu0 %v311
  %2685 = vmatmul.mubr.bf16.gmra.mxu0 %v310
  %v2686 = vpop.f32.mrf.mxu0
  %v2687 = vadd.f32 %v2590, %v2686
  %v2688 = vpop.f32.mrf.mxu0
  %v2689 = vpop.f32.mrf.mxu0
  %v2690 = vadd.f32 %v2593, %v2689
  %v2691 = vpop.f32.mrf.mxu0
  %2692 = vmatprep.mubr.bf16.mxu0 %v340
  %2693 = vmatmul.mubr.bf16.gmra.mxu0 %v339
  %v2694 = vpop.f32.mrf.mxu0
  %v2695 = vadd.f32 %v2598, %v2694
  %v2696 = vpop.f32.mrf.mxu0
  %v2697 = vpop.f32.mrf.mxu0
  %v2698 = vadd.f32 %v2601, %v2697
  %v2699 = vpop.f32.mrf.mxu0
  %2700 = vdwg.mxu0
  %2701 = vmatprep.subr.bf16.mxu0 0
  %2702 = vmatpush1.bf16.msra.mxu0 %v1839
  %2703 = vmatprep.subr.bf16.mxu0 0
  %2704 = vmatpush1.bf16.msra.mxu0 %v1838
  %2705 = vmatprep.subr.bf16.mxu0 0
  %2706 = vmatpush1.bf16.msra.mxu0 %v1837
  %2707 = vmatprep.subr.bf16.mxu0 0
  %2708 = vmatpush1.bf16.msra.mxu0 %v1836
  %2709 = vmatprep.subr.bf16.mxu0 0
  %2710 = vmatpush1.bf16.msra.mxu0 %v1835
  %2711 = vmatprep.subr.bf16.mxu0 0
  %2712 = vmatpush1.bf16.msra.mxu0 %v1834
  %2713 = vmatprep.subr.bf16.mxu0 0
  %2714 = vmatpush1.bf16.msra.mxu0 %v1833
  %2715 = vmatprep.subr.bf16.mxu0 0
  %2716 = vmatpush1.bf16.msra.mxu0 %v1832
  %2717 = vmatprep.subr.bf16.mxu0 0
  %2718 = vmatpush2.bf16.msra.mxu0 %v1847
  %2719 = vmatprep.subr.bf16.mxu0 0
  %2720 = vmatpush2.bf16.msra.mxu0 %v1846
  %2721 = vmatprep.subr.bf16.mxu0 0
  %2722 = vmatpush2.bf16.msra.mxu0 %v1845
  %2723 = vmatprep.subr.bf16.mxu0 0
  %2724 = vmatpush2.bf16.msra.mxu0 %v1844
  %2725 = vmatprep.subr.bf16.mxu0 0
  %2726 = vmatpush2.bf16.msra.mxu0 %v1843
  %2727 = vmatprep.subr.bf16.mxu0 0
  %2728 = vmatpush2.bf16.msra.mxu0 %v1842
  %2729 = vmatprep.subr.bf16.mxu0 0
  %2730 = vmatpush2.bf16.msra.mxu0 %v1841
  %2731 = vmatprep.subr.bf16.mxu0 0
  %2732 = vmatpush2.bf16.msra.mxu0 %v1840
  %2733 = vmatprep.mubr.bf16.mxu0 %v139
  %2734 = vmatmul.mubr.bf16.gmra.mxu0 %v138
  %v2735 = vpop.f32.mrf.mxu0
  %v2736 = vadd.f32 %v2639, %v2735
  %v2737 = vpop.f32.mrf.mxu0
  %v2738 = vpop.f32.mrf.mxu0
  %v2739 = vadd.f32 %v2642, %v2738
  %v2740 = vpop.f32.mrf.mxu0
  %2741 = vmatprep.mubr.bf16.mxu0 %v168
  %2742 = vmatmul.mubr.bf16.gmra.mxu0 %v167
  %v2743 = vpop.f32.mrf.mxu0
  %v2744 = vadd.f32 %v2647, %v2743
  %v2745 = vpop.f32.mrf.mxu0
  %v2746 = vpop.f32.mrf.mxu0
  %v2747 = vadd.f32 %v2650, %v2746
  %v2748 = vpop.f32.mrf.mxu0
  %2749 = vmatprep.mubr.bf16.mxu0 %v197
  %2750 = vmatmul.mubr.bf16.gmra.mxu0 %v196
  %v2751 = vpop.f32.mrf.mxu0
  %v2752 = vadd.f32 %v2655, %v2751
  %v2753 = vpop.f32.mrf.mxu0
  %v2754 = vpop.f32.mrf.mxu0
  %v2755 = vadd.f32 %v2658, %v2754
  %v2756 = vpop.f32.mrf.mxu0
  %2757 = vmatprep.mubr.bf16.mxu0 %v226
  %2758 = vmatmul.mubr.bf16.gmra.mxu0 %v225
  %v2759 = vpop.f32.mrf.mxu0
  %v2760 = vadd.f32 %v2663, %v2759
  %v2761 = vpop.f32.mrf.mxu0
  %v2762 = vpop.f32.mrf.mxu0
  %v2763 = vadd.f32 %v2666, %v2762
  %v2764 = vpop.f32.mrf.mxu0
  %2765 = vmatprep.mubr.bf16.mxu0 %v255
  %2766 = vmatmul.mubr.bf16.gmra.mxu0 %v254
  %v2767 = vpop.f32.mrf.mxu0
  %v2768 = vadd.f32 %v2671, %v2767
  %v2769 = vpop.f32.mrf.mxu0
  %v2770 = vpop.f32.mrf.mxu0
  %v2771 = vadd.f32 %v2674, %v2770
  %v2772 = vpop.f32.mrf.mxu0
  %2773 = vmatprep.mubr.bf16.mxu0 %v284
  %2774 = vmatmul.mubr.bf16.gmra.mxu0 %v283
  %v2775 = vpop.f32.mrf.mxu0
  %v2776 = vadd.f32 %v2679, %v2775
  %v2777 = vpop.f32.mrf.mxu0
  %v2778 = vpop.f32.mrf.mxu0
  %v2779 = vadd.f32 %v2682, %v2778
  %v2780 = vpop.f32.mrf.mxu0
  %2781 = vmatprep.mubr.bf16.mxu0 %v313
  %2782 = vmatmul.mubr.bf16.gmra.mxu0 %v312
  %v2783 = vpop.f32.mrf.mxu0
  %v2784 = vadd.f32 %v2687, %v2783
  %v2785 = vpop.f32.mrf.mxu0
  %v2786 = vpop.f32.mrf.mxu0
  %v2787 = vadd.f32 %v2690, %v2786
  %v2788 = vpop.f32.mrf.mxu0
  %2789 = vmatprep.mubr.bf16.mxu0 %v342
  %2790 = vmatmul.mubr.bf16.gmra.mxu0 %v341
  %v2791 = vpop.f32.mrf.mxu0
  %v2792 = vadd.f32 %v2695, %v2791
  %v2793 = vpop.f32.mrf.mxu0
  %v2794 = vpop.f32.mrf.mxu0
  %v2795 = vadd.f32 %v2698, %v2794
  %v2796 = vpop.f32.mrf.mxu0
  %2797 = vdwg.mxu0
  %2798 = vmatprep.subr.bf16.mxu0 0
  %2799 = vmatpush1.bf16.msra.mxu0 %v1855
  %2800 = vmatprep.subr.bf16.mxu0 0
  %2801 = vmatpush1.bf16.msra.mxu0 %v1854
  %2802 = vmatprep.subr.bf16.mxu0 0
  %2803 = vmatpush1.bf16.msra.mxu0 %v1853
  %2804 = vmatprep.subr.bf16.mxu0 0
  %2805 = vmatpush1.bf16.msra.mxu0 %v1852
  %2806 = vmatprep.subr.bf16.mxu0 0
  %2807 = vmatpush1.bf16.msra.mxu0 %v1851
  %2808 = vmatprep.subr.bf16.mxu0 0
  %2809 = vmatpush1.bf16.msra.mxu0 %v1850
  %2810 = vmatprep.subr.bf16.mxu0 0
  %2811 = vmatpush1.bf16.msra.mxu0 %v1849
  %2812 = vmatprep.subr.bf16.mxu0 0
  %2813 = vmatpush1.bf16.msra.mxu0 %v1848
  %2814 = vmatprep.subr.bf16.mxu0 0
  %2815 = vmatpush2.bf16.msra.mxu0 %v1863
  %2816 = vmatprep.subr.bf16.mxu0 0
  %2817 = vmatpush2.bf16.msra.mxu0 %v1862
  %2818 = vmatprep.subr.bf16.mxu0 0
  %2819 = vmatpush2.bf16.msra.mxu0 %v1861
  %2820 = vmatprep.subr.bf16.mxu0 0
  %2821 = vmatpush2.bf16.msra.mxu0 %v1860
  %2822 = vmatprep.subr.bf16.mxu0 0
  %2823 = vmatpush2.bf16.msra.mxu0 %v1859
  %2824 = vmatprep.subr.bf16.mxu0 0
  %2825 = vmatpush2.bf16.msra.mxu0 %v1858
  %2826 = vmatprep.subr.bf16.mxu0 0
  %2827 = vmatpush2.bf16.msra.mxu0 %v1857
  %2828 = vmatprep.subr.bf16.mxu0 0
  %2829 = vmatpush2.bf16.msra.mxu0 %v1856
  %2830 = vmatprep.mubr.bf16.mxu0 %v141
  %2831 = vmatmul.mubr.bf16.gmra.mxu0 %v140
  %v2832 = vpop.f32.mrf.mxu0
  %v2833 = vadd.f32 %v2736, %v2832
  %v2834 = vpop.f32.mrf.mxu0
  %v2835 = vpop.f32.mrf.mxu0
  %v2836 = vadd.f32 %v2739, %v2835
  %v2837 = vpop.f32.mrf.mxu0
  %2838 = vmatprep.mubr.bf16.mxu0 %v170
  %2839 = vmatmul.mubr.bf16.gmra.mxu0 %v169
  %v2840 = vpop.f32.mrf.mxu0
  %v2841 = vadd.f32 %v2744, %v2840
  %v2842 = vpop.f32.mrf.mxu0
  %v2843 = vpop.f32.mrf.mxu0
  %v2844 = vadd.f32 %v2747, %v2843
  %v2845 = vpop.f32.mrf.mxu0
  %2846 = vmatprep.mubr.bf16.mxu0 %v199
  %2847 = vmatmul.mubr.bf16.gmra.mxu0 %v198
  %v2848 = vpop.f32.mrf.mxu0
  %v2849 = vadd.f32 %v2752, %v2848
  %v2850 = vpop.f32.mrf.mxu0
  %v2851 = vpop.f32.mrf.mxu0
  %v2852 = vadd.f32 %v2755, %v2851
  %v2853 = vpop.f32.mrf.mxu0
  %2854 = vmatprep.mubr.bf16.mxu0 %v228
  %2855 = vmatmul.mubr.bf16.gmra.mxu0 %v227
  %v2856 = vpop.f32.mrf.mxu0
  %v2857 = vadd.f32 %v2760, %v2856
  %v2858 = vpop.f32.mrf.mxu0
  %v2859 = vpop.f32.mrf.mxu0
  %v2860 = vadd.f32 %v2763, %v2859
  %v2861 = vpop.f32.mrf.mxu0
  %2862 = vmatprep.mubr.bf16.mxu0 %v257
  %2863 = vmatmul.mubr.bf16.gmra.mxu0 %v256
  %v2864 = vpop.f32.mrf.mxu0
  %v2865 = vadd.f32 %v2768, %v2864
  %v2866 = vpop.f32.mrf.mxu0
  %v2867 = vpop.f32.mrf.mxu0
  %v2868 = vadd.f32 %v2771, %v2867
  %v2869 = vpop.f32.mrf.mxu0
  %2870 = vmatprep.mubr.bf16.mxu0 %v286
  %2871 = vmatmul.mubr.bf16.gmra.mxu0 %v285
  %v2872 = vpop.f32.mrf.mxu0
  %v2873 = vadd.f32 %v2776, %v2872
  %v2874 = vpop.f32.mrf.mxu0
  %v2875 = vpop.f32.mrf.mxu0
  %v2876 = vadd.f32 %v2779, %v2875
  %v2877 = vpop.f32.mrf.mxu0
  %2878 = vmatprep.mubr.bf16.mxu0 %v315
  %2879 = vmatmul.mubr.bf16.gmra.mxu0 %v314
  %v2880 = vpop.f32.mrf.mxu0
  %v2881 = vadd.f32 %v2784, %v2880
  %v2882 = vpop.f32.mrf.mxu0
  %v2883 = vpop.f32.mrf.mxu0
  %v2884 = vadd.f32 %v2787, %v2883
  %v2885 = vpop.f32.mrf.mxu0
  %2886 = vmatprep.mubr.bf16.mxu0 %v344
  %2887 = vmatmul.mubr.bf16.gmra.mxu0 %v343
  %v2888 = vpop.f32.mrf.mxu0
  %v2889 = vadd.f32 %v2792, %v2888
  %v2890 = vpop.f32.mrf.mxu0
  %v2891 = vpop.f32.mrf.mxu0
  %v2892 = vadd.f32 %v2795, %v2891
  %v2893 = vpop.f32.mrf.mxu0
  %2894 = vdwg.mxu0
  %2895 = vmatprep.subr.bf16.mxu0 0
  %2896 = vmatpush1.bf16.msra.mxu0 %v1871
  %2897 = vmatprep.subr.bf16.mxu0 0
  %2898 = vmatpush1.bf16.msra.mxu0 %v1870
  %2899 = vmatprep.subr.bf16.mxu0 0
  %2900 = vmatpush1.bf16.msra.mxu0 %v1869
  %2901 = vmatprep.subr.bf16.mxu0 0
  %2902 = vmatpush1.bf16.msra.mxu0 %v1868
  %2903 = vmatprep.subr.bf16.mxu0 0
  %2904 = vmatpush1.bf16.msra.mxu0 %v1867
  %2905 = vmatprep.subr.bf16.mxu0 0
  %2906 = vmatpush1.bf16.msra.mxu0 %v1866
  %2907 = vmatprep.subr.bf16.mxu0 0
  %2908 = vmatpush1.bf16.msra.mxu0 %v1865
  %2909 = vmatprep.subr.bf16.mxu0 0
  %2910 = vmatpush1.bf16.msra.mxu0 %v1864
  %2911 = vmatprep.subr.bf16.mxu0 0
  %2912 = vmatpush2.bf16.msra.mxu0 %v1879
  %2913 = vmatprep.subr.bf16.mxu0 0
  %2914 = vmatpush2.bf16.msra.mxu0 %v1878
  %2915 = vmatprep.subr.bf16.mxu0 0
  %2916 = vmatpush2.bf16.msra.mxu0 %v1877
  %2917 = vmatprep.subr.bf16.mxu0 0
  %2918 = vmatpush2.bf16.msra.mxu0 %v1876
  %2919 = vmatprep.subr.bf16.mxu0 0
  %2920 = vmatpush2.bf16.msra.mxu0 %v1875
  %2921 = vmatprep.subr.bf16.mxu0 0
  %2922 = vmatpush2.bf16.msra.mxu0 %v1874
  %2923 = vmatprep.subr.bf16.mxu0 0
  %2924 = vmatpush2.bf16.msra.mxu0 %v1873
  %2925 = vmatprep.subr.bf16.mxu0 0
  %2926 = vmatpush2.bf16.msra.mxu0 %v1872
  %2927 = vmatprep.mubr.bf16.mxu0 %v143
  %2928 = vmatmul.mubr.bf16.gmra.mxu0 %v142
  %v2929 = vpop.f32.mrf.mxu0
  %v2930 = vadd.f32 %v2833, %v2929
  %v2931 = vpop.f32.mrf.mxu0
  %v2932 = vpop.f32.mrf.mxu0
  %v2933 = vadd.f32 %v2836, %v2932
  %v2934 = vpop.f32.mrf.mxu0
  %2935 = vmatprep.mubr.bf16.mxu0 %v172
  %2936 = vmatmul.mubr.bf16.gmra.mxu0 %v171
  %v2937 = vpop.f32.mrf.mxu0
  %v2938 = vadd.f32 %v2841, %v2937
  %v2939 = vpop.f32.mrf.mxu0
  %v2940 = vpop.f32.mrf.mxu0
  %v2941 = vadd.f32 %v2844, %v2940
  %v2942 = vpop.f32.mrf.mxu0
  %2943 = vmatprep.mubr.bf16.mxu0 %v201
  %2944 = vmatmul.mubr.bf16.gmra.mxu0 %v200
  %v2945 = vpop.f32.mrf.mxu0
  %v2946 = vadd.f32 %v2849, %v2945
  %v2947 = vpop.f32.mrf.mxu0
  %v2948 = vpop.f32.mrf.mxu0
  %v2949 = vadd.f32 %v2852, %v2948
  %v2950 = vpop.f32.mrf.mxu0
  %2951 = vmatprep.mubr.bf16.mxu0 %v230
  %2952 = vmatmul.mubr.bf16.gmra.mxu0 %v229
  %v2953 = vpop.f32.mrf.mxu0
  %v2954 = vadd.f32 %v2857, %v2953
  %v2955 = vpop.f32.mrf.mxu0
  %v2956 = vpop.f32.mrf.mxu0
  %v2957 = vadd.f32 %v2860, %v2956
  %v2958 = vpop.f32.mrf.mxu0
  %2959 = vmatprep.mubr.bf16.mxu0 %v259
  %2960 = vmatmul.mubr.bf16.gmra.mxu0 %v258
  %v2961 = vpop.f32.mrf.mxu0
  %v2962 = vadd.f32 %v2865, %v2961
  %v2963 = vpop.f32.mrf.mxu0
  %v2964 = vpop.f32.mrf.mxu0
  %v2965 = vadd.f32 %v2868, %v2964
  %v2966 = vpop.f32.mrf.mxu0
  %2967 = vmatprep.mubr.bf16.mxu0 %v288
  %2968 = vmatmul.mubr.bf16.gmra.mxu0 %v287
  %v2969 = vpop.f32.mrf.mxu0
  %v2970 = vadd.f32 %v2873, %v2969
  %v2971 = vpop.f32.mrf.mxu0
  %v2972 = vpop.f32.mrf.mxu0
  %v2973 = vadd.f32 %v2876, %v2972
  %v2974 = vpop.f32.mrf.mxu0
  %2975 = vmatprep.mubr.bf16.mxu0 %v317
  %2976 = vmatmul.mubr.bf16.gmra.mxu0 %v316
  %v2977 = vpop.f32.mrf.mxu0
  %v2978 = vadd.f32 %v2881, %v2977
  %v2979 = vpop.f32.mrf.mxu0
  %v2980 = vpop.f32.mrf.mxu0
  %v2981 = vadd.f32 %v2884, %v2980
  %v2982 = vpop.f32.mrf.mxu0
  %2983 = vmatprep.mubr.bf16.mxu0 %v346
  %2984 = vmatmul.mubr.bf16.gmra.mxu0 %v345
  %v2985 = vpop.f32.mrf.mxu0
  %v2986 = vadd.f32 %v2889, %v2985
  %v2987 = vpop.f32.mrf.mxu0
  %v2988 = vpop.f32.mrf.mxu0
  %v2989 = vadd.f32 %v2892, %v2988
  %v2990 = vpop.f32.mrf.mxu0
  %2991 = vdwg.mxu0
  %2992 = vmatprep.subr.bf16.mxu0 0
  %2993 = vmatpush1.bf16.msra.mxu0 %v1887
  %2994 = vmatprep.subr.bf16.mxu0 0
  %2995 = vmatpush1.bf16.msra.mxu0 %v1886
  %2996 = vmatprep.subr.bf16.mxu0 0
  %2997 = vmatpush1.bf16.msra.mxu0 %v1885
  %2998 = vmatprep.subr.bf16.mxu0 0
  %2999 = vmatpush1.bf16.msra.mxu0 %v1884
  %3000 = vmatprep.subr.bf16.mxu0 0
  %3001 = vmatpush1.bf16.msra.mxu0 %v1883
  %3002 = vmatprep.subr.bf16.mxu0 0
  %3003 = vmatpush1.bf16.msra.mxu0 %v1882
  %3004 = vmatprep.subr.bf16.mxu0 0
  %3005 = vmatpush1.bf16.msra.mxu0 %v1881
  %3006 = vmatprep.subr.bf16.mxu0 0
  %3007 = vmatpush1.bf16.msra.mxu0 %v1880
  %3008 = vmatprep.subr.bf16.mxu0 0
  %3009 = vmatpush2.bf16.msra.mxu0 %v1895
  %3010 = vmatprep.subr.bf16.mxu0 0
  %3011 = vmatpush2.bf16.msra.mxu0 %v1894
  %3012 = vmatprep.subr.bf16.mxu0 0
  %3013 = vmatpush2.bf16.msra.mxu0 %v1893
  %3014 = vmatprep.subr.bf16.mxu0 0
  %3015 = vmatpush2.bf16.msra.mxu0 %v1892
  %3016 = vmatprep.subr.bf16.mxu0 0
  %3017 = vmatpush2.bf16.msra.mxu0 %v1891
  %3018 = vmatprep.subr.bf16.mxu0 0
  %3019 = vmatpush2.bf16.msra.mxu0 %v1890
  %3020 = vmatprep.subr.bf16.mxu0 0
  %3021 = vmatpush2.bf16.msra.mxu0 %v1889
  %3022 = vmatprep.subr.bf16.mxu0 0
  %3023 = vmatpush2.bf16.msra.mxu0 %v1888
  %3024 = vmatprep.mubr.bf16.mxu0 %v145
  %3025 = vmatmul.mubr.bf16.gmra.mxu0 %v144
  %v3026 = vpop.f32.mrf.mxu0
  %v3027 = vadd.f32 %v2930, %v3026
  %v3028 = vpop.f32.mrf.mxu0
  %v3029 = vpop.f32.mrf.mxu0
  %v3030 = vadd.f32 %v2933, %v3029
  %v3031 = vpop.f32.mrf.mxu0
  %3032 = vmatprep.mubr.bf16.mxu0 %v174
  %3033 = vmatmul.mubr.bf16.gmra.mxu0 %v173
  %v3034 = vpop.f32.mrf.mxu0
  %v3035 = vadd.f32 %v2938, %v3034
  %v3036 = vpop.f32.mrf.mxu0
  %v3037 = vpop.f32.mrf.mxu0
  %v3038 = vadd.f32 %v2941, %v3037
  %v3039 = vpop.f32.mrf.mxu0
  %3040 = vmatprep.mubr.bf16.mxu0 %v203
  %3041 = vmatmul.mubr.bf16.gmra.mxu0 %v202
  %v3042 = vpop.f32.mrf.mxu0
  %v3043 = vadd.f32 %v2946, %v3042
  %v3044 = vpop.f32.mrf.mxu0
  %v3045 = vpop.f32.mrf.mxu0
  %v3046 = vadd.f32 %v2949, %v3045
  %v3047 = vpop.f32.mrf.mxu0
  %3048 = vmatprep.mubr.bf16.mxu0 %v232
  %3049 = vmatmul.mubr.bf16.gmra.mxu0 %v231
  %v3050 = vpop.f32.mrf.mxu0
  %v3051 = vadd.f32 %v2954, %v3050
  %v3052 = vpop.f32.mrf.mxu0
  %v3053 = vpop.f32.mrf.mxu0
  %v3054 = vadd.f32 %v2957, %v3053
  %v3055 = vpop.f32.mrf.mxu0
  %3056 = vmatprep.mubr.bf16.mxu0 %v261
  %3057 = vmatmul.mubr.bf16.gmra.mxu0 %v260
  %v3058 = vpop.f32.mrf.mxu0
  %v3059 = vadd.f32 %v2962, %v3058
  %v3060 = vpop.f32.mrf.mxu0
  %v3061 = vpop.f32.mrf.mxu0
  %v3062 = vadd.f32 %v2965, %v3061
  %v3063 = vpop.f32.mrf.mxu0
  %3064 = vmatprep.mubr.bf16.mxu0 %v290
  %3065 = vmatmul.mubr.bf16.gmra.mxu0 %v289
  %v3066 = vpop.f32.mrf.mxu0
  %v3067 = vadd.f32 %v2970, %v3066
  %v3068 = vpop.f32.mrf.mxu0
  %v3069 = vpop.f32.mrf.mxu0
  %v3070 = vadd.f32 %v2973, %v3069
  %v3071 = vpop.f32.mrf.mxu0
  %3072 = vmatprep.mubr.bf16.mxu0 %v319
  %3073 = vmatmul.mubr.bf16.gmra.mxu0 %v318
  %v3074 = vpop.f32.mrf.mxu0
  %v3075 = vadd.f32 %v2978, %v3074
  %v3076 = vpop.f32.mrf.mxu0
  %v3077 = vpop.f32.mrf.mxu0
  %v3078 = vadd.f32 %v2981, %v3077
  %v3079 = vpop.f32.mrf.mxu0
  %3080 = vmatprep.mubr.bf16.mxu0 %v348
  %3081 = vmatmul.mubr.bf16.gmra.mxu0 %v347
  %v3082 = vpop.f32.mrf.mxu0
  %v3083 = vadd.f32 %v2986, %v3082
  %v3084 = vpop.f32.mrf.mxu0
  %v3085 = vpop.f32.mrf.mxu0
  %v3086 = vadd.f32 %v2989, %v3085
  %v3087 = vpop.f32.mrf.mxu0
  %3088 = vdwg.mxu0
  %3089 = vmatprep.subr.bf16.mxu0 0
  %3090 = vmatpush1.bf16.msra.mxu0 %v1903
  %3091 = vmatprep.subr.bf16.mxu0 0
  %3092 = vmatpush1.bf16.msra.mxu0 %v1902
  %3093 = vmatprep.subr.bf16.mxu0 0
  %3094 = vmatpush1.bf16.msra.mxu0 %v1901
  %3095 = vmatprep.subr.bf16.mxu0 0
  %3096 = vmatpush1.bf16.msra.mxu0 %v1900
  %3097 = vmatprep.subr.bf16.mxu0 0
  %3098 = vmatpush1.bf16.msra.mxu0 %v1899
  %3099 = vmatprep.subr.bf16.mxu0 0
  %3100 = vmatpush1.bf16.msra.mxu0 %v1898
  %3101 = vmatprep.subr.bf16.mxu0 0
  %3102 = vmatpush1.bf16.msra.mxu0 %v1897
  %3103 = vmatprep.subr.bf16.mxu0 0
  %3104 = vmatpush1.bf16.msra.mxu0 %v1896
  %3105 = vmatprep.subr.bf16.mxu0 0
  %3106 = vmatpush2.bf16.msra.mxu0 %v1911
  %3107 = vmatprep.subr.bf16.mxu0 0
  %3108 = vmatpush2.bf16.msra.mxu0 %v1910
  %3109 = vmatprep.subr.bf16.mxu0 0
  %3110 = vmatpush2.bf16.msra.mxu0 %v1909
  %3111 = vmatprep.subr.bf16.mxu0 0
  %3112 = vmatpush2.bf16.msra.mxu0 %v1908
  %3113 = vmatprep.subr.bf16.mxu0 0
  %3114 = vmatpush2.bf16.msra.mxu0 %v1907
  %3115 = vmatprep.subr.bf16.mxu0 0
  %3116 = vmatpush2.bf16.msra.mxu0 %v1906
  %3117 = vmatprep.subr.bf16.mxu0 0
  %3118 = vmatpush2.bf16.msra.mxu0 %v1905
  %3119 = vmatprep.subr.bf16.mxu0 0
  %3120 = vmatpush2.bf16.msra.mxu0 %v1904
  %3121 = vmatprep.mubr.bf16.mxu0 %v147
  %3122 = vmatmul.mubr.bf16.gmra.mxu0 %v146
  %v3123 = vpop.f32.mrf.mxu0
  %v3124 = vadd.f32 %v3027, %v3123
  %v3125 = vpop.f32.mrf.mxu0
  %v3126 = vpop.f32.mrf.mxu0
  %v3127 = vadd.f32 %v3030, %v3126
  %v3128 = vpop.f32.mrf.mxu0
  %3129 = vmatprep.mubr.bf16.mxu0 %v176
  %3130 = vmatmul.mubr.bf16.gmra.mxu0 %v175
  %v3131 = vpop.f32.mrf.mxu0
  %v3132 = vadd.f32 %v3035, %v3131
  %v3133 = vpop.f32.mrf.mxu0
  %v3134 = vpop.f32.mrf.mxu0
  %v3135 = vadd.f32 %v3038, %v3134
  %v3136 = vpop.f32.mrf.mxu0
  %3137 = vmatprep.mubr.bf16.mxu0 %v205
  %3138 = vmatmul.mubr.bf16.gmra.mxu0 %v204
  %v3139 = vpop.f32.mrf.mxu0
  %v3140 = vadd.f32 %v3043, %v3139
  %v3141 = vpop.f32.mrf.mxu0
  %v3142 = vpop.f32.mrf.mxu0
  %v3143 = vadd.f32 %v3046, %v3142
  %v3144 = vpop.f32.mrf.mxu0
  %3145 = vmatprep.mubr.bf16.mxu0 %v234
  %3146 = vmatmul.mubr.bf16.gmra.mxu0 %v233
  %v3147 = vpop.f32.mrf.mxu0
  %v3148 = vadd.f32 %v3051, %v3147
  %v3149 = vpop.f32.mrf.mxu0
  %v3150 = vpop.f32.mrf.mxu0
  %v3151 = vadd.f32 %v3054, %v3150
  %v3152 = vpop.f32.mrf.mxu0
  %3153 = vmatprep.mubr.bf16.mxu0 %v263
  %3154 = vmatmul.mubr.bf16.gmra.mxu0 %v262
  %v3155 = vpop.f32.mrf.mxu0
  %v3156 = vadd.f32 %v3059, %v3155
  %v3157 = vpop.f32.mrf.mxu0
  %v3158 = vpop.f32.mrf.mxu0
  %v3159 = vadd.f32 %v3062, %v3158
  %v3160 = vpop.f32.mrf.mxu0
  %3161 = vmatprep.mubr.bf16.mxu0 %v292
  %3162 = vmatmul.mubr.bf16.gmra.mxu0 %v291
  %v3163 = vpop.f32.mrf.mxu0
  %v3164 = vadd.f32 %v3067, %v3163
  %v3165 = vpop.f32.mrf.mxu0
  %v3166 = vpop.f32.mrf.mxu0
  %v3167 = vadd.f32 %v3070, %v3166
  %v3168 = vpop.f32.mrf.mxu0
  %3169 = vmatprep.mubr.bf16.mxu0 %v321
  %3170 = vmatmul.mubr.bf16.gmra.mxu0 %v320
  %v3171 = vpop.f32.mrf.mxu0
  %v3172 = vadd.f32 %v3075, %v3171
  %v3173 = vpop.f32.mrf.mxu0
  %v3174 = vpop.f32.mrf.mxu0
  %v3175 = vadd.f32 %v3078, %v3174
  %v3176 = vpop.f32.mrf.mxu0
  %3177 = vmatprep.mubr.bf16.mxu0 %v350
  %3178 = vmatmul.mubr.bf16.gmra.mxu0 %v349
  %v3179 = vpop.f32.mrf.mxu0
  %v3180 = vadd.f32 %v3083, %v3179
  %v3181 = vpop.f32.mrf.mxu0
  %v3182 = vpop.f32.mrf.mxu0
  %v3183 = vadd.f32 %v3086, %v3182
  %v3184 = vpop.f32.mrf.mxu0
  %3185 = vdwg.mxu0
  %3186 = vmatprep.subr.bf16.mxu0 0
  %3187 = vmatpush1.bf16.msra.mxu0 %v1919
  %3188 = vmatprep.subr.bf16.mxu0 0
  %3189 = vmatpush1.bf16.msra.mxu0 %v1918
  %3190 = vmatprep.subr.bf16.mxu0 0
  %3191 = vmatpush1.bf16.msra.mxu0 %v1917
  %3192 = vmatprep.subr.bf16.mxu0 0
  %3193 = vmatpush1.bf16.msra.mxu0 %v1916
  %3194 = vmatprep.subr.bf16.mxu0 0
  %3195 = vmatpush1.bf16.msra.mxu0 %v1915
  %3196 = vmatprep.subr.bf16.mxu0 0
  %3197 = vmatpush1.bf16.msra.mxu0 %v1914
  %3198 = vmatprep.subr.bf16.mxu0 0
  %3199 = vmatpush1.bf16.msra.mxu0 %v1913
  %3200 = vmatprep.subr.bf16.mxu0 0
  %3201 = vmatpush1.bf16.msra.mxu0 %v1912
  %3202 = vmatprep.subr.bf16.mxu0 0
  %3203 = vmatpush2.bf16.msra.mxu0 %v1927
  %3204 = vmatprep.subr.bf16.mxu0 0
  %3205 = vmatpush2.bf16.msra.mxu0 %v1926
  %3206 = vmatprep.subr.bf16.mxu0 0
  %3207 = vmatpush2.bf16.msra.mxu0 %v1925
  %3208 = vmatprep.subr.bf16.mxu0 0
  %3209 = vmatpush2.bf16.msra.mxu0 %v1924
  %3210 = vmatprep.subr.bf16.mxu0 0
  %3211 = vmatpush2.bf16.msra.mxu0 %v1923
  %3212 = vmatprep.subr.bf16.mxu0 0
  %3213 = vmatpush2.bf16.msra.mxu0 %v1922
  %3214 = vmatprep.subr.bf16.mxu0 0
  %3215 = vmatpush2.bf16.msra.mxu0 %v1921
  %3216 = vmatprep.subr.bf16.mxu0 0
  %3217 = vmatpush2.bf16.msra.mxu0 %v1920
  %3218 = vmatprep.mubr.bf16.mxu0 %v149
  %3219 = vmatmul.mubr.bf16.gmra.mxu0 %v148
  %v3220 = vpop.f32.mrf.mxu0
  %v3221 = vadd.f32 %v3124, %v3220
  %v3222 = vpop.f32.mrf.mxu0
  %v3223 = vpop.f32.mrf.mxu0
  %v3224 = vadd.f32 %v3127, %v3223
  %v3225 = vpop.f32.mrf.mxu0
  %3226 = vmatprep.mubr.bf16.mxu0 %v178
  %3227 = vmatmul.mubr.bf16.gmra.mxu0 %v177
  %v3228 = vpop.f32.mrf.mxu0
  %v3229 = vadd.f32 %v3132, %v3228
  %v3230 = vpop.f32.mrf.mxu0
  %v3231 = vpop.f32.mrf.mxu0
  %v3232 = vadd.f32 %v3135, %v3231
  %v3233 = vpop.f32.mrf.mxu0
  %3234 = vmatprep.mubr.bf16.mxu0 %v207
  %3235 = vmatmul.mubr.bf16.gmra.mxu0 %v206
  %v3236 = vpop.f32.mrf.mxu0
  %v3237 = vadd.f32 %v3140, %v3236
  %v3238 = vpop.f32.mrf.mxu0
  %v3239 = vpop.f32.mrf.mxu0
  %v3240 = vadd.f32 %v3143, %v3239
  %v3241 = vpop.f32.mrf.mxu0
  %3242 = vmatprep.mubr.bf16.mxu0 %v236
  %3243 = vmatmul.mubr.bf16.gmra.mxu0 %v235
  %v3244 = vpop.f32.mrf.mxu0
  %v3245 = vadd.f32 %v3148, %v3244
  %v3246 = vpop.f32.mrf.mxu0
  %v3247 = vpop.f32.mrf.mxu0
  %v3248 = vadd.f32 %v3151, %v3247
  %v3249 = vpop.f32.mrf.mxu0
  %3250 = vmatprep.mubr.bf16.mxu0 %v265
  %3251 = vmatmul.mubr.bf16.gmra.mxu0 %v264
  %v3252 = vpop.f32.mrf.mxu0
  %v3253 = vadd.f32 %v3156, %v3252
  %v3254 = vpop.f32.mrf.mxu0
  %v3255 = vpop.f32.mrf.mxu0
  %v3256 = vadd.f32 %v3159, %v3255
  %v3257 = vpop.f32.mrf.mxu0
  %3258 = vmatprep.mubr.bf16.mxu0 %v294
  %3259 = vmatmul.mubr.bf16.gmra.mxu0 %v293
  %v3260 = vpop.f32.mrf.mxu0
  %v3261 = vadd.f32 %v3164, %v3260
  %v3262 = vpop.f32.mrf.mxu0
  %v3263 = vpop.f32.mrf.mxu0
  %v3264 = vadd.f32 %v3167, %v3263
  %v3265 = vpop.f32.mrf.mxu0
  %3266 = vmatprep.mubr.bf16.mxu0 %v323
  %3267 = vmatmul.mubr.bf16.gmra.mxu0 %v322
  %v3268 = vpop.f32.mrf.mxu0
  %v3269 = vadd.f32 %v3172, %v3268
  %v3270 = vpop.f32.mrf.mxu0
  %v3271 = vpop.f32.mrf.mxu0
  %v3272 = vadd.f32 %v3175, %v3271
  %v3273 = vpop.f32.mrf.mxu0
  %3274 = vmatprep.mubr.bf16.mxu0 %v352
  %3275 = vmatmul.mubr.bf16.gmra.mxu0 %v351
  %v3276 = vpop.f32.mrf.mxu0
  %v3277 = vadd.f32 %v3180, %v3276
  %v3278 = vpop.f32.mrf.mxu0
  %v3279 = vpop.f32.mrf.mxu0
  %v3280 = vadd.f32 %v3183, %v3279
  %v3281 = vpop.f32.mrf.mxu0
  %3282 = vdwg.mxu0
  %3283 = vmatprep.subr.bf16.mxu0 0
  %3284 = vmatpush1.bf16.msra.mxu0 %v1935
  %3285 = vmatprep.subr.bf16.mxu0 0
  %3286 = vmatpush1.bf16.msra.mxu0 %v1934
  %3287 = vmatprep.subr.bf16.mxu0 0
  %3288 = vmatpush1.bf16.msra.mxu0 %v1933
  %3289 = vmatprep.subr.bf16.mxu0 0
  %3290 = vmatpush1.bf16.msra.mxu0 %v1932
  %3291 = vmatprep.subr.bf16.mxu0 0
  %3292 = vmatpush1.bf16.msra.mxu0 %v1931
  %3293 = vmatprep.subr.bf16.mxu0 0
  %3294 = vmatpush1.bf16.msra.mxu0 %v1930
  %3295 = vmatprep.subr.bf16.mxu0 0
  %3296 = vmatpush1.bf16.msra.mxu0 %v1929
  %3297 = vmatprep.subr.bf16.mxu0 0
  %3298 = vmatpush1.bf16.msra.mxu0 %v1928
  %3299 = vmatprep.subr.bf16.mxu0 0
  %3300 = vmatpush2.bf16.msra.mxu0 %v1943
  %3301 = vmatprep.subr.bf16.mxu0 0
  %3302 = vmatpush2.bf16.msra.mxu0 %v1942
  %3303 = vmatprep.subr.bf16.mxu0 0
  %3304 = vmatpush2.bf16.msra.mxu0 %v1941
  %3305 = vmatprep.subr.bf16.mxu0 0
  %3306 = vmatpush2.bf16.msra.mxu0 %v1940
  %3307 = vmatprep.subr.bf16.mxu0 0
  %3308 = vmatpush2.bf16.msra.mxu0 %v1939
  %3309 = vmatprep.subr.bf16.mxu0 0
  %3310 = vmatpush2.bf16.msra.mxu0 %v1938
  %3311 = vmatprep.subr.bf16.mxu0 0
  %3312 = vmatpush2.bf16.msra.mxu0 %v1937
  %3313 = vmatprep.subr.bf16.mxu0 0
  %3314 = vmatpush2.bf16.msra.mxu0 %v1936
  %3315 = vmatprep.mubr.bf16.mxu0 %v151
  %3316 = vmatmul.mubr.bf16.gmra.mxu0 %v150
  %v3317 = vpop.f32.mrf.mxu0
  %v3318 = vadd.f32 %v3221, %v3317
  %v3319 = vpop.f32.mrf.mxu0
  %v3320 = vpop.f32.mrf.mxu0
  %v3321 = vadd.f32 %v3224, %v3320
  %v3322 = vpop.f32.mrf.mxu0
  %3323 = vmatprep.mubr.bf16.mxu0 %v180
  %3324 = vmatmul.mubr.bf16.gmra.mxu0 %v179
  %v3325 = vpop.f32.mrf.mxu0
  %v3326 = vadd.f32 %v3229, %v3325
  %v3327 = vpop.f32.mrf.mxu0
  %v3328 = vpop.f32.mrf.mxu0
  %v3329 = vadd.f32 %v3232, %v3328
  %v3330 = vpop.f32.mrf.mxu0
  %3331 = vmatprep.mubr.bf16.mxu0 %v209
  %3332 = vmatmul.mubr.bf16.gmra.mxu0 %v208
  %v3333 = vpop.f32.mrf.mxu0
  %v3334 = vadd.f32 %v3237, %v3333
  %v3335 = vpop.f32.mrf.mxu0
  %v3336 = vpop.f32.mrf.mxu0
  %v3337 = vadd.f32 %v3240, %v3336
  %v3338 = vpop.f32.mrf.mxu0
  %3339 = vmatprep.mubr.bf16.mxu0 %v238
  %3340 = vmatmul.mubr.bf16.gmra.mxu0 %v237
  %v3341 = vpop.f32.mrf.mxu0
  %v3342 = vadd.f32 %v3245, %v3341
  %v3343 = vpop.f32.mrf.mxu0
  %v3344 = vpop.f32.mrf.mxu0
  %v3345 = vadd.f32 %v3248, %v3344
  %v3346 = vpop.f32.mrf.mxu0
  %3347 = vmatprep.mubr.bf16.mxu0 %v267
  %3348 = vmatmul.mubr.bf16.gmra.mxu0 %v266
  %v3349 = vpop.f32.mrf.mxu0
  %v3350 = vadd.f32 %v3253, %v3349
  %v3351 = vpop.f32.mrf.mxu0
  %v3352 = vpop.f32.mrf.mxu0
  %v3353 = vadd.f32 %v3256, %v3352
  %v3354 = vpop.f32.mrf.mxu0
  %3355 = vmatprep.mubr.bf16.mxu0 %v296
  %3356 = vmatmul.mubr.bf16.gmra.mxu0 %v295
  %v3357 = vpop.f32.mrf.mxu0
  %v3358 = vadd.f32 %v3261, %v3357
  %v3359 = vpop.f32.mrf.mxu0
  %v3360 = vpop.f32.mrf.mxu0
  %v3361 = vadd.f32 %v3264, %v3360
  %v3362 = vpop.f32.mrf.mxu0
  %3363 = vmatprep.mubr.bf16.mxu0 %v325
  %3364 = vmatmul.mubr.bf16.gmra.mxu0 %v324
  %v3365 = vpop.f32.mrf.mxu0
  %v3366 = vadd.f32 %v3269, %v3365
  %v3367 = vpop.f32.mrf.mxu0
  %v3368 = vpop.f32.mrf.mxu0
  %v3369 = vadd.f32 %v3272, %v3368
  %v3370 = vpop.f32.mrf.mxu0
  %3371 = vmatprep.mubr.bf16.mxu0 %v354
  %3372 = vmatmul.mubr.bf16.gmra.mxu0 %v353
  %v3373 = vpop.f32.mrf.mxu0
  %v3374 = vadd.f32 %v3277, %v3373
  %v3375 = vpop.f32.mrf.mxu0
  %v3376 = vpop.f32.mrf.mxu0
  %v3377 = vadd.f32 %v3280, %v3376
  %v3378 = vpop.f32.mrf.mxu0
  %3379 = vdwg.mxu0
  %3380 = vmatprep.subr.bf16.mxu0 0
  %3381 = vmatpush1.bf16.msra.mxu0 %v1951
  %3382 = vmatprep.subr.bf16.mxu0 0
  %3383 = vmatpush1.bf16.msra.mxu0 %v1950
  %3384 = vmatprep.subr.bf16.mxu0 0
  %3385 = vmatpush1.bf16.msra.mxu0 %v1949
  %3386 = vmatprep.subr.bf16.mxu0 0
  %3387 = vmatpush1.bf16.msra.mxu0 %v1948
  %3388 = vmatprep.subr.bf16.mxu0 0
  %3389 = vmatpush1.bf16.msra.mxu0 %v1947
  %3390 = vmatprep.subr.bf16.mxu0 0
  %3391 = vmatpush1.bf16.msra.mxu0 %v1946
  %3392 = vmatprep.subr.bf16.mxu0 0
  %3393 = vmatpush1.bf16.msra.mxu0 %v1945
  %3394 = vmatprep.subr.bf16.mxu0 0
  %3395 = vmatpush1.bf16.msra.mxu0 %v1944
  %3396 = vmatprep.subr.bf16.mxu0 0
  %3397 = vmatpush2.bf16.msra.mxu0 %v1959
  %3398 = vmatprep.subr.bf16.mxu0 0
  %3399 = vmatpush2.bf16.msra.mxu0 %v1958
  %3400 = vmatprep.subr.bf16.mxu0 0
  %3401 = vmatpush2.bf16.msra.mxu0 %v1957
  %3402 = vmatprep.subr.bf16.mxu0 0
  %3403 = vmatpush2.bf16.msra.mxu0 %v1956
  %3404 = vmatprep.subr.bf16.mxu0 0
  %3405 = vmatpush2.bf16.msra.mxu0 %v1955
  %3406 = vmatprep.subr.bf16.mxu0 0
  %3407 = vmatpush2.bf16.msra.mxu0 %v1954
  %3408 = vmatprep.subr.bf16.mxu0 0
  %3409 = vmatpush2.bf16.msra.mxu0 %v1953
  %3410 = vmatprep.subr.bf16.mxu0 0
  %3411 = vmatpush2.bf16.msra.mxu0 %v1952
  %3412 = vmatprep.mubr.bf16.mxu0 %v153
  %3413 = vmatmul.mubr.bf16.gmra.mxu0 %v152
  %v3414 = vpop.f32.mrf.mxu0
  %v3415 = vadd.f32 %v3318, %v3414
  %v3416 = vpop.f32.mrf.mxu0
  %v3417 = vpop.f32.mrf.mxu0
  %v3418 = vadd.f32 %v3321, %v3417
  %v3419 = vpop.f32.mrf.mxu0
  %3420 = vmatprep.mubr.bf16.mxu0 %v182
  %3421 = vmatmul.mubr.bf16.gmra.mxu0 %v181
  %v3422 = vpop.f32.mrf.mxu0
  %v3423 = vadd.f32 %v3326, %v3422
  %v3424 = vpop.f32.mrf.mxu0
  %v3425 = vpop.f32.mrf.mxu0
  %v3426 = vadd.f32 %v3329, %v3425
  %v3427 = vpop.f32.mrf.mxu0
  %3428 = vmatprep.mubr.bf16.mxu0 %v211
  %3429 = vmatmul.mubr.bf16.gmra.mxu0 %v210
  %v3430 = vpop.f32.mrf.mxu0
  %v3431 = vadd.f32 %v3334, %v3430
  %v3432 = vpop.f32.mrf.mxu0
  %v3433 = vpop.f32.mrf.mxu0
  %v3434 = vadd.f32 %v3337, %v3433
  %v3435 = vpop.f32.mrf.mxu0
  %3436 = vmatprep.mubr.bf16.mxu0 %v240
  %3437 = vmatmul.mubr.bf16.gmra.mxu0 %v239
  %v3438 = vpop.f32.mrf.mxu0
  %v3439 = vadd.f32 %v3342, %v3438
  %v3440 = vpop.f32.mrf.mxu0
  %v3441 = vpop.f32.mrf.mxu0
  %v3442 = vadd.f32 %v3345, %v3441
  %v3443 = vpop.f32.mrf.mxu0
  %3444 = vmatprep.mubr.bf16.mxu0 %v269
  %3445 = vmatmul.mubr.bf16.gmra.mxu0 %v268
  %v3446 = vpop.f32.mrf.mxu0
  %v3447 = vadd.f32 %v3350, %v3446
  %v3448 = vpop.f32.mrf.mxu0
  %v3449 = vpop.f32.mrf.mxu0
  %v3450 = vadd.f32 %v3353, %v3449
  %v3451 = vpop.f32.mrf.mxu0
  %3452 = vmatprep.mubr.bf16.mxu0 %v298
  %3453 = vmatmul.mubr.bf16.gmra.mxu0 %v297
  %v3454 = vpop.f32.mrf.mxu0
  %v3455 = vadd.f32 %v3358, %v3454
  %v3456 = vpop.f32.mrf.mxu0
  %v3457 = vpop.f32.mrf.mxu0
  %v3458 = vadd.f32 %v3361, %v3457
  %v3459 = vpop.f32.mrf.mxu0
  %3460 = vmatprep.mubr.bf16.mxu0 %v327
  %3461 = vmatmul.mubr.bf16.gmra.mxu0 %v326
  %v3462 = vpop.f32.mrf.mxu0
  %v3463 = vadd.f32 %v3366, %v3462
  %v3464 = vpop.f32.mrf.mxu0
  %v3465 = vpop.f32.mrf.mxu0
  %v3466 = vadd.f32 %v3369, %v3465
  %v3467 = vpop.f32.mrf.mxu0
  %3468 = vmatprep.mubr.bf16.mxu0 %v356
  %3469 = vmatmul.mubr.bf16.gmra.mxu0 %v355
  %v3470 = vpop.f32.mrf.mxu0
  %v3471 = vadd.f32 %v3374, %v3470
  %v3472 = vpop.f32.mrf.mxu0
  %v3473 = vpop.f32.mrf.mxu0
  %v3474 = vadd.f32 %v3377, %v3473
  %v3475 = vpop.f32.mrf.mxu0
  %3476 = vdwg.mxu0
  %3477 = vmatprep.subr.bf16.mxu0 0
  %3478 = vmatpush1.bf16.msra.mxu0 %v1967
  %3479 = vmatprep.subr.bf16.mxu0 0
  %3480 = vmatpush1.bf16.msra.mxu0 %v1966
  %3481 = vmatprep.subr.bf16.mxu0 0
  %3482 = vmatpush1.bf16.msra.mxu0 %v1965
  %3483 = vmatprep.subr.bf16.mxu0 0
  %3484 = vmatpush1.bf16.msra.mxu0 %v1964
  %3485 = vmatprep.subr.bf16.mxu0 0
  %3486 = vmatpush1.bf16.msra.mxu0 %v1963
  %3487 = vmatprep.subr.bf16.mxu0 0
  %3488 = vmatpush1.bf16.msra.mxu0 %v1962
  %3489 = vmatprep.subr.bf16.mxu0 0
  %3490 = vmatpush1.bf16.msra.mxu0 %v1961
  %3491 = vmatprep.subr.bf16.mxu0 0
  %3492 = vmatpush1.bf16.msra.mxu0 %v1960
  %3493 = vmatprep.subr.bf16.mxu0 0
  %3494 = vmatpush2.bf16.msra.mxu0 %v1975
  %3495 = vmatprep.subr.bf16.mxu0 0
  %3496 = vmatpush2.bf16.msra.mxu0 %v1974
  %3497 = vmatprep.subr.bf16.mxu0 0
  %3498 = vmatpush2.bf16.msra.mxu0 %v1973
  %3499 = vmatprep.subr.bf16.mxu0 0
  %3500 = vmatpush2.bf16.msra.mxu0 %v1972
  %3501 = vmatprep.subr.bf16.mxu0 0
  %3502 = vmatpush2.bf16.msra.mxu0 %v1971
  %3503 = vmatprep.subr.bf16.mxu0 0
  %3504 = vmatpush2.bf16.msra.mxu0 %v1970
  %3505 = vmatprep.subr.bf16.mxu0 0
  %3506 = vmatpush2.bf16.msra.mxu0 %v1969
  %3507 = vmatprep.subr.bf16.mxu0 0
  %3508 = vmatpush2.bf16.msra.mxu0 %v1968
  %3509 = vmatprep.mubr.bf16.mxu0 %v155
  %3510 = vmatmul.mubr.bf16.gmra.mxu0 %v154
  %v3511 = vpop.f32.mrf.mxu0
  %v3512 = vadd.f32 %v3415, %v3511
  %v3513 = vpop.f32.mrf.mxu0
  %v3514 = vpop.f32.mrf.mxu0
  %v3515 = vadd.f32 %v3418, %v3514
  %v3516 = vpop.f32.mrf.mxu0
  %3517 = vmatprep.mubr.bf16.mxu0 %v184
  %3518 = vmatmul.mubr.bf16.gmra.mxu0 %v183
  %v3519 = vpop.f32.mrf.mxu0
  %v3520 = vadd.f32 %v3423, %v3519
  %v3521 = vpop.f32.mrf.mxu0
  %v3522 = vpop.f32.mrf.mxu0
  %v3523 = vadd.f32 %v3426, %v3522
  %v3524 = vpop.f32.mrf.mxu0
  %3525 = vmatprep.mubr.bf16.mxu0 %v213
  %3526 = vmatmul.mubr.bf16.gmra.mxu0 %v212
  %v3527 = vpop.f32.mrf.mxu0
  %v3528 = vadd.f32 %v3431, %v3527
  %v3529 = vpop.f32.mrf.mxu0
  %v3530 = vpop.f32.mrf.mxu0
  %v3531 = vadd.f32 %v3434, %v3530
  %v3532 = vpop.f32.mrf.mxu0
  %3533 = vmatprep.mubr.bf16.mxu0 %v242
  %3534 = vmatmul.mubr.bf16.gmra.mxu0 %v241
  %v3535 = vpop.f32.mrf.mxu0
  %v3536 = vadd.f32 %v3439, %v3535
  %v3537 = vpop.f32.mrf.mxu0
  %v3538 = vpop.f32.mrf.mxu0
  %v3539 = vadd.f32 %v3442, %v3538
  %v3540 = vpop.f32.mrf.mxu0
  %3541 = vmatprep.mubr.bf16.mxu0 %v271
  %3542 = vmatmul.mubr.bf16.gmra.mxu0 %v270
  %v3543 = vpop.f32.mrf.mxu0
  %v3544 = vadd.f32 %v3447, %v3543
  %v3545 = vpop.f32.mrf.mxu0
  %v3546 = vpop.f32.mrf.mxu0
  %v3547 = vadd.f32 %v3450, %v3546
  %v3548 = vpop.f32.mrf.mxu0
  %3549 = vmatprep.mubr.bf16.mxu0 %v300
  %3550 = vmatmul.mubr.bf16.gmra.mxu0 %v299
  %v3551 = vpop.f32.mrf.mxu0
  %v3552 = vadd.f32 %v3455, %v3551
  %v3553 = vpop.f32.mrf.mxu0
  %v3554 = vpop.f32.mrf.mxu0
  %v3555 = vadd.f32 %v3458, %v3554
  %v3556 = vpop.f32.mrf.mxu0
  %3557 = vmatprep.mubr.bf16.mxu0 %v329
  %3558 = vmatmul.mubr.bf16.gmra.mxu0 %v328
  %v3559 = vpop.f32.mrf.mxu0
  %v3560 = vadd.f32 %v3463, %v3559
  %v3561 = vpop.f32.mrf.mxu0
  %v3562 = vpop.f32.mrf.mxu0
  %v3563 = vadd.f32 %v3466, %v3562
  %v3564 = vpop.f32.mrf.mxu0
  %3565 = vmatprep.mubr.bf16.mxu0 %v358
  %3566 = vmatmul.mubr.bf16.gmra.mxu0 %v357
  %v3567 = vpop.f32.mrf.mxu0
  %v3568 = vadd.f32 %v3471, %v3567
  %v3569 = vpop.f32.mrf.mxu0
  %v3570 = vpop.f32.mrf.mxu0
  %v3571 = vadd.f32 %v3474, %v3570
  %v3572 = vpop.f32.mrf.mxu0
  %3573 = vdwg.mxu0
  %3574 = vmatprep.subr.bf16.mxu0 0
  %3575 = vmatpush1.bf16.msra.mxu0 %v1983
  %3576 = vmatprep.subr.bf16.mxu0 0
  %3577 = vmatpush1.bf16.msra.mxu0 %v1982
  %3578 = vmatprep.subr.bf16.mxu0 0
  %3579 = vmatpush1.bf16.msra.mxu0 %v1981
  %3580 = vmatprep.subr.bf16.mxu0 0
  %3581 = vmatpush1.bf16.msra.mxu0 %v1980
  %3582 = vmatprep.subr.bf16.mxu0 0
  %3583 = vmatpush1.bf16.msra.mxu0 %v1979
  %3584 = vmatprep.subr.bf16.mxu0 0
  %3585 = vmatpush1.bf16.msra.mxu0 %v1978
  %3586 = vmatprep.subr.bf16.mxu0 0
  %3587 = vmatpush1.bf16.msra.mxu0 %v1977
  %3588 = vmatprep.subr.bf16.mxu0 0
  %3589 = vmatpush1.bf16.msra.mxu0 %v1976
  %3590 = vmatprep.subr.bf16.mxu0 0
  %3591 = vmatpush2.bf16.msra.mxu0 0
  %3592 = vmatprep.subr.bf16.mxu0 0
  %3593 = vmatpush2.bf16.msra.mxu0 0
  %3594 = vmatprep.subr.bf16.mxu0 0
  %3595 = vmatpush2.bf16.msra.mxu0 0
  %3596 = vmatprep.subr.bf16.mxu0 0
  %3597 = vmatpush2.bf16.msra.mxu0 0
  %3598 = vmatprep.subr.bf16.mxu0 0
  %3599 = vmatpush2.bf16.msra.mxu0 0
  %3600 = vmatprep.subr.bf16.mxu0 0
  %3601 = vmatpush2.bf16.msra.mxu0 0
  %3602 = vmatprep.subr.bf16.mxu0 0
  %3603 = vmatpush2.bf16.msra.mxu0 0
  %3604 = vmatprep.subr.bf16.mxu0 0
  %3605 = vmatpush2.bf16.msra.mxu0 0
  %3606 = vmatprep.mubr.bf16.mxu0 0
  %3607 = vmatmul.mubr.bf16.gmra.mxu0 %v156
  %v3608 = vpop.f32.mrf.mxu0
  %v3609 = vadd.f32 %v3512, %v3608
  %v3610 = vpop.f32.mrf.mxu0
  %v3611 = vpop.f32.mrf.mxu0
  %v3612 = vadd.f32 %v3515, %v3611
  %v3613 = vpop.f32.mrf.mxu0
  %3614 = vmatprep.mubr.bf16.mxu0 0
  %3615 = vmatmul.mubr.bf16.gmra.mxu0 %v185
  %v3616 = vpop.f32.mrf.mxu0
  %v3617 = vadd.f32 %v3520, %v3616
  %v3618 = vpop.f32.mrf.mxu0
  %v3619 = vpop.f32.mrf.mxu0
  %v3620 = vadd.f32 %v3523, %v3619
  %v3621 = vpop.f32.mrf.mxu0
  %3622 = vmatprep.mubr.bf16.mxu0 0
  %3623 = vmatmul.mubr.bf16.gmra.mxu0 %v214
  %v3624 = vpop.f32.mrf.mxu0
  %v3625 = vadd.f32 %v3528, %v3624
  %v3626 = vpop.f32.mrf.mxu0
  %v3627 = vpop.f32.mrf.mxu0
  %v3628 = vadd.f32 %v3531, %v3627
  %v3629 = vpop.f32.mrf.mxu0
  %3630 = vmatprep.mubr.bf16.mxu0 0
  %3631 = vmatmul.mubr.bf16.gmra.mxu0 %v243
  %v3632 = vpop.f32.mrf.mxu0
  %v3633 = vadd.f32 %v3536, %v3632
  %v3634 = vpop.f32.mrf.mxu0
  %v3635 = vpop.f32.mrf.mxu0
  %v3636 = vadd.f32 %v3539, %v3635
  %v3637 = vpop.f32.mrf.mxu0
  %3638 = vmatprep.mubr.bf16.mxu0 0
  %3639 = vmatmul.mubr.bf16.gmra.mxu0 %v272
  %v3640 = vpop.f32.mrf.mxu0
  %v3641 = vadd.f32 %v3544, %v3640
  %v3642 = vpop.f32.mrf.mxu0
  %v3643 = vpop.f32.mrf.mxu0
  %v3644 = vadd.f32 %v3547, %v3643
  %v3645 = vpop.f32.mrf.mxu0
  %3646 = vmatprep.mubr.bf16.mxu0 0
  %3647 = vmatmul.mubr.bf16.gmra.mxu0 %v301
  %v3648 = vpop.f32.mrf.mxu0
  %v3649 = vadd.f32 %v3552, %v3648
  %v3650 = vpop.f32.mrf.mxu0
  %v3651 = vpop.f32.mrf.mxu0
  %v3652 = vadd.f32 %v3555, %v3651
  %v3653 = vpop.f32.mrf.mxu0
  %3654 = vmatprep.mubr.bf16.mxu0 0
  %3655 = vmatmul.mubr.bf16.gmra.mxu0 %v330
  %v3656 = vpop.f32.mrf.mxu0
  %v3657 = vadd.f32 %v3560, %v3656
  %v3658 = vpop.f32.mrf.mxu0
  %v3659 = vpop.f32.mrf.mxu0
  %v3660 = vadd.f32 %v3563, %v3659
  %v3661 = vpop.f32.mrf.mxu0
  %3662 = vmatprep.mubr.bf16.mxu0 0
  %3663 = vmatmul.mubr.bf16.gmra.mxu0 %v359
  %v3664 = vpop.f32.mrf.mxu0
  %v3665 = vadd.f32 %v3568, %v3664
  %v3666 = vpop.f32.mrf.mxu0
  %v3667 = vpop.f32.mrf.mxu0
  %v3668 = vadd.f32 %v3571, %v3667
  %v3669 = vpop.f32.mrf.mxu0
  %3670 = vdwg.mxu0
  %vm3671 = vcmask 261120
  %3672 = vst.msk [vmem:[%s2] sm:$0xff] %vm3671, %v3609
  %3673 = vst.msk [vmem:[%s2 + $0x8] sm:$0xff] %vm3671, %v3612
  %3674 = vst.msk [vmem:[%s2 + $0x10] sm:$0xff] %vm3671, %v3617
  %3675 = vst.msk [vmem:[%s2 + $0x18] sm:$0xff] %vm3671, %v3620
  %3676 = vst.msk [vmem:[%s2 + $0x20] sm:$0xff] %vm3671, %v3625
  %3677 = vst.msk [vmem:[%s2 + $0x28] sm:$0xff] %vm3671, %v3628
  %3678 = vst.msk [vmem:[%s2 + $0x30] sm:$0xff] %vm3671, %v3633
  %3679 = vst.msk [vmem:[%s2 + $0x38] sm:$0xff] %vm3671, %v3636
  %3680 = vst.msk [vmem:[%s2 + $0x40] sm:$0xff] %vm3671, %v3641
  %3681 = vst.msk [vmem:[%s2 + $0x48] sm:$0xff] %vm3671, %v3644
  %3682 = vst.msk [vmem:[%s2 + $0x50] sm:$0xff] %vm3671, %v3649
  %3683 = vst.msk [vmem:[%s2 + $0x58] sm:$0xff] %vm3671, %v3652
  %3684 = vst.msk [vmem:[%s2 + $0x60] sm:$0xff] %vm3671, %v3657
  %3685 = vst.msk [vmem:[%s2 + $0x68] sm:$0xff] %vm3671, %v3660
  %3686 = vst.msk [vmem:[%s2 + $0x70] sm:$0xff] %vm3671, %v3665
  %3687 = vst.msk [vmem:[%s2 + $0x78] sm:$0xff] %vm3671, %v3668
  // Predicated region
  $region10: #{gcn_forward.4} parent=0 // pred_check
    _
  $region11: #{gcn_forward.4} parent=0 // pred_check_branch
    %3689 = sbr.rel (0) target = $region13
  $region12: #{gcn_forward.4} parent=0 // pred_region
    _
  $region13: #{gcn_forward.4} parent=0 // pred_fallthru
    _
  // Predicated region
  $region14: #{gcn_forward.4} parent=0 // pred_check
    _
  $region15: #{gcn_forward.4} parent=0 // pred_check_branch
    %3691 = sbr.rel (0) target = $region17
  $region16: #{gcn_forward.4} parent=0 // pred_region
    _
  $region17: #{gcn_forward.4} parent=0 // pred_fallthru
    _

// kernel: gcn_forward.5
$region0: #{gcn_forward.5}
  #allocation0 [shape = 'u32[]', space=smem, size = 0x4, offset = 0x4, fixed_abs, tag = 'smem constant byte address 0x4 - core index']
  #allocation1 [shape = 'u32[144,128]{1,0:T(1,128)}', space=vmem, size = 0x12000, scoped, tag = 'internal scratch']
  %s0 = inlined_call_operand.vmem [shape: bf16[128,128], index: 0, kind: input, shape index: {}]
  %s1 = inlined_call_operand.vmem [shape: f32[128,32], index: 1, kind: input, shape index: {}]
  %s2 = inlined_call_operand.vmem [shape: f32[32,18], index: 2, kind: input, shape index: {}]
  %s3 = inlined_call_operand.vmem [shape: f32[18,6], index: 3, kind: input, shape index: {}]
  %s4 = inlined_call_operand.vmem [shape: f32[1,32], index: 4, kind: input, shape index: {}]
  %s5 = inlined_call_operand.vmem [shape: f32[1,18], index: 5, kind: input, shape index: {}]
  %s6 = inlined_call_operand.vmem [shape: f32[1,6], index: 6, kind: input, shape index: {}]
  %s7 = inlined_call_operand.vmem [shape: f32[128,32], index: 7, kind: input, shape index: {}]
  %s8 = inlined_call_operand.vmem [shape: f32[128,18], index: 8, kind: input, shape index: {}]
  %s9 = inlined_call_operand.vmem [shape: f32[128,6], index: 9, kind: output, shape index: {}]
  %s10 = sld [smem:[#allocation0]]
  $region46: #{gcn_forward.5} parent=0
    _
  %s12 = ssub.s32 1, %s10
  %s13 = scalar_select 0, %s12, %s10
  // Predicated region
  $region2: #{gcn_forward.5} parent=0 // pred_check
    _
  $region3: #{gcn_forward.5} parent=0 // pred_check_branch
    %15 = sbr.rel (0) target = $region5
  $region4: #{gcn_forward.5} parent=0 // pred_region
    _
  $region5: #{gcn_forward.5} parent=0 // pred_fallthru
    _
  // Predicated region
  $region6: #{gcn_forward.5} parent=0 // pred_check
    _
  $region7: #{gcn_forward.5} parent=0 // pred_check_branch
    %17 = sbr.rel (0) target = $region9
  $region8: #{gcn_forward.5} parent=0 // pred_region
    _
  $region9: #{gcn_forward.5} parent=0 // pred_fallthru
    _
  // Predicated region
  $region10: #{gcn_forward.5} parent=0 // pred_check
    _
  $region11: #{gcn_forward.5} parent=0 // pred_check_branch
    %19 = sbr.rel (0) target = $region13
  $region12: #{gcn_forward.5} parent=0 // pred_region
    _
  $region13: #{gcn_forward.5} parent=0 // pred_fallthru
    _
  // Predicated region
  $region14: #{gcn_forward.5} parent=0 // pred_check
    _
  $region15: #{gcn_forward.5} parent=0 // pred_check_branch
    %21 = sbr.rel (0) target = $region17
  $region16: #{gcn_forward.5} parent=0 // pred_region
    _
  $region17: #{gcn_forward.5} parent=0 // pred_fallthru
    _
  // Predicated region
  $region18: #{gcn_forward.5} parent=0 // pred_check
    _
  $region19: #{gcn_forward.5} parent=0 // pred_check_branch
    %23 = sbr.rel (0) target = $region21
  $region20: #{gcn_forward.5} parent=0 // pred_region
    _
  $region21: #{gcn_forward.5} parent=0 // pred_fallthru
    _
  // Predicated region
  $region22: #{gcn_forward.5} parent=0 // pred_check
    _
  $region23: #{gcn_forward.5} parent=0 // pred_check_branch
    %25 = sbr.rel (0) target = $region25
  $region24: #{gcn_forward.5} parent=0 // pred_region
    _
  $region25: #{gcn_forward.5} parent=0 // pred_fallthru
    _
  // Predicated region
  $region26: #{gcn_forward.5} parent=0 // pred_check
    _
  $region27: #{gcn_forward.5} parent=0 // pred_check_branch
    %27 = sbr.rel (0) target = $region29
  $region28: #{gcn_forward.5} parent=0 // pred_region
    _
  $region29: #{gcn_forward.5} parent=0 // pred_fallthru
    _
  // Predicated region
  $region30: #{gcn_forward.5} parent=0 // pred_check
    _
  $region31: #{gcn_forward.5} parent=0 // pred_check_branch
    %29 = sbr.rel (0) target = $region33
  $region32: #{gcn_forward.5} parent=0 // pred_region
    _
  $region33: #{gcn_forward.5} parent=0 // pred_fallthru
    _
  // Predicated region
  $region34: #{gcn_forward.5} parent=0 // pred_check
    _
  $region35: #{gcn_forward.5} parent=0 // pred_check_branch
    %31 = sbr.rel (0) target = $region37
  $region36: #{gcn_forward.5} parent=0 // pred_region
    _
  $region37: #{gcn_forward.5} parent=0 // pred_fallthru
    _
  %v33 = vld [vmem:[%s0] sm:$0xf]
  %v34 = vld [vmem:[%s0 + $0x4] sm:$0xf]
  %v35 = vld [vmem:[%s0 + $0x8] sm:$0xf]
  %v36 = vld [vmem:[%s0 + $0xc] sm:$0xf]
  %v37 = vld [vmem:[%s0 + $0x10] sm:$0xf]
  %v38 = vld [vmem:[%s0 + $0x14] sm:$0xf]
  %v39 = vld [vmem:[%s0 + $0x18] sm:$0xf]
  %v40 = vld [vmem:[%s0 + $0x1c] sm:$0xf]
  %v41 = vld [vmem:[%s0 + $0x20] sm:$0xf]
  %v42 = vld [vmem:[%s0 + $0x24] sm:$0xf]
  %v43 = vld [vmem:[%s0 + $0x28] sm:$0xf]
  %v44 = vld [vmem:[%s0 + $0x2c] sm:$0xf]
  %v45 = vld [vmem:[%s0 + $0x30] sm:$0xf]
  %v46 = vld [vmem:[%s0 + $0x34] sm:$0xf]
  %v47 = vld [vmem:[%s0 + $0x38] sm:$0xf]
  %v48 = vld [vmem:[%s0 + $0x3c] sm:$0xf]
  %v49 = vld [vmem:[%s1] sm:$0xff]
  %v50 = vld [vmem:[%s1 + $0x8] sm:$0xff]
  %v51 = vld [vmem:[%s1 + $0x10] sm:$0xff]
  %v52 = vld [vmem:[%s1 + $0x18] sm:$0xff]
  %v53 = vld [vmem:[%s1 + $0x20] sm:$0xff]
  %v54 = vld [vmem:[%s1 + $0x28] sm:$0xff]
  %v55 = vld [vmem:[%s1 + $0x30] sm:$0xff]
  %v56 = vld [vmem:[%s1 + $0x38] sm:$0xff]
  %v57 = vld [vmem:[%s1 + $0x40] sm:$0xff]
  %v58 = vld [vmem:[%s1 + $0x48] sm:$0xff]
  %v59 = vld [vmem:[%s1 + $0x50] sm:$0xff]
  %v60 = vld [vmem:[%s1 + $0x58] sm:$0xff]
  %v61 = vld [vmem:[%s1 + $0x60] sm:$0xff]
  %v62 = vld [vmem:[%s1 + $0x68] sm:$0xff]
  %v63 = vld [vmem:[%s1 + $0x70] sm:$0xff]
  %v64 = vld [vmem:[%s1 + $0x78] sm:$0xff]
  %v65 = vpack.c.bf16 %v50, %v49
  %v66 = vpack.c.bf16 %v52, %v51
  %v67 = vpack.c.bf16 %v54, %v53
  %v68 = vpack.c.bf16 %v56, %v55
  %v69 = vpack.c.bf16 %v58, %v57
  %v70 = vpack.c.bf16 %v60, %v59
  %v71 = vpack.c.bf16 %v62, %v61
  %v72 = vpack.c.bf16 %v64, %v63
  %v73 = vld [vmem:[%s4] sm:$0x1]
  %v75 = vlaneseq
  %v76 = vshrl.u32 %v75, 7
  %v77 = vsub.s32 0, %v76
  %v78 = vrot.slane %v73, %v77
  %v96 = vunpack.c.l.b16 %v33
  %v97 = vunpack.c.l.b16 %v34
  %v98 = vunpack.c.l.b16 %v35
  %v99 = vunpack.c.l.b16 %v36
  %v100 = vunpack.c.l.b16 %v37
  %v101 = vunpack.c.l.b16 %v38
  %v102 = vunpack.c.l.b16 %v39
  %v103 = vunpack.c.l.b16 %v40
  %v104 = vunpack.c.l.b16 %v41
  %v105 = vunpack.c.l.b16 %v42
  %v106 = vunpack.c.l.b16 %v43
  %v107 = vunpack.c.l.b16 %v44
  %v108 = vunpack.c.l.b16 %v45
  %v109 = vunpack.c.l.b16 %v46
  %v110 = vunpack.c.l.b16 %v47
  %v111 = vunpack.c.l.b16 %v48
  %v112 = vpack.c.b16 %v97, %v96
  %v113 = vpack.c.b16 %v99, %v98
  %v114 = vpack.c.b16 %v101, %v100
  %v115 = vpack.c.b16 %v103, %v102
  %v116 = vpack.c.b16 %v105, %v104
  %v117 = vpack.c.b16 %v107, %v106
  %v118 = vpack.c.b16 %v109, %v108
  %v119 = vpack.c.b16 %v111, %v110
  %128 = vmatprep.subr.bf16.mxu0 0
  %129 = vmatpush1.bf16.msra.mxu0 %v72
  %130 = vmatprep.subr.bf16.mxu0 0
  %131 = vmatpush1.bf16.msra.mxu0 %v71
  %132 = vmatprep.subr.bf16.mxu0 0
  %133 = vmatpush1.bf16.msra.mxu0 %v70
  %134 = vmatprep.subr.bf16.mxu0 0
  %135 = vmatpush1.bf16.msra.mxu0 %v69
  %136 = vmatprep.subr.bf16.mxu0 0
  %137 = vmatpush1.bf16.msra.mxu0 %v68
  %138 = vmatprep.subr.bf16.mxu0 0
  %139 = vmatpush1.bf16.msra.mxu0 %v67
  %140 = vmatprep.subr.bf16.mxu0 0
  %141 = vmatpush1.bf16.msra.mxu0 %v66
  %142 = vmatprep.subr.bf16.mxu0 0
  %143 = vmatpush1.bf16.msra.mxu0 %v65
  %144 = vmatprep.subr.bf16.mxu0 0
  %145 = vmatpush2.bf16.msra.mxu0 0
  %146 = vmatprep.subr.bf16.mxu0 0
  %147 = vmatpush2.bf16.msra.mxu0 0
  %148 = vmatprep.subr.bf16.mxu0 0
  %149 = vmatpush2.bf16.msra.mxu0 0
  %150 = vmatprep.subr.bf16.mxu0 0
  %151 = vmatpush2.bf16.msra.mxu0 0
  %152 = vmatprep.subr.bf16.mxu0 0
  %153 = vmatpush2.bf16.msra.mxu0 0
  %154 = vmatprep.subr.bf16.mxu0 0
  %155 = vmatpush2.bf16.msra.mxu0 0
  %156 = vmatprep.subr.bf16.mxu0 0
  %157 = vmatpush2.bf16.msra.mxu0 0
  %158 = vmatprep.subr.bf16.mxu0 0
  %159 = vmatpush2.bf16.msra.mxu0 0
  %160 = vmatprep.mubr.bf16.mxu0 0
  %161 = vmatmul.mubr.bf16.gmra.mxu0 %v112
  %v162 = vpop.f32.mrf.mxu0
  %v163 = vadd.f32 %v78, %v162
  %v164 = vpop.f32.mrf.mxu0
  %v165 = vpop.f32.mrf.mxu0
  %v166 = vadd.f32 %v78, %v165
  %v167 = vpop.f32.mrf.mxu0
  %168 = vmatprep.mubr.bf16.mxu0 0
  %169 = vmatmul.mubr.bf16.gmra.mxu0 %v113
  %v170 = vpop.f32.mrf.mxu0
  %v171 = vadd.f32 %v78, %v170
  %v172 = vpop.f32.mrf.mxu0
  %v173 = vpop.f32.mrf.mxu0
  %v174 = vadd.f32 %v78, %v173
  %v175 = vpop.f32.mrf.mxu0
  %176 = vmatprep.mubr.bf16.mxu0 0
  %177 = vmatmul.mubr.bf16.gmra.mxu0 %v114
  %v178 = vpop.f32.mrf.mxu0
  %v179 = vadd.f32 %v78, %v178
  %v180 = vpop.f32.mrf.mxu0
  %v181 = vpop.f32.mrf.mxu0
  %v182 = vadd.f32 %v78, %v181
  %v183 = vpop.f32.mrf.mxu0
  %184 = vmatprep.mubr.bf16.mxu0 0
  %185 = vmatmul.mubr.bf16.gmra.mxu0 %v115
  %v186 = vpop.f32.mrf.mxu0
  %v187 = vadd.f32 %v78, %v186
  %v188 = vpop.f32.mrf.mxu0
  %v189 = vpop.f32.mrf.mxu0
  %v190 = vadd.f32 %v78, %v189
  %v191 = vpop.f32.mrf.mxu0
  %192 = vmatprep.mubr.bf16.mxu0 0
  %193 = vmatmul.mubr.bf16.gmra.mxu0 %v116
  %v194 = vpop.f32.mrf.mxu0
  %v195 = vadd.f32 %v78, %v194
  %v196 = vpop.f32.mrf.mxu0
  %v197 = vpop.f32.mrf.mxu0
  %v198 = vadd.f32 %v78, %v197
  %v199 = vpop.f32.mrf.mxu0
  %200 = vmatprep.mubr.bf16.mxu0 0
  %201 = vmatmul.mubr.bf16.gmra.mxu0 %v117
  %v202 = vpop.f32.mrf.mxu0
  %v203 = vadd.f32 %v78, %v202
  %v204 = vpop.f32.mrf.mxu0
  %v205 = vpop.f32.mrf.mxu0
  %v206 = vadd.f32 %v78, %v205
  %v207 = vpop.f32.mrf.mxu0
  %208 = vmatprep.mubr.bf16.mxu0 0
  %209 = vmatmul.mubr.bf16.gmra.mxu0 %v118
  %v210 = vpop.f32.mrf.mxu0
  %v211 = vadd.f32 %v78, %v210
  %v212 = vpop.f32.mrf.mxu0
  %v213 = vpop.f32.mrf.mxu0
  %v214 = vadd.f32 %v78, %v213
  %v215 = vpop.f32.mrf.mxu0
  %216 = vmatprep.mubr.bf16.mxu0 0
  %217 = vmatmul.mubr.bf16.gmra.mxu0 %v119
  %v218 = vpop.f32.mrf.mxu0
  %v219 = vadd.f32 %v78, %v218
  %v220 = vpop.f32.mrf.mxu0
  %v221 = vpop.f32.mrf.mxu0
  %v222 = vadd.f32 %v78, %v221
  %v223 = vpop.f32.mrf.mxu0
  %224 = vdwg.mxu0
  %v225 = vmax.f32 %v163, 0.0
  %v226 = vmax.f32 %v166, 0.0
  %v227 = vmax.f32 %v171, 0.0
  %v228 = vmax.f32 %v174, 0.0
  %v229 = vmax.f32 %v179, 0.0
  %v230 = vmax.f32 %v182, 0.0
  %v231 = vmax.f32 %v187, 0.0
  %v232 = vmax.f32 %v190, 0.0
  %v233 = vmax.f32 %v195, 0.0
  %v234 = vmax.f32 %v198, 0.0
  %v235 = vmax.f32 %v203, 0.0
  %v236 = vmax.f32 %v206, 0.0
  %v237 = vmax.f32 %v211, 0.0
  %v238 = vmax.f32 %v214, 0.0
  %v239 = vmax.f32 %v219, 0.0
  %v240 = vmax.f32 %v222, 0.0
  %v241 = vld [vmem:[%s7] sm:$0xff]
  %v242 = vld [vmem:[%s7 + $0x8] sm:$0xff]
  %v243 = vld [vmem:[%s7 + $0x10] sm:$0xff]
  %v244 = vld [vmem:[%s7 + $0x18] sm:$0xff]
  %v245 = vld [vmem:[%s7 + $0x20] sm:$0xff]
  %v246 = vld [vmem:[%s7 + $0x28] sm:$0xff]
  %v247 = vld [vmem:[%s7 + $0x30] sm:$0xff]
  %v248 = vld [vmem:[%s7 + $0x38] sm:$0xff]
  %v249 = vld [vmem:[%s7 + $0x40] sm:$0xff]
  %v250 = vld [vmem:[%s7 + $0x48] sm:$0xff]
  %v251 = vld [vmem:[%s7 + $0x50] sm:$0xff]
  %v252 = vld [vmem:[%s7 + $0x58] sm:$0xff]
  %v253 = vld [vmem:[%s7 + $0x60] sm:$0xff]
  %v254 = vld [vmem:[%s7 + $0x68] sm:$0xff]
  %v255 = vld [vmem:[%s7 + $0x70] sm:$0xff]
  %v256 = vld [vmem:[%s7 + $0x78] sm:$0xff]
  %v257 = vmul.f32 %v225, %v241
  %v258 = vmul.f32 %v226, %v242
  %v259 = vmul.f32 %v227, %v243
  %v260 = vmul.f32 %v228, %v244
  %v261 = vmul.f32 %v229, %v245
  %v262 = vmul.f32 %v230, %v246
  %v263 = vmul.f32 %v231, %v247
  %v264 = vmul.f32 %v232, %v248
  %v265 = vmul.f32 %v233, %v249
  %v266 = vmul.f32 %v234, %v250
  %v267 = vmul.f32 %v235, %v251
  %v268 = vmul.f32 %v236, %v252
  %v269 = vmul.f32 %v237, %v253
  %v270 = vmul.f32 %v238, %v254
  %v271 = vmul.f32 %v239, %v255
  %v272 = vmul.f32 %v240, %v256
  %v273 = vld [vmem:[%s2] sm:$0xff]
  %v274 = vld [vmem:[%s2 + $0x8] sm:$0xff]
  %v275 = vld [vmem:[%s2 + $0x10] sm:$0xff]
  %v276 = vld [vmem:[%s2 + $0x18] sm:$0xff]
  %vm277 = vcmask 261120
  %v279 = vsel %vm277, %v257, 0
  %v282 = vsel %vm277, %v258, 0
  %v285 = vsel %vm277, %v259, 0
  %v288 = vsel %vm277, %v260, 0
  %v291 = vsel %vm277, %v261, 0
  %v294 = vsel %vm277, %v262, 0
  %v297 = vsel %vm277, %v263, 0
  %v300 = vsel %vm277, %v264, 0
  %v303 = vsel %vm277, %v265, 0
  %v306 = vsel %vm277, %v266, 0
  %v309 = vsel %vm277, %v267, 0
  %v312 = vsel %vm277, %v268, 0
  %v315 = vsel %vm277, %v269, 0
  %v318 = vsel %vm277, %v270, 0
  %v321 = vsel %vm277, %v271, 0
  %v324 = vsel %vm277, %v272, 0
  %326 = vmatprep.subr.mxu0 0.0
  %327 = vmatpush1.msra.mxu0 0.0
  %328 = vmatprep.subr.mxu0 0.0
  %329 = vmatpush1.msra.mxu0 0.0
  %330 = vmatprep.subr.mxu0 0.0
  %331 = vmatpush1.msra.mxu0 0.0
  %332 = vmatprep.subr.mxu0 0.0
  %333 = vmatpush1.msra.mxu0 0.0
  %334 = vmatprep.subr.mxu0 0.0
  %335 = vmatpush1.msra.mxu0 0.0
  %336 = vmatprep.subr.mxu0 0.0
  %337 = vmatpush1.msra.mxu0 0.0
  %338 = vmatprep.subr.mxu0 0.0
  %339 = vmatpush1.msra.mxu0 0.0
  %340 = vmatprep.subr.mxu0 0.0
  %341 = vmatpush1.msra.mxu0 0.0
  %342 = vmatprep.subr.mxu0 0.0
  %343 = vmatpush1.msra.mxu0 0.0
  %344 = vmatprep.subr.mxu0 0.0
  %345 = vmatpush1.msra.mxu0 0.0
  %346 = vmatprep.subr.mxu0 0.0
  %347 = vmatpush1.msra.mxu0 0.0
  %348 = vmatprep.subr.mxu0 0.0
  %349 = vmatpush1.msra.mxu0 0.0
  %350 = vmatprep.subr.mxu0 0.0
  %351 = vmatpush1.msra.mxu0 %v276
  %352 = vmatprep.subr.mxu0 0.0
  %353 = vmatpush1.msra.mxu0 %v275
  %354 = vmatprep.subr.mxu0 0.0
  %355 = vmatpush1.msra.mxu0 %v274
  %356 = vmatprep.subr.mxu0 0.0
  %357 = vmatpush1.msra.mxu0 %v273
  %358 = vmatprep.subr.mxu0 0.0
  %359 = vmatpush2.msra.mxu0 0.0
  %360 = vmatprep.subr.mxu0 0.0
  %361 = vmatpush2.msra.mxu0 0.0
  %362 = vmatprep.subr.mxu0 0.0
  %363 = vmatpush2.msra.mxu0 0.0
  %364 = vmatprep.subr.mxu0 0.0
  %365 = vmatpush2.msra.mxu0 0.0
  %366 = vmatprep.subr.mxu0 0.0
  %367 = vmatpush2.msra.mxu0 0.0
  %368 = vmatprep.subr.mxu0 0.0
  %369 = vmatpush2.msra.mxu0 0.0
  %370 = vmatprep.subr.mxu0 0.0
  %371 = vmatpush2.msra.mxu0 0.0
  %372 = vmatprep.subr.mxu0 0.0
  %373 = vmatpush2.msra.mxu0 0.0
  %374 = vmatprep.subr.mxu0 0.0
  %375 = vmatpush2.msra.mxu0 0.0
  %376 = vmatprep.subr.mxu0 0.0
  %377 = vmatpush2.msra.mxu0 0.0
  %378 = vmatprep.subr.mxu0 0.0
  %379 = vmatpush2.msra.mxu0 0.0
  %380 = vmatprep.subr.mxu0 0.0
  %381 = vmatpush2.msra.mxu0 0.0
  %382 = vmatprep.subr.mxu0 0.0
  %383 = vmatpush2.msra.mxu0 0.0
  %384 = vmatprep.subr.mxu0 0.0
  %385 = vmatpush2.msra.mxu0 0.0
  %386 = vmatprep.subr.mxu0 0.0
  %387 = vmatpush2.msra.mxu0 0.0
  %388 = vmatprep.subr.mxu0 0.0
  %389 = vmatpush2.msra.mxu0 0.0
  %390 = vmatprep.mubr.f32.mxu0 0.0
  %391 = vmatmul.mubr.f32.gmra.mxu0 %v279
  %v392 = vpop.f32.mrf.mxu0
  %v393 = vadd.f32 0.0, %v392
  %v394 = vpop.f32.mrf.mxu0
  %395 = vmatprep.mubr.f32.mxu0 0.0
  %396 = vmatmul.mubr.f32.gmra.mxu0 %v282
  %v397 = vpop.f32.mrf.mxu0
  %v398 = vadd.f32 0.0, %v397
  %v399 = vpop.f32.mrf.mxu0
  %400 = vmatprep.mubr.f32.mxu0 0.0
  %401 = vmatmul.mubr.f32.gmra.mxu0 %v285
  %v402 = vpop.f32.mrf.mxu0
  %v403 = vadd.f32 0.0, %v402
  %v404 = vpop.f32.mrf.mxu0
  %405 = vmatprep.mubr.f32.mxu0 0.0
  %406 = vmatmul.mubr.f32.gmra.mxu0 %v288
  %v407 = vpop.f32.mrf.mxu0
  %v408 = vadd.f32 0.0, %v407
  %v409 = vpop.f32.mrf.mxu0
  %410 = vmatprep.mubr.f32.mxu0 0.0
  %411 = vmatmul.mubr.f32.gmra.mxu0 %v291
  %v412 = vpop.f32.mrf.mxu0
  %v413 = vadd.f32 0.0, %v412
  %v414 = vpop.f32.mrf.mxu0
  %415 = vmatprep.mubr.f32.mxu0 0.0
  %416 = vmatmul.mubr.f32.gmra.mxu0 %v294
  %v417 = vpop.f32.mrf.mxu0
  %v418 = vadd.f32 0.0, %v417
  %v419 = vpop.f32.mrf.mxu0
  %420 = vmatprep.mubr.f32.mxu0 0.0
  %421 = vmatmul.mubr.f32.gmra.mxu0 %v297
  %v422 = vpop.f32.mrf.mxu0
  %v423 = vadd.f32 0.0, %v422
  %v424 = vpop.f32.mrf.mxu0
  %425 = vmatprep.mubr.f32.mxu0 0.0
  %426 = vmatmul.mubr.f32.gmra.mxu0 %v300
  %v427 = vpop.f32.mrf.mxu0
  %v428 = vadd.f32 0.0, %v427
  %v429 = vpop.f32.mrf.mxu0
  %430 = vmatprep.mubr.f32.mxu0 0.0
  %431 = vmatmul.mubr.f32.gmra.mxu0 %v303
  %v432 = vpop.f32.mrf.mxu0
  %v433 = vadd.f32 0.0, %v432
  %v434 = vpop.f32.mrf.mxu0
  %435 = vmatprep.mubr.f32.mxu0 0.0
  %436 = vmatmul.mubr.f32.gmra.mxu0 %v306
  %v437 = vpop.f32.mrf.mxu0
  %v438 = vadd.f32 0.0, %v437
  %v439 = vpop.f32.mrf.mxu0
  %440 = vmatprep.mubr.f32.mxu0 0.0
  %441 = vmatmul.mubr.f32.gmra.mxu0 %v309
  %v442 = vpop.f32.mrf.mxu0
  %v443 = vadd.f32 0.0, %v442
  %v444 = vpop.f32.mrf.mxu0
  %445 = vmatprep.mubr.f32.mxu0 0.0
  %446 = vmatmul.mubr.f32.gmra.mxu0 %v312
  %v447 = vpop.f32.mrf.mxu0
  %v448 = vadd.f32 0.0, %v447
  %v449 = vpop.f32.mrf.mxu0
  %450 = vmatprep.mubr.f32.mxu0 0.0
  %451 = vmatmul.mubr.f32.gmra.mxu0 %v315
  %v452 = vpop.f32.mrf.mxu0
  %v453 = vadd.f32 0.0, %v452
  %v454 = vpop.f32.mrf.mxu0
  %455 = vmatprep.mubr.f32.mxu0 0.0
  %456 = vmatmul.mubr.f32.gmra.mxu0 %v318
  %v457 = vpop.f32.mrf.mxu0
  %v458 = vadd.f32 0.0, %v457
  %v459 = vpop.f32.mrf.mxu0
  %460 = vmatprep.mubr.f32.mxu0 0.0
  %461 = vmatmul.mubr.f32.gmra.mxu0 %v321
  %v462 = vpop.f32.mrf.mxu0
  %v463 = vadd.f32 0.0, %v462
  %v464 = vpop.f32.mrf.mxu0
  %465 = vmatprep.mubr.f32.mxu0 0.0
  %466 = vmatmul.mubr.f32.gmra.mxu0 %v324
  %v467 = vpop.f32.mrf.mxu0
  %v468 = vadd.f32 0.0, %v467
  %v469 = vpop.f32.mrf.mxu0
  %470 = vdwg.mxu0
  %v471 = vpack.c.bf16 %v398, %v393
  %v472 = vpack.c.bf16 %v408, %v403
  %v473 = vpack.c.bf16 %v418, %v413
  %v474 = vpack.c.bf16 %v428, %v423
  %v475 = vpack.c.bf16 %v438, %v433
  %v476 = vpack.c.bf16 %v448, %v443
  %v477 = vpack.c.bf16 %v458, %v453
  %v478 = vpack.c.bf16 %v468, %v463
  %v479 = vld [vmem:[%s5] sm:$0x1]
  %v481 = vlaneseq
  %v482 = vshrl.u32 %v481, 7
  %v483 = vsub.s32 0, %v482
  %v484 = vrot.slane %v479, %v483
  %486 = vmatprep.subr.bf16.mxu0 0
  %487 = vmatpush1.bf16.msra.mxu0 %v478
  %488 = vmatprep.subr.bf16.mxu0 0
  %489 = vmatpush1.bf16.msra.mxu0 %v477
  %490 = vmatprep.subr.bf16.mxu0 0
  %491 = vmatpush1.bf16.msra.mxu0 %v476
  %492 = vmatprep.subr.bf16.mxu0 0
  %493 = vmatpush1.bf16.msra.mxu0 %v475
  %494 = vmatprep.subr.bf16.mxu0 0
  %495 = vmatpush1.bf16.msra.mxu0 %v474
  %496 = vmatprep.subr.bf16.mxu0 0
  %497 = vmatpush1.bf16.msra.mxu0 %v473
  %498 = vmatprep.subr.bf16.mxu0 0
  %499 = vmatpush1.bf16.msra.mxu0 %v472
  %500 = vmatprep.subr.bf16.mxu0 0
  %501 = vmatpush1.bf16.msra.mxu0 %v471
  %502 = vmatprep.subr.bf16.mxu0 0
  %503 = vmatpush2.bf16.msra.mxu0 0
  %504 = vmatprep.subr.bf16.mxu0 0
  %505 = vmatpush2.bf16.msra.mxu0 0
  %506 = vmatprep.subr.bf16.mxu0 0
  %507 = vmatpush2.bf16.msra.mxu0 0
  %508 = vmatprep.subr.bf16.mxu0 0
  %509 = vmatpush2.bf16.msra.mxu0 0
  %510 = vmatprep.subr.bf16.mxu0 0
  %511 = vmatpush2.bf16.msra.mxu0 0
  %512 = vmatprep.subr.bf16.mxu0 0
  %513 = vmatpush2.bf16.msra.mxu0 0
  %514 = vmatprep.subr.bf16.mxu0 0
  %515 = vmatpush2.bf16.msra.mxu0 0
  %516 = vmatprep.subr.bf16.mxu0 0
  %517 = vmatpush2.bf16.msra.mxu0 0
  %518 = vmatprep.mubr.bf16.mxu0 0
  %519 = vmatmul.mubr.bf16.gmra.mxu0 %v112
  %v520 = vpop.f32.mrf.mxu0
  %v521 = vadd.f32 %v484, %v520
  %v522 = vpop.f32.mrf.mxu0
  %v523 = vpop.f32.mrf.mxu0
  %v524 = vadd.f32 %v484, %v523
  %v525 = vpop.f32.mrf.mxu0
  %526 = vmatprep.mubr.bf16.mxu0 0
  %527 = vmatmul.mubr.bf16.gmra.mxu0 %v113
  %v528 = vpop.f32.mrf.mxu0
  %v529 = vadd.f32 %v484, %v528
  %v530 = vpop.f32.mrf.mxu0
  %v531 = vpop.f32.mrf.mxu0
  %v532 = vadd.f32 %v484, %v531
  %v533 = vpop.f32.mrf.mxu0
  %534 = vmatprep.mubr.bf16.mxu0 0
  %535 = vmatmul.mubr.bf16.gmra.mxu0 %v114
  %v536 = vpop.f32.mrf.mxu0
  %v537 = vadd.f32 %v484, %v536
  %v538 = vpop.f32.mrf.mxu0
  %v539 = vpop.f32.mrf.mxu0
  %v540 = vadd.f32 %v484, %v539
  %v541 = vpop.f32.mrf.mxu0
  %542 = vmatprep.mubr.bf16.mxu0 0
  %543 = vmatmul.mubr.bf16.gmra.mxu0 %v115
  %v544 = vpop.f32.mrf.mxu0
  %v545 = vadd.f32 %v484, %v544
  %v546 = vpop.f32.mrf.mxu0
  %v547 = vpop.f32.mrf.mxu0
  %v548 = vadd.f32 %v484, %v547
  %v549 = vpop.f32.mrf.mxu0
  %550 = vmatprep.mubr.bf16.mxu0 0
  %551 = vmatmul.mubr.bf16.gmra.mxu0 %v116
  %v552 = vpop.f32.mrf.mxu0
  %v553 = vadd.f32 %v484, %v552
  %v554 = vpop.f32.mrf.mxu0
  %v555 = vpop.f32.mrf.mxu0
  %v556 = vadd.f32 %v484, %v555
  %v557 = vpop.f32.mrf.mxu0
  %558 = vmatprep.mubr.bf16.mxu0 0
  %559 = vmatmul.mubr.bf16.gmra.mxu0 %v117
  %v560 = vpop.f32.mrf.mxu0
  %v561 = vadd.f32 %v484, %v560
  %v562 = vpop.f32.mrf.mxu0
  %v563 = vpop.f32.mrf.mxu0
  %v564 = vadd.f32 %v484, %v563
  %v565 = vpop.f32.mrf.mxu0
  %566 = vmatprep.mubr.bf16.mxu0 0
  %567 = vmatmul.mubr.bf16.gmra.mxu0 %v118
  %v568 = vpop.f32.mrf.mxu0
  %v569 = vadd.f32 %v484, %v568
  %v570 = vpop.f32.mrf.mxu0
  %v571 = vpop.f32.mrf.mxu0
  %v572 = vadd.f32 %v484, %v571
  %v573 = vpop.f32.mrf.mxu0
  %574 = vmatprep.mubr.bf16.mxu0 0
  %575 = vmatmul.mubr.bf16.gmra.mxu0 %v119
  %v576 = vpop.f32.mrf.mxu0
  %v577 = vadd.f32 %v484, %v576
  %v578 = vpop.f32.mrf.mxu0
  %v579 = vpop.f32.mrf.mxu0
  %v580 = vadd.f32 %v484, %v579
  %v581 = vpop.f32.mrf.mxu0
  %582 = vdwg.mxu0
  %v583 = vld [vmem:[%s8] sm:$0xff]
  %v584 = vld [vmem:[%s8 + $0x8] sm:$0xff]
  %v585 = vld [vmem:[%s8 + $0x10] sm:$0xff]
  %v586 = vld [vmem:[%s8 + $0x18] sm:$0xff]
  %v587 = vld [vmem:[%s8 + $0x20] sm:$0xff]
  %v588 = vld [vmem:[%s8 + $0x28] sm:$0xff]
  %v589 = vld [vmem:[%s8 + $0x30] sm:$0xff]
  %v590 = vld [vmem:[%s8 + $0x38] sm:$0xff]
  %v591 = vld [vmem:[%s8 + $0x40] sm:$0xff]
  %v592 = vld [vmem:[%s8 + $0x48] sm:$0xff]
  %v593 = vld [vmem:[%s8 + $0x50] sm:$0xff]
  %v594 = vld [vmem:[%s8 + $0x58] sm:$0xff]
  %v595 = vld [vmem:[%s8 + $0x60] sm:$0xff]
  %v596 = vld [vmem:[%s8 + $0x68] sm:$0xff]
  %v597 = vld [vmem:[%s8 + $0x70] sm:$0xff]
  %v598 = vld [vmem:[%s8 + $0x78] sm:$0xff]
  %v599 = vmul.f32 %v521, %v583
  %v600 = vmul.f32 %v524, %v584
  %v601 = vmul.f32 %v529, %v585
  %v602 = vmul.f32 %v532, %v586
  %v603 = vmul.f32 %v537, %v587
  %v604 = vmul.f32 %v540, %v588
  %v605 = vmul.f32 %v545, %v589
  %v606 = vmul.f32 %v548, %v590
  %v607 = vmul.f32 %v553, %v591
  %v608 = vmul.f32 %v556, %v592
  %v609 = vmul.f32 %v561, %v593
  %v610 = vmul.f32 %v564, %v594
  %v611 = vmul.f32 %v569, %v595
  %v612 = vmul.f32 %v572, %v596
  %v613 = vmul.f32 %v577, %v597
  %v614 = vmul.f32 %v580, %v598
  %v615 = vld [vmem:[%s3] sm:$0xff]
  %v616 = vld [vmem:[%s3 + $0x8] sm:$0xff]
  %v617 = vld [vmem:[%s3 + $0x10] sm:$0x3]
  %vm618 = vcmask 146432
  %v620 = vsel %vm618, %v599, 0
  %v623 = vsel %vm618, %v600, 0
  %v626 = vsel %vm618, %v601, 0
  %v629 = vsel %vm618, %v602, 0
  %v632 = vsel %vm618, %v603, 0
  %v635 = vsel %vm618, %v604, 0
  %v638 = vsel %vm618, %v605, 0
  %v641 = vsel %vm618, %v606, 0
  %v644 = vsel %vm618, %v607, 0
  %v647 = vsel %vm618, %v608, 0
  %v650 = vsel %vm618, %v609, 0
  %v653 = vsel %vm618, %v610, 0
  %v656 = vsel %vm618, %v611, 0
  %v659 = vsel %vm618, %v612, 0
  %v662 = vsel %vm618, %v613, 0
  %v665 = vsel %vm618, %v614, 0
  %vm667 = vcmask 1041408
  %v669 = vsel %vm667, %v617, 0
  %671 = vmatprep.subr.mxu0 0.0
  %672 = vmatpush1.msra.mxu0 0.0
  %673 = vmatprep.subr.mxu0 0.0
  %674 = vmatpush1.msra.mxu0 0.0
  %675 = vmatprep.subr.mxu0 0.0
  %676 = vmatpush1.msra.mxu0 0.0
  %677 = vmatprep.subr.mxu0 0.0
  %678 = vmatpush1.msra.mxu0 0.0
  %679 = vmatprep.subr.mxu0 0.0
  %680 = vmatpush1.msra.mxu0 0.0
  %681 = vmatprep.subr.mxu0 0.0
  %682 = vmatpush1.msra.mxu0 0.0
  %683 = vmatprep.subr.mxu0 0.0
  %684 = vmatpush1.msra.mxu0 0.0
  %685 = vmatprep.subr.mxu0 0.0
  %686 = vmatpush1.msra.mxu0 0.0
  %687 = vmatprep.subr.mxu0 0.0
  %688 = vmatpush1.msra.mxu0 0.0
  %689 = vmatprep.subr.mxu0 0.0
  %690 = vmatpush1.msra.mxu0 0.0
  %691 = vmatprep.subr.mxu0 0.0
  %692 = vmatpush1.msra.mxu0 0.0
  %693 = vmatprep.subr.mxu0 0.0
  %694 = vmatpush1.msra.mxu0 0.0
  %695 = vmatprep.subr.mxu0 0.0
  %696 = vmatpush1.msra.mxu0 0.0
  %697 = vmatprep.subr.mxu0 0.0
  %698 = vmatpush1.msra.mxu0 %v669
  %699 = vmatprep.subr.mxu0 0.0
  %700 = vmatpush1.msra.mxu0 %v616
  %701 = vmatprep.subr.mxu0 0.0
  %702 = vmatpush1.msra.mxu0 %v615
  %703 = vmatprep.subr.mxu0 0.0
  %704 = vmatpush2.msra.mxu0 0.0
  %705 = vmatprep.subr.mxu0 0.0
  %706 = vmatpush2.msra.mxu0 0.0
  %707 = vmatprep.subr.mxu0 0.0
  %708 = vmatpush2.msra.mxu0 0.0
  %709 = vmatprep.subr.mxu0 0.0
  %710 = vmatpush2.msra.mxu0 0.0
  %711 = vmatprep.subr.mxu0 0.0
  %712 = vmatpush2.msra.mxu0 0.0
  %713 = vmatprep.subr.mxu0 0.0
  %714 = vmatpush2.msra.mxu0 0.0
  %715 = vmatprep.subr.mxu0 0.0
  %716 = vmatpush2.msra.mxu0 0.0
  %717 = vmatprep.subr.mxu0 0.0
  %718 = vmatpush2.msra.mxu0 0.0
  %719 = vmatprep.subr.mxu0 0.0
  %720 = vmatpush2.msra.mxu0 0.0
  %721 = vmatprep.subr.mxu0 0.0
  %722 = vmatpush2.msra.mxu0 0.0
  %723 = vmatprep.subr.mxu0 0.0
  %724 = vmatpush2.msra.mxu0 0.0
  %725 = vmatprep.subr.mxu0 0.0
  %726 = vmatpush2.msra.mxu0 0.0
  %727 = vmatprep.subr.mxu0 0.0
  %728 = vmatpush2.msra.mxu0 0.0
  %729 = vmatprep.subr.mxu0 0.0
  %730 = vmatpush2.msra.mxu0 0.0
  %731 = vmatprep.subr.mxu0 0.0
  %732 = vmatpush2.msra.mxu0 0.0
  %733 = vmatprep.subr.mxu0 0.0
  %734 = vmatpush2.msra.mxu0 0.0
  %735 = vmatprep.mubr.f32.mxu0 0.0
  %736 = vmatmul.mubr.f32.gmra.mxu0 %v620
  %v737 = vpop.f32.mrf.mxu0
  %v738 = vadd.f32 0.0, %v737
  %v739 = vpop.f32.mrf.mxu0
  %740 = vmatprep.mubr.f32.mxu0 0.0
  %741 = vmatmul.mubr.f32.gmra.mxu0 %v623
  %v742 = vpop.f32.mrf.mxu0
  %v743 = vadd.f32 0.0, %v742
  %v744 = vpop.f32.mrf.mxu0
  %745 = vmatprep.mubr.f32.mxu0 0.0
  %746 = vmatmul.mubr.f32.gmra.mxu0 %v626
  %v747 = vpop.f32.mrf.mxu0
  %v748 = vadd.f32 0.0, %v747
  %v749 = vpop.f32.mrf.mxu0
  %750 = vmatprep.mubr.f32.mxu0 0.0
  %751 = vmatmul.mubr.f32.gmra.mxu0 %v629
  %v752 = vpop.f32.mrf.mxu0
  %v753 = vadd.f32 0.0, %v752
  %v754 = vpop.f32.mrf.mxu0
  %755 = vmatprep.mubr.f32.mxu0 0.0
  %756 = vmatmul.mubr.f32.gmra.mxu0 %v632
  %v757 = vpop.f32.mrf.mxu0
  %v758 = vadd.f32 0.0, %v757
  %v759 = vpop.f32.mrf.mxu0
  %760 = vmatprep.mubr.f32.mxu0 0.0
  %761 = vmatmul.mubr.f32.gmra.mxu0 %v635
  %v762 = vpop.f32.mrf.mxu0
  %v763 = vadd.f32 0.0, %v762
  %v764 = vpop.f32.mrf.mxu0
  %765 = vmatprep.mubr.f32.mxu0 0.0
  %766 = vmatmul.mubr.f32.gmra.mxu0 %v638
  %v767 = vpop.f32.mrf.mxu0
  %v768 = vadd.f32 0.0, %v767
  %v769 = vpop.f32.mrf.mxu0
  %770 = vmatprep.mubr.f32.mxu0 0.0
  %771 = vmatmul.mubr.f32.gmra.mxu0 %v641
  %v772 = vpop.f32.mrf.mxu0
  %v773 = vadd.f32 0.0, %v772
  %v774 = vpop.f32.mrf.mxu0
  %775 = vmatprep.mubr.f32.mxu0 0.0
  %776 = vmatmul.mubr.f32.gmra.mxu0 %v644
  %v777 = vpop.f32.mrf.mxu0
  %v778 = vadd.f32 0.0, %v777
  %v779 = vpop.f32.mrf.mxu0
  %780 = vmatprep.mubr.f32.mxu0 0.0
  %781 = vmatmul.mubr.f32.gmra.mxu0 %v647
  %v782 = vpop.f32.mrf.mxu0
  %v783 = vadd.f32 0.0, %v782
  %v784 = vpop.f32.mrf.mxu0
  %785 = vmatprep.mubr.f32.mxu0 0.0
  %786 = vmatmul.mubr.f32.gmra.mxu0 %v650
  %v787 = vpop.f32.mrf.mxu0
  %v788 = vadd.f32 0.0, %v787
  %v789 = vpop.f32.mrf.mxu0
  %790 = vmatprep.mubr.f32.mxu0 0.0
  %791 = vmatmul.mubr.f32.gmra.mxu0 %v653
  %v792 = vpop.f32.mrf.mxu0
  %v793 = vadd.f32 0.0, %v792
  %v794 = vpop.f32.mrf.mxu0
  %795 = vmatprep.mubr.f32.mxu0 0.0
  %796 = vmatmul.mubr.f32.gmra.mxu0 %v656
  %v797 = vpop.f32.mrf.mxu0
  %v798 = vadd.f32 0.0, %v797
  %v799 = vpop.f32.mrf.mxu0
  %800 = vmatprep.mubr.f32.mxu0 0.0
  %801 = vmatmul.mubr.f32.gmra.mxu0 %v659
  %v802 = vpop.f32.mrf.mxu0
  %v803 = vadd.f32 0.0, %v802
  %v804 = vpop.f32.mrf.mxu0
  %805 = vmatprep.mubr.f32.mxu0 0.0
  %806 = vmatmul.mubr.f32.gmra.mxu0 %v662
  %v807 = vpop.f32.mrf.mxu0
  %v808 = vadd.f32 0.0, %v807
  %v809 = vpop.f32.mrf.mxu0
  %810 = vmatprep.mubr.f32.mxu0 0.0
  %811 = vmatmul.mubr.f32.gmra.mxu0 %v665
  %v812 = vpop.f32.mrf.mxu0
  %v813 = vadd.f32 0.0, %v812
  %v814 = vpop.f32.mrf.mxu0
  %815 = vdwg.mxu0
  %v816 = vpack.c.bf16 %v743, %v738
  %v817 = vpack.c.bf16 %v753, %v748
  %v818 = vpack.c.bf16 %v763, %v758
  %v819 = vpack.c.bf16 %v773, %v768
  %v820 = vpack.c.bf16 %v783, %v778
  %v821 = vpack.c.bf16 %v793, %v788
  %v822 = vpack.c.bf16 %v803, %v798
  %v823 = vpack.c.bf16 %v813, %v808
  %v824 = vld [vmem:[%s6] sm:$0x1]
  %v826 = vlaneseq
  %v827 = vshrl.u32 %v826, 7
  %v828 = vsub.s32 0, %v827
  %v829 = vrot.slane %v824, %v828
  %831 = vmatprep.subr.bf16.mxu0 0
  %832 = vmatpush1.bf16.msra.mxu0 %v823
  %833 = vmatprep.subr.bf16.mxu0 0
  %834 = vmatpush1.bf16.msra.mxu0 %v822
  %835 = vmatprep.subr.bf16.mxu0 0
  %836 = vmatpush1.bf16.msra.mxu0 %v821
  %837 = vmatprep.subr.bf16.mxu0 0
  %838 = vmatpush1.bf16.msra.mxu0 %v820
  %839 = vmatprep.subr.bf16.mxu0 0
  %840 = vmatpush1.bf16.msra.mxu0 %v819
  %841 = vmatprep.subr.bf16.mxu0 0
  %842 = vmatpush1.bf16.msra.mxu0 %v818
  %843 = vmatprep.subr.bf16.mxu0 0
  %844 = vmatpush1.bf16.msra.mxu0 %v817
  %845 = vmatprep.subr.bf16.mxu0 0
  %846 = vmatpush1.bf16.msra.mxu0 %v816
  %847 = vmatprep.subr.bf16.mxu0 0
  %848 = vmatpush2.bf16.msra.mxu0 0
  %849 = vmatprep.subr.bf16.mxu0 0
  %850 = vmatpush2.bf16.msra.mxu0 0
  %851 = vmatprep.subr.bf16.mxu0 0
  %852 = vmatpush2.bf16.msra.mxu0 0
  %853 = vmatprep.subr.bf16.mxu0 0
  %854 = vmatpush2.bf16.msra.mxu0 0
  %855 = vmatprep.subr.bf16.mxu0 0
  %856 = vmatpush2.bf16.msra.mxu0 0
  %857 = vmatprep.subr.bf16.mxu0 0
  %858 = vmatpush2.bf16.msra.mxu0 0
  %859 = vmatprep.subr.bf16.mxu0 0
  %860 = vmatpush2.bf16.msra.mxu0 0
  %861 = vmatprep.subr.bf16.mxu0 0
  %862 = vmatpush2.bf16.msra.mxu0 0
  %863 = vmatprep.mubr.bf16.mxu0 0
  %864 = vmatmul.mubr.bf16.gmra.mxu0 %v112
  %v865 = vpop.f32.mrf.mxu0
  %v866 = vadd.f32 %v829, %v865
  %v867 = vpop.f32.mrf.mxu0
  %v868 = vpop.f32.mrf.mxu0
  %v869 = vadd.f32 %v829, %v868
  %v870 = vpop.f32.mrf.mxu0
  %871 = vmatprep.mubr.bf16.mxu0 0
  %872 = vmatmul.mubr.bf16.gmra.mxu0 %v113
  %v873 = vpop.f32.mrf.mxu0
  %v874 = vadd.f32 %v829, %v873
  %v875 = vpop.f32.mrf.mxu0
  %v876 = vpop.f32.mrf.mxu0
  %v877 = vadd.f32 %v829, %v876
  %v878 = vpop.f32.mrf.mxu0
  %879 = vmatprep.mubr.bf16.mxu0 0
  %880 = vmatmul.mubr.bf16.gmra.mxu0 %v114
  %v881 = vpop.f32.mrf.mxu0
  %v882 = vadd.f32 %v829, %v881
  %v883 = vpop.f32.mrf.mxu0
  %v884 = vpop.f32.mrf.mxu0
  %v885 = vadd.f32 %v829, %v884
  %v886 = vpop.f32.mrf.mxu0
  %887 = vmatprep.mubr.bf16.mxu0 0
  %888 = vmatmul.mubr.bf16.gmra.mxu0 %v115
  %v889 = vpop.f32.mrf.mxu0
  %v890 = vadd.f32 %v829, %v889
  %v891 = vpop.f32.mrf.mxu0
  %v892 = vpop.f32.mrf.mxu0
  %v893 = vadd.f32 %v829, %v892
  %v894 = vpop.f32.mrf.mxu0
  %895 = vmatprep.mubr.bf16.mxu0 0
  %896 = vmatmul.mubr.bf16.gmra.mxu0 %v116
  %v897 = vpop.f32.mrf.mxu0
  %v898 = vadd.f32 %v829, %v897
  %v899 = vpop.f32.mrf.mxu0
  %v900 = vpop.f32.mrf.mxu0
  %v901 = vadd.f32 %v829, %v900
  %v902 = vpop.f32.mrf.mxu0
  %903 = vmatprep.mubr.bf16.mxu0 0
  %904 = vmatmul.mubr.bf16.gmra.mxu0 %v117
  %v905 = vpop.f32.mrf.mxu0
  %v906 = vadd.f32 %v829, %v905
  %v907 = vpop.f32.mrf.mxu0
  %v908 = vpop.f32.mrf.mxu0
  %v909 = vadd.f32 %v829, %v908
  %v910 = vpop.f32.mrf.mxu0
  %911 = vmatprep.mubr.bf16.mxu0 0
  %912 = vmatmul.mubr.bf16.gmra.mxu0 %v118
  %v913 = vpop.f32.mrf.mxu0
  %v914 = vadd.f32 %v829, %v913
  %v915 = vpop.f32.mrf.mxu0
  %v916 = vpop.f32.mrf.mxu0
  %v917 = vadd.f32 %v829, %v916
  %v918 = vpop.f32.mrf.mxu0
  %919 = vmatprep.mubr.bf16.mxu0 0
  %920 = vmatmul.mubr.bf16.gmra.mxu0 %v119
  %v921 = vpop.f32.mrf.mxu0
  %v922 = vadd.f32 %v829, %v921
  %v923 = vpop.f32.mrf.mxu0
  %v924 = vpop.f32.mrf.mxu0
  %v925 = vadd.f32 %v829, %v924
  %v926 = vpop.f32.mrf.mxu0
  %927 = vdwg.mxu0
  %vm928 = vcmask 48128
  %v929 = vsel %vm928, %v866, -inf
  %930 = vmax.xlane.f32.xlu0 %v929
  %v931 = vpop.xlane.xlu0 %930
  %v932 = vsel %vm928, %v869, -inf
  %933 = vmax.xlane.f32.xlu0 %v932
  %v934 = vpop.xlane.xlu0 %933
  %v935 = vsel %vm928, %v874, -inf
  %936 = vmax.xlane.f32.xlu0 %v935
  %v937 = vpop.xlane.xlu0 %936
  %v938 = vsel %vm928, %v877, -inf
  %939 = vmax.xlane.f32.xlu0 %v938
  %v940 = vpop.xlane.xlu0 %939
  %v941 = vsel %vm928, %v882, -inf
  %942 = vmax.xlane.f32.xlu0 %v941
  %v943 = vpop.xlane.xlu0 %942
  %v944 = vsel %vm928, %v885, -inf
  %945 = vmax.xlane.f32.xlu0 %v944
  %v946 = vpop.xlane.xlu0 %945
  %v947 = vsel %vm928, %v890, -inf
  %948 = vmax.xlane.f32.xlu0 %v947
  %v949 = vpop.xlane.xlu0 %948
  %v950 = vsel %vm928, %v893, -inf
  %951 = vmax.xlane.f32.xlu0 %v950
  %v952 = vpop.xlane.xlu0 %951
  %v953 = vsel %vm928, %v898, -inf
  %954 = vmax.xlane.f32.xlu0 %v953
  %v955 = vpop.xlane.xlu0 %954
  %v956 = vsel %vm928, %v901, -inf
  %957 = vmax.xlane.f32.xlu0 %v956
  %v958 = vpop.xlane.xlu0 %957
  %v959 = vsel %vm928, %v906, -inf
  %960 = vmax.xlane.f32.xlu0 %v959
  %v961 = vpop.xlane.xlu0 %960
  %v962 = vsel %vm928, %v909, -inf
  %963 = vmax.xlane.f32.xlu0 %v962
  %v964 = vpop.xlane.xlu0 %963
  %v965 = vsel %vm928, %v914, -inf
  %966 = vmax.xlane.f32.xlu0 %v965
  %v967 = vpop.xlane.xlu0 %966
  %v968 = vsel %vm928, %v917, -inf
  %969 = vmax.xlane.f32.xlu0 %v968
  %v970 = vpop.xlane.xlu0 %969
  %v971 = vsel %vm928, %v922, -inf
  %972 = vmax.xlane.f32.xlu0 %v971
  %v973 = vpop.xlane.xlu0 %972
  %v974 = vsel %vm928, %v925, -inf
  %975 = vmax.xlane.f32.xlu0 %v974
  %v976 = vpop.xlane.xlu0 %975
  %v977 = vsub.f32 %v866, %v931
  %v978 = vsub.f32 %v869, %v934
  %v979 = vsub.f32 %v874, %v937
  %v980 = vsub.f32 %v877, %v940
  %v981 = vsub.f32 %v882, %v943
  %v982 = vsub.f32 %v885, %v946
  %v983 = vsub.f32 %v890, %v949
  %v984 = vsub.f32 %v893, %v952
  %v985 = vsub.f32 %v898, %v955
  %v986 = vsub.f32 %v901, %v958
  %v987 = vsub.f32 %v906, %v961
  %v988 = vsub.f32 %v909, %v964
  %v989 = vsub.f32 %v914, %v967
  %v990 = vsub.f32 %v917, %v970
  %v991 = vsub.f32 %v922, %v973
  %v992 = vsub.f32 %v925, %v976
  %v993 = vmul.f32 %v977, 1.442695
  %v994 = vpow.pop %v993
  %v995 = vmul.f32 %v978, 1.442695
  %v996 = vpow.pop %v995
  %v997 = vmul.f32 %v979, 1.442695
  %v998 = vpow.pop %v997
  %v999 = vmul.f32 %v980, 1.442695
  %v1000 = vpow.pop %v999
  %v1001 = vmul.f32 %v981, 1.442695
  %v1002 = vpow.pop %v1001
  %v1003 = vmul.f32 %v982, 1.442695
  %v1004 = vpow.pop %v1003
  %v1005 = vmul.f32 %v983, 1.442695
  %v1006 = vpow.pop %v1005
  %v1007 = vmul.f32 %v984, 1.442695
  %v1008 = vpow.pop %v1007
  %v1009 = vmul.f32 %v985, 1.442695
  %v1010 = vpow.pop %v1009
  %v1011 = vmul.f32 %v986, 1.442695
  %v1012 = vpow.pop %v1011
  %v1013 = vmul.f32 %v987, 1.442695
  %v1014 = vpow.pop %v1013
  %v1015 = vmul.f32 %v988, 1.442695
  %v1016 = vpow.pop %v1015
  %v1017 = vmul.f32 %v989, 1.442695
  %v1018 = vpow.pop %v1017
  %v1019 = vmul.f32 %v990, 1.442695
  %v1020 = vpow.pop %v1019
  %v1021 = vmul.f32 %v991, 1.442695
  %v1022 = vpow.pop %v1021
  %v1023 = vmul.f32 %v992, 1.442695
  %v1024 = vpow.pop %v1023
  %v1025 = vsel %vm928, %v994, 0.0
  %1026 = vadd.xlane.f32.xlu0 %v1025
  %v1027 = vpop.xlane.xlu0 %1026
  %v1028 = vsel %vm928, %v996, 0.0
  %1029 = vadd.xlane.f32.xlu0 %v1028
  %v1030 = vpop.xlane.xlu0 %1029
  %v1031 = vsel %vm928, %v998, 0.0
  %1032 = vadd.xlane.f32.xlu0 %v1031
  %v1033 = vpop.xlane.xlu0 %1032
  %v1034 = vsel %vm928, %v1000, 0.0
  %1035 = vadd.xlane.f32.xlu0 %v1034
  %v1036 = vpop.xlane.xlu0 %1035
  %v1037 = vsel %vm928, %v1002, 0.0
  %1038 = vadd.xlane.f32.xlu0 %v1037
  %v1039 = vpop.xlane.xlu0 %1038
  %v1040 = vsel %vm928, %v1004, 0.0
  %1041 = vadd.xlane.f32.xlu0 %v1040
  %v1042 = vpop.xlane.xlu0 %1041
  %v1043 = vsel %vm928, %v1006, 0.0
  %1044 = vadd.xlane.f32.xlu0 %v1043
  %v1045 = vpop.xlane.xlu0 %1044
  %v1046 = vsel %vm928, %v1008, 0.0
  %1047 = vadd.xlane.f32.xlu0 %v1046
  %v1048 = vpop.xlane.xlu0 %1047
  %v1049 = vsel %vm928, %v1010, 0.0
  %1050 = vadd.xlane.f32.xlu0 %v1049
  %v1051 = vpop.xlane.xlu0 %1050
  %v1052 = vsel %vm928, %v1012, 0.0
  %1053 = vadd.xlane.f32.xlu0 %v1052
  %v1054 = vpop.xlane.xlu0 %1053
  %v1055 = vsel %vm928, %v1014, 0.0
  %1056 = vadd.xlane.f32.xlu0 %v1055
  %v1057 = vpop.xlane.xlu0 %1056
  %v1058 = vsel %vm928, %v1016, 0.0
  %1059 = vadd.xlane.f32.xlu0 %v1058
  %v1060 = vpop.xlane.xlu0 %1059
  %v1061 = vsel %vm928, %v1018, 0.0
  %1062 = vadd.xlane.f32.xlu0 %v1061
  %v1063 = vpop.xlane.xlu0 %1062
  %v1064 = vsel %vm928, %v1020, 0.0
  %1065 = vadd.xlane.f32.xlu0 %v1064
  %v1066 = vpop.xlane.xlu0 %1065
  %v1067 = vsel %vm928, %v1022, 0.0
  %1068 = vadd.xlane.f32.xlu0 %v1067
  %v1069 = vpop.xlane.xlu0 %1068
  %v1070 = vsel %vm928, %v1024, 0.0
  %1071 = vadd.xlane.f32.xlu0 %v1070
  %v1072 = vpop.xlane.xlu0 %1071
  %v1073 = vlog2.pop %v1027
  %v1074 = vmul.f32 %v1073, 0.6931472
  %v1075 = vlog2.pop %v1030
  %v1076 = vmul.f32 %v1075, 0.6931472
  %v1077 = vlog2.pop %v1033
  %v1078 = vmul.f32 %v1077, 0.6931472
  %v1079 = vlog2.pop %v1036
  %v1080 = vmul.f32 %v1079, 0.6931472
  %v1081 = vlog2.pop %v1039
  %v1082 = vmul.f32 %v1081, 0.6931472
  %v1083 = vlog2.pop %v1042
  %v1084 = vmul.f32 %v1083, 0.6931472
  %v1085 = vlog2.pop %v1045
  %v1086 = vmul.f32 %v1085, 0.6931472
  %v1087 = vlog2.pop %v1048
  %v1088 = vmul.f32 %v1087, 0.6931472
  %v1089 = vlog2.pop %v1051
  %v1090 = vmul.f32 %v1089, 0.6931472
  %v1091 = vlog2.pop %v1054
  %v1092 = vmul.f32 %v1091, 0.6931472
  %v1093 = vlog2.pop %v1057
  %v1094 = vmul.f32 %v1093, 0.6931472
  %v1095 = vlog2.pop %v1060
  %v1096 = vmul.f32 %v1095, 0.6931472
  %v1097 = vlog2.pop %v1063
  %v1098 = vmul.f32 %v1097, 0.6931472
  %v1099 = vlog2.pop %v1066
  %v1100 = vmul.f32 %v1099, 0.6931472
  %v1101 = vlog2.pop %v1069
  %v1102 = vmul.f32 %v1101, 0.6931472
  %v1103 = vlog2.pop %v1072
  %v1104 = vmul.f32 %v1103, 0.6931472
  %v1105 = vadd.f32 %v931, %v1074
  %v1106 = vadd.f32 %v934, %v1076
  %v1107 = vadd.f32 %v937, %v1078
  %v1108 = vadd.f32 %v940, %v1080
  %v1109 = vadd.f32 %v943, %v1082
  %v1110 = vadd.f32 %v946, %v1084
  %v1111 = vadd.f32 %v949, %v1086
  %v1112 = vadd.f32 %v952, %v1088
  %v1113 = vadd.f32 %v955, %v1090
  %v1114 = vadd.f32 %v958, %v1092
  %v1115 = vadd.f32 %v961, %v1094
  %v1116 = vadd.f32 %v964, %v1096
  %v1117 = vadd.f32 %v967, %v1098
  %v1118 = vadd.f32 %v970, %v1100
  %v1119 = vadd.f32 %v973, %v1102
  %v1120 = vadd.f32 %v976, %v1104
  %v1121 = vsub.f32 %v866, %v1105
  %v1122 = vsub.f32 %v869, %v1106
  %v1123 = vsub.f32 %v874, %v1107
  %v1124 = vsub.f32 %v877, %v1108
  %v1125 = vsub.f32 %v882, %v1109
  %v1126 = vsub.f32 %v885, %v1110
  %v1127 = vsub.f32 %v890, %v1111
  %v1128 = vsub.f32 %v893, %v1112
  %v1129 = vsub.f32 %v898, %v1113
  %v1130 = vsub.f32 %v901, %v1114
  %v1131 = vsub.f32 %v906, %v1115
  %v1132 = vsub.f32 %v909, %v1116
  %v1133 = vsub.f32 %v914, %v1117
  %v1134 = vsub.f32 %v917, %v1118
  %v1135 = vsub.f32 %v922, %v1119
  %v1136 = vsub.f32 %v925, %v1120
  %1137 = vst.msk [vmem:[%s9] sm:$0xff] %vm928, %v1121
  %1138 = vst.msk [vmem:[%s9 + $0x8] sm:$0xff] %vm928, %v1122
  %1139 = vst.msk [vmem:[%s9 + $0x10] sm:$0xff] %vm928, %v1123
  %1140 = vst.msk [vmem:[%s9 + $0x18] sm:$0xff] %vm928, %v1124
  %1141 = vst.msk [vmem:[%s9 + $0x20] sm:$0xff] %vm928, %v1125
  %1142 = vst.msk [vmem:[%s9 + $0x28] sm:$0xff] %vm928, %v1126
  %1143 = vst.msk [vmem:[%s9 + $0x30] sm:$0xff] %vm928, %v1127
  %1144 = vst.msk [vmem:[%s9 + $0x38] sm:$0xff] %vm928, %v1128
  %1145 = vst.msk [vmem:[%s9 + $0x40] sm:$0xff] %vm928, %v1129
  %1146 = vst.msk [vmem:[%s9 + $0x48] sm:$0xff] %vm928, %v1130
  %1147 = vst.msk [vmem:[%s9 + $0x50] sm:$0xff] %vm928, %v1131
  %1148 = vst.msk [vmem:[%s9 + $0x58] sm:$0xff] %vm928, %v1132
  %1149 = vst.msk [vmem:[%s9 + $0x60] sm:$0xff] %vm928, %v1133
  %1150 = vst.msk [vmem:[%s9 + $0x68] sm:$0xff] %vm928, %v1134
  %1151 = vst.msk [vmem:[%s9 + $0x70] sm:$0xff] %vm928, %v1135
  %1152 = vst.msk [vmem:[%s9 + $0x78] sm:$0xff] %vm928, %v1136
  // Predicated region
  $region38: #{gcn_forward.5} parent=0 // pred_check
    _
  $region39: #{gcn_forward.5} parent=0 // pred_check_branch
    %1154 = sbr.rel (0) target = $region41
  $region40: #{gcn_forward.5} parent=0 // pred_region
    _
  $region41: #{gcn_forward.5} parent=0 // pred_fallthru
    _
  // Predicated region
  $region42: #{gcn_forward.5} parent=0 // pred_check
    _
  $region43: #{gcn_forward.5} parent=0 // pred_check_branch
    %1156 = sbr.rel (0) target = $region45
  $region44: #{gcn_forward.5} parent=0 // pred_region
    _
  $region45: #{gcn_forward.5} parent=0 // pred_fallthru
    _

</llo_original>
